<compile_context>
chip_gen: v6e
topology: v6e:2x2x1
jax: 0.10.0
libtpu: 0.0.40
codegen_flags: <defaults>
</compile_context>

<pallas_src>
import functools
import math

import jax
import jax.numpy as jnp
from jax.experimental import pallas as pl
from jax.experimental.pallas import tpu as pltpu


def _round_up(x, m):
    return (x + m - 1) // m * m


_GEMM_VMEM_BUDGET = 24 * 1024 * 1024   # for double-buffered x/w GEMM tiles
_POOL_VMEM_BUDGET = 16 * 1024 * 1024   # for double-buffered (KW, tm, C) blocks


# ---------------------------------------------------------------------------
# Pallas GEMM kernels: out = relu?(X @ W + b)   (conv / linear hot path)
# ---------------------------------------------------------------------------
def _gemm_kernel_single(x_ref, w_ref, b_ref, o_ref, *, relu):
    # Whole K reduction in one step: dot -> bias -> relu -> bf16 store.
    acc = jnp.dot(x_ref[...], w_ref[...], preferred_element_type=jnp.float32)
    out = acc + b_ref[...]
    if relu:
        out = jnp.maximum(out, 0.0)
    o_ref[...] = out.astype(o_ref.dtype)


def _gemm_kernel_multi(x_ref, w_ref, b_ref, o_ref, acc_ref, *, relu):
    k = pl.program_id(2)
    prod = jnp.dot(x_ref[...], w_ref[...], preferred_element_type=jnp.float32)

    @pl.when(k == 0)
    def _():
        acc_ref[...] = prod          # no separate zero-init pass

    @pl.when(k > 0)
    def _():
        acc_ref[...] += prod

    @pl.when(k == pl.num_programs(2) - 1)
    def _():
        out = acc_ref[...] + b_ref[...]
        if relu:
            out = jnp.maximum(out, 0.0)
        o_ref[...] = out.astype(o_ref.dtype)


def _gemm_tiles(M, K, Np):
    """Pick (Mp, tm, tn, Kp, tk).  Prefers a single full-K step."""
    tn = 256
    if M > 512:
        tm = 512                      # M=1024 (b1 conv) -> 2 parallel M tiles
        Mp = _round_up(M, tm)
    else:
        Mp = _round_up(max(M, 8), 8)
        tm = Mp

    def fits(tk):
        # double-buffered bf16 x & w tiles + bf16 out + f32 acc (upper bound)
        return (2 * 2 * (tm * tk + tk * tn)
                + 2 * 2 * tm * tn + 4 * tm * tn) <= _GEMM_VMEM_BUDGET

    if fits(K):
        return Mp, tm, tn, K, K       # single K step, K left unpadded

    Kp = _round_up(K, 256)
    tk = 256
    t = 512
    while t <= Kp:
        if Kp % t == 0 and fits(t):
            tk = t
        t += 256
    return Mp, tm, tn, Kp, tk


@functools.partial(jax.jit, static_argnames=("n_valid", "relu", "out_dtype"))
def pallas_gemm_bias(x, wp, bp, n_valid, relu, out_dtype=jnp.bfloat16):
    """x: (M, K); wp: pre-packed bf16 (Kw, Np) with Kw = round_up(K, 8);
    bp: pre-packed f32 (1, Np).  Returns (M, n_valid) in out_dtype."""
    M, K = x.shape
    Kw, Np = wp.shape
    assert Kw == _round_up(K, 8) and Np % 256 == 0

    Mp, tm, tn, Kp, tk = _gemm_tiles(M, Kw, Np)

    xb = x.astype(jnp.bfloat16)
    if (Mp, Kp) != (M, K):
        xb = jnp.pad(xb, ((0, Mp - M), (0, Kp - K)))
    wpp = wp if Kp == Kw else jnp.pad(wp, ((0, Kp - Kw), (0, 0)))

    nk = Kp // tk
    if nk == 1:
        out = pl.pallas_call(
            functools.partial(_gemm_kernel_single, relu=relu),
            out_shape=jax.ShapeDtypeStruct((Mp, Np), out_dtype),
            grid_spec=pltpu.PrefetchScalarGridSpec(
                num_scalar_prefetch=0,
                grid=(Mp // tm, Np // tn),
                in_specs=[
                    pl.BlockSpec((tm, Kp), lambda i, j: (i, 0)),
                    pl.BlockSpec((Kp, tn), lambda i, j: (0, j)),
                    pl.BlockSpec((1, tn), lambda i, j: (0, j)),
                ],
                out_specs=pl.BlockSpec((tm, tn), lambda i, j: (i, j)),
            ),
            compiler_params=pltpu.CompilerParams(
                dimension_semantics=("parallel", "parallel")),
        )(xb, wpp, bp)
    else:
        out = pl.pallas_call(
            functools.partial(_gemm_kernel_multi, relu=relu),
            out_shape=jax.ShapeDtypeStruct((Mp, Np), out_dtype),
            grid_spec=pltpu.PrefetchScalarGridSpec(
                num_scalar_prefetch=0,
                grid=(Mp // tm, Np // tn, nk),
                in_specs=[
                    pl.BlockSpec((tm, tk), lambda i, j, k: (i, k)),
                    pl.BlockSpec((tk, tn), lambda i, j, k: (k, j)),
                    pl.BlockSpec((1, tn), lambda i, j, k: (0, j)),
                ],
                out_specs=pl.BlockSpec((tm, tn), lambda i, j, k: (i, j)),
                scratch_shapes=[pltpu.VMEM((tm, tn), jnp.float32)],
            ),
            compiler_params=pltpu.CompilerParams(
                dimension_semantics=("parallel", "parallel", "arbitrary")),
        )(xb, wpp, bp)
    return out[:M, :n_valid]


# ---------------------------------------------------------------------------
# Pallas window-max kernel: (KW, M, C) -> (M, C)  (down-sampling MaxPool3d)
# ---------------------------------------------------------------------------
def _window_max_kernel(p_ref, o_ref):
    kw = p_ref.shape[0]
    acc = p_ref[0]
    for j in range(1, kw):               # static unroll; per-tap VPU maximum
        acc = jnp.maximum(acc, p_ref[j])
    o_ref[...] = acc


def _pool_tile(M, KW, C_lane, itemsize):
    """Row tile sized against a VMEM budget for a (KW, tm, C_lane) block."""
    tm_cap = max(8, (_POOL_VMEM_BUDGET // (2 * KW * C_lane * itemsize)) // 8 * 8)
    Mp = _round_up(max(M, 8), 8)
    if Mp <= tm_cap:
        return Mp, Mp
    tm = min(512, tm_cap)
    return _round_up(M, tm), tm


@jax.jit
def pallas_window_max(patches):
    """patches: (KW, M, C) bf16 with -inf already in spatial-pad positions."""
    KW, M, C = patches.shape
    Cp = _round_up(C, 128)
    itemsize = jnp.dtype(patches.dtype).itemsize
    Mp, tm = _pool_tile(M, KW, Cp, itemsize)

    pp = patches
    if (Mp, Cp) != (M, C):
        pp = jnp.pad(patches, ((0, 0), (0, Mp - M), (0, Cp - C)),
                     constant_values=-jnp.inf)

    out = pl.pallas_call(
        _window_max_kernel,
        out_shape=jax.ShapeDtypeStruct((Mp, Cp), patches.dtype),
        grid_spec=pltpu.PrefetchScalarGridSpec(
            num_scalar_prefetch=0,
            grid=(Mp // tm,),
            in_specs=[pl.BlockSpec((KW, tm, Cp), lambda i: (0, i, 0))],
            out_specs=pl.BlockSpec((tm, Cp), lambda i: (i, 0)),
        ),
        compiler_params=pltpu.CompilerParams(
            dimension_semantics=("parallel",)),
    )(pp)
    return out[:M, :C]


# ---------------------------------------------------------------------------
# Fused Pallas kernel: stride-1 3x3x3 max-pool + 1x1 conv + ReLU  (p4 branch)
# ---------------------------------------------------------------------------
def _pool_conv_kernel(p_ref, w_ref, b_ref, o_ref):
    kw = p_ref.shape[0]
    acc = p_ref[0]
    for j in range(1, kw):
        acc = jnp.maximum(acc, p_ref[j])      # window max, stays in VMEM
    out = jnp.dot(acc, w_ref[...], preferred_element_type=jnp.float32)
    out = jnp.maximum(out + b_ref[...], 0.0)
    o_ref[...] = out.astype(o_ref.dtype)


@functools.partial(jax.jit, static_argnames=("n_valid",))
def pallas_pool_conv(patches, wp, bp, n_valid):
    """patches: (KW, M, C) bf16 (-inf spatial pad); wp: bf16 (C, Np); bp: (1, Np)."""
    KW, M, C = patches.shape
    Cw, Np = wp.shape
    assert Cw == C and Np % 256 == 0
    tn = 256
    Mp, tm = _pool_tile(M, KW, C, 2)

    pp = patches if Mp == M else jnp.pad(patches, ((0, 0), (0, Mp - M), (0, 0)))

    out = pl.pallas_call(
        _pool_conv_kernel,
        out_shape=jax.ShapeDtypeStruct((Mp, Np), jnp.bfloat16),
        grid_spec=pltpu.PrefetchScalarGridSpec(
            num_scalar_prefetch=0,
            grid=(Mp // tm, Np // tn),
            in_specs=[
                pl.BlockSpec((KW, tm, C), lambda i, j: (0, i, 0)),
                pl.BlockSpec((C, tn), lambda i, j: (0, j)),
                pl.BlockSpec((1, tn), lambda i, j: (0, j)),
            ],
            out_specs=pl.BlockSpec((tm, tn), lambda i, j: (i, j)),
        ),
        compiler_params=pltpu.CompilerParams(
            dimension_semantics=("parallel", "parallel")),
    )(pp, wp, bp)
    return out[:M, :n_valid]


# ---------------------------------------------------------------------------
# Glue: 3-D window extraction (im2col / pooling windows), conv / pool wrappers
# ---------------------------------------------------------------------------
def _extract_patches(x, k, stride, pad, pad_value, tap_axis):
    """x: (N, D, H, W, C) -> patches stacked along `tap_axis` + out dims."""
    n, d, h, w, c = x.shape
    xp = jnp.pad(x, ((0, 0), (pad, pad), (pad, pad), (pad, pad), (0, 0)),
                 constant_values=pad_value)
    do = (d + 2 * pad - k) // stride + 1
    ho = (h + 2 * pad - k) // stride + 1
    wo = (w + 2 * pad - k) // stride + 1
    slices = []
    for a in range(k):
        for bb in range(k):
            for cc in range(k):
                sl = xp[:,
                        a:a + (do - 1) * stride + 1:stride,
                        bb:bb + (ho - 1) * stride + 1:stride,
                        cc:cc + (wo - 1) * stride + 1:stride, :]
                slices.append(sl)
    return jnp.stack(slices, axis=tap_axis), (do, ho, wo)


@functools.partial(jax.jit,
                   static_argnames=("ksize", "n_valid", "stride", "pad", "relu"))
def _conv3d_impl(x, wp, bp, ksize, n_valid, stride, pad, relu):
    n, d, h, w, cin = x.shape
    if ksize == 1 and stride == 1 and pad == 0:
        do, ho, wo = d, h, w
        xm = x.reshape(n * do * ho * wo, cin)
    else:
        patches, (do, ho, wo) = _extract_patches(
            x.astype(jnp.bfloat16), ksize, stride, pad, 0.0, tap_axis=4)
        xm = patches.reshape(n * do * ho * wo, ksize * ksize * ksize * cin)
    y = pallas_gemm_bias(xm, wp, bp, n_valid, relu, jnp.bfloat16)
    return y.reshape(n, do, ho, wo, n_valid)


def conv3d(x, packed, stride=1, pad=0, relu=True):
    return _conv3d_impl(x, packed["w"], packed["b"], packed["ksize"],
                        packed["n"], stride, pad, relu)


@functools.partial(jax.jit, static_argnames=("k", "stride", "pad"))
def maxpool3d(x, k=3, stride=2, pad=1):
    n, d, h, w, c = x.shape
    patches, (do, ho, wo) = _extract_patches(
        x, k, stride, pad, -jnp.inf, tap_axis=0)
    pm = patches.reshape(k * k * k, n * do * ho * wo, c)
    y = pallas_window_max(pm)
    return y.reshape(n, do, ho, wo, c)


def maxpool_conv1x1(x, packed):
    """Fused p4 branch: MaxPool3d(3, stride=1, pad=1) -> 1x1 Conv3d -> ReLU."""
    n, d, h, w, c = x.shape
    patches, (do, ho, wo) = _extract_patches(x, 3, 1, 1, -jnp.inf, tap_axis=0)
    pm = patches.reshape(27, n * do * ho * wo, c)
    y = pallas_pool_conv(pm, packed["w"], packed["b"], packed["n"])
    return y.reshape(n, do, ho, wo, packed["n"])


# ---------------------------------------------------------------------------
# Parameter init (xavier_uniform like the PyTorch module) + GEMM-ready packing
# ---------------------------------------------------------------------------
def _conv_wm(key, cin, cout, k):
    kw, kb = jax.random.split(key)
    rf = k ** 3
    fan_in, fan_out = cin * rf, cout * rf
    bound = math.sqrt(6.0 / (fan_in + fan_out))
    w = jax.random.uniform(kw, (cout, cin, k, k, k), jnp.float32, -bound, bound)
    bb = 1.0 / math.sqrt(fan_in)
    b = jax.random.uniform(kb, (cout,), jnp.float32, -bb, bb)
    # (Cout, Cin, k, k, k) -> (k*k*k*Cin, Cout): tap-major, channel-minor
    # (matches the im2col tap ordering above).
    wm = jnp.transpose(w, (2, 3, 4, 1, 0)).reshape(rf * cin, cout)
    return wm, b


def _pack_gemm(wm, b, ksize):
    """Pad K to sublane multiple (8) and N to 256, cast weight to bf16."""
    K, N = wm.shape
    Kp = _round_up(K, 8)
    Np = _round_up(N, 256)
    return {
        "w": jnp.pad(wm, ((0, Kp - K), (0, Np - N))).astype(jnp.bfloat16),
        "b": jnp.pad(b, (0, Np - N)).astype(jnp.float32)[None, :],
        "n": int(N),
        "ksize": int(ksize),
    }


def _conv_params(key, cin, cout, k):
    wm, b = _conv_wm(key, cin, cout, k)
    return _pack_gemm(wm, b, k)


def _inception_params(key, cin, c1, c2, c3, c4):
    ks = jax.random.split(key, 6)
    w11, b11 = _conv_wm(ks[0], cin, c1, 1)
    w21, b21 = _conv_wm(ks[1], cin, c2[0], 1)
    w22, b22 = _conv_wm(ks[2], c2[0], c2[1], 3)
    w31, b31 = _conv_wm(ks[3], cin, c3[0], 1)
    w32, b32 = _conv_wm(ks[4], c3[0], c3[1], 5)
    w42, b42 = _conv_wm(ks[5], cin, c4, 1)
    # p1_1 / p2_1 / p3_1 share input x -> one fused-N GEMM.  Each branch's
    # output channels are zero-padded to a 128 multiple so the post-GEMM
    # splits start on lane boundaries.
    seg_w, seg_b, seg_off = [], [], []
    off = 0
    for wm, b, c in ((w11, b11, c1), (w21, b21, c2[0]), (w31, b31, c3[0])):
        cp = _round_up(c, 128)
        seg_w.append(jnp.pad(wm, ((0, 0), (0, cp - c))))
        seg_b.append(jnp.pad(b, (0, cp - c)))
        seg_off.append(off)
        off += cp
    fused_w = jnp.concatenate(seg_w, axis=1)
    fused_b = jnp.concatenate(seg_b)
    return {
        "fused1": _pack_gemm(fused_w, fused_b, 1),
        "seg_off": tuple(int(o) for o in seg_off),
        "seg_c": (int(c1), int(c2[0]), int(c3[0])),
        "p2_2": _pack_gemm(w22, b22, 3),
        "p3_2": _pack_gemm(w32, b32, 5),
        "p4_2": _pack_gemm(w42, b42, 1),
    }


def init_params(key, num_classes):
    ks = jax.random.split(key, 16)
    p = {}
    p["b1_conv"] = _conv_params(ks[0], 4, 64, 7)
    p["b2_conv1"] = _conv_params(ks[1], 64, 64, 1)
    p["b2_conv2"] = _conv_params(ks[2], 64, 192, 3)
    p["b3_0"] = _inception_params(ks[3], 192, 64, (96, 128), (16, 32), 32)
    p["b3_1"] = _inception_params(ks[4], 256, 128, (128, 192), (32, 96), 64)
    p["b4_0"] = _inception_params(ks[5], 480, 192, (96, 208), (16, 48), 64)
    p["b4_1"] = _inception_params(ks[6], 512, 160, (112, 224), (24, 64), 64)
    p["b4_2"] = _inception_params(ks[7], 512, 128, (128, 256), (24, 64), 64)
    p["b4_3"] = _inception_params(ks[8], 512, 112, (144, 288), (32, 64), 64)
    p["b4_4"] = _inception_params(ks[9], 528, 256, (160, 320), (32, 128), 128)
    p["b5_0"] = _inception_params(ks[10], 832, 256, (160, 320), (32, 128), 128)
    p["b5_1"] = _inception_params(ks[11], 832, 384, (192, 384), (48, 128), 128)
    fan_in, fan_out = 1024, num_classes
    bound = math.sqrt(6.0 / (fan_in + fan_out))
    fw = jax.random.uniform(ks[12], (num_classes, 1024), jnp.float32,
                            -bound, bound)
    fb = jax.random.uniform(ks[13], (num_classes,), jnp.float32,
                            -1.0 / math.sqrt(fan_in), 1.0 / math.sqrt(fan_in))
    p["fc"] = _pack_gemm(fw.T, fb, 1)
    return p


# ---------------------------------------------------------------------------
# Model forward
# ---------------------------------------------------------------------------
def inception(x, p):
    n, d, h, w, cin = x.shape
    m = n * d * h * w
    # Fused 1x1 stems (p1_1 | p2_1 | p3_1) as a single wide-N GEMM + ReLU.
    fused = pallas_gemm_bias(x.reshape(m, cin), p["fused1"]["w"],
                             p["fused1"]["b"], p["fused1"]["n"], True,
                             jnp.bfloat16)
    o1, o2, o3 = p["seg_off"]
    c1, c2a, c3a = p["seg_c"]
    p1 = fused[:, o1:o1 + c1].reshape(n, d, h, w, c1)
    p2 = fused[:, o2:o2 + c2a].reshape(n, d, h, w, c2a)
    p3 = fused[:, o3:o3 + c3a].reshape(n, d, h, w, c3a)

    p2 = conv3d(p2, p["p2_2"], pad=1, relu=True)
    p3 = conv3d(p3, p["p3_2"], pad=2, relu=True)
    p4 = maxpool_conv1x1(x, p["p4_2"])   # fused pool(3,1,1) + 1x1 conv + ReLU
    # torch.cat(..., dim=1) -> channel axis (last here)
    return jnp.concatenate([p1, p2, p3, p4], axis=-1)


def googlenet_forward(params, x_ncdhw):
    # NCDHW (PyTorch) -> NDHWC (kernel layout), bf16 end-to-end.
    x = jnp.transpose(x_ncdhw, (0, 2, 3, 4, 1)).astype(jnp.bfloat16)

    # b1
    x = conv3d(x, params["b1_conv"], stride=2, pad=3, relu=True)
    x = maxpool3d(x, 3, 2, 1)
    # b2
    x = conv3d(x, params["b2_conv1"], relu=True)
    x = conv3d(x, params["b2_conv2"], pad=1, relu=True)
    x = maxpool3d(x, 3, 2, 1)
    # b3
    x = inception(x, params["b3_0"])
    x = inception(x, params["b3_1"])
    x = maxpool3d(x, 3, 2, 1)
    # b4
    for i in range(5):
        x = inception(x, params["b4_%d" % i])
    x = maxpool3d(x, 3, 2, 1)
    # b5
    x = inception(x, params["b5_0"])
    x = inception(x, params["b5_1"])
    # TODO(synk): nn.AdaptiveAvgPool2d((1,1)) on a 5-D tensor raises in PyTorch;
    # interpreted here as a mean over the trailing (H, W) dims (size 1 at this
    # point for the chosen input), followed by Flatten in (C, D) order.
    x = jnp.mean(x, axis=(2, 3))                              # (N, D, C)
    x = jnp.transpose(x, (0, 2, 1)).reshape(x.shape[0], -1)   # (N, C*D) == (N, 1024)
    # fc (f32 output)
    return pallas_gemm_bias(x, params["fc"]["w"], params["fc"]["b"],
                            params["fc"]["n"], False, jnp.float32)


if __name__ == "__main__":
    key = jax.random.PRNGKey(0)
    kp, kx = jax.random.split(key)
    num_classes = 10
    params = init_params(kp, num_classes)

    # PyTorch-equivalent NCDHW input: (batch=2, channels=4, D=H=W=16)
    x = jax.random.normal(kx, (2, 4, 16, 16, 16), jnp.float32)

    # Weights are closed over (compile-time constants) so the whole forward,
    # including the XLA glue between Pallas kernels, runs as one program.
    fwd = jax.jit(functools.partial(googlenet_forward, params))
    out = jax.block_until_ready(fwd(x))
    assert out.shape == (2, num_classes), out.shape
    assert bool(jnp.all(jnp.isfinite(out)))
    print("KERNEL_OK")
</pallas_src>

<mosaic_0001>
module attributes {stable_mosaic.version = 11 : i64} {
  func.func @_gemm_kernel_single(%arg0: i32, %arg1: i32, %arg2: memref<512x1376xbf16, #tpu.memory_space<vmem>>, %arg3: memref<1376x256xbf16, #tpu.memory_space<vmem>>, %arg4: memref<1x256xf32, #tpu.memory_space<vmem>>, %arg5: memref<512x256xbf16, #tpu.memory_space<vmem>>) attributes {dimension_semantics = [#tpu.dimension_semantics<parallel>, #tpu.dimension_semantics<parallel>], iteration_bounds = array<i64: 2, 1>, scalar_prefetch = 0 : i64, scratch_operands = 0 : i64, tpu.core_type = #tpu.core_type<tc>, window_params = [{transform_indices = @transform_0, window_bounds = array<i64: 512, 1376>}, {transform_indices = @transform_1, window_bounds = array<i64: 1376, 256>}, {transform_indices = @transform_2, window_bounds = array<i64: 1, 256>}, {transform_indices = @transform_3, window_bounds = array<i64: 512, 256>}]} {
    %c0 = arith.constant 0 : index
    %c0_0 = arith.constant 0 : index
    %0 = vector.load %arg2[%c0, %c0_0] : memref<512x1376xbf16, #tpu.memory_space<vmem>>, vector<512x1376xbf16>
    %c0_1 = arith.constant 0 : index
    %c0_2 = arith.constant 0 : index
    %1 = vector.load %arg3[%c0_1, %c0_2] : memref<1376x256xbf16, #tpu.memory_space<vmem>>, vector<1376x256xbf16>
    %cst = arith.constant dense<0.000000e+00> : vector<512x256xf32>
    %2 = tpu.matmul %0, %1, %cst {dimension_numbers = #tpu.dot_dimension_numbers<[1], [0], [0], [1], [0, 0, 1, 1], [], []>} : vector<512x1376xbf16>, vector<1376x256xbf16>, vector<512x256xf32> -> vector<512x256xf32>
    %c0_3 = arith.constant 0 : index
    %c0_4 = arith.constant 0 : index
    %3 = vector.load %arg4[%c0_3, %c0_4] : memref<1x256xf32, #tpu.memory_space<vmem>>, vector<1x256xf32>
    %4 = vector.broadcast %3 : vector<1x256xf32> to vector<512x256xf32>
    %5 = arith.addf %2, %4 : vector<512x256xf32>
    %cst_5 = arith.constant 0.000000e+00 : f32
    %6 = vector.broadcast %cst_5 : f32 to vector<512x256xf32>
    %7 = arith.maximumf %5, %6 : vector<512x256xf32>
    %8 = arith.truncf %7 : vector<512x256xf32> to vector<512x256xbf16>
    %c0_6 = arith.constant 0 : index
    %c0_7 = arith.constant 0 : index
    %9 = vector.load %arg5[%c0_6, %c0_7] : memref<512x256xbf16, #tpu.memory_space<vmem>>, vector<512x256xbf16>
    tpu.vector_store %arg5[%c0_6, %c0_7], %8 {strides = array<i32>} : memref<512x256xbf16, #tpu.memory_space<vmem>>, vector<512x256xbf16>,
    return
  }
  func.func @transform_0(%arg0: i32, %arg1: i32) -> (i32, i32) {
    %c0_i32 = arith.constant 0 : i32
    %c0_i32_0 = arith.constant 0 : i32
    return %arg0, %c0_i32 : i32, i32
  }
  func.func @transform_1(%arg0: i32, %arg1: i32) -> (i32, i32) {
    %c0_i32 = arith.constant 0 : i32
    %c0_i32_0 = arith.constant 0 : i32
    return %c0_i32, %arg1 : i32, i32
  }
  func.func @transform_2(%arg0: i32, %arg1: i32) -> (i32, i32) {
    %c0_i32 = arith.constant 0 : i32
    %c0_i32_0 = arith.constant 0 : i32
    return %c0_i32, %arg1 : i32, i32
  }
  func.func @transform_3(%arg0: i32, %arg1: i32) -> (i32, i32) {
    %c0_i32 = arith.constant 0 : i32
    return %arg0, %arg1 : i32, i32
  }
}

</mosaic_0001>

<llo_original>
// kernel: pallas_gemm_bias.1
$region0: #{pallas_gemm_bias.1}
  #allocation0 [shape = 'u32[]', space=smem, size = 0x4, offset = 0x4, fixed_abs, tag = 'smem constant byte address 0x4 - core index']
  #allocation1 [shape = 'u32[144,128]{1,0:T(1,128)}', space=vmem, size = 0x12000, scoped, tag = 'internal scratch']
  %s0 = inlined_call_operand.vmem [shape: bf16[1024,1376], index: 0, kind: input, shape index: {}]
  %s1 = inlined_call_operand.vmem [shape: bf16[1376,256], index: 1, kind: input, shape index: {}]
  %s2 = inlined_call_operand.vmem [shape: f32[1,256], index: 2, kind: input, shape index: {}]
  %s3 = inlined_call_operand.vmem [shape: bf16[1024,256], index: 3, kind: output, shape index: {}]
  %s4 = sld [smem:[#allocation0]]
  $region45: #{pallas_gemm_bias.1} parent=0
    _
  %s6 = ssub.s32 1, %s4
  %s7 = scalar_select 0, %s6, %s4
  loop: start=0, step=1, limit=4
  $region2: #{pallas_gemm_bias.1} parent=0 // loop_pre_header
    _
  $region3: #{pallas_gemm_bias.1} parent=0 // loop_header
    %s9 = sphi 0, %s13
    %p10 = scmp.ge.s32.totalorder %s9, 4
    %s16 = sphi 0, %s28
    %s17 = sphi 0, %s24
    %s18 = sphi 0, %s16
    %s19 = sphi 0, %s17
    %s20 = sphi 0, %s18
    %s21 = sphi 0, %s19
    %s31 = sphi 0, %s33
    %s34 = sphi 0, %s31
    %s35 = sphi 0, %s34
    %s51 = sphi 0, %s35
    %s57 = sphi 0, %s59
    %s60 = sphi 0, %s57
    %s61 = sphi 0, %s60
    %s77 = sphi 0, %s61
    %s83 = sphi 0, %s85
    %s86 = sphi 0, %s83
    %s87 = sphi 0, %s86
    %s103 = sphi 0, %s87
    %s111 = sphi 0, %s113
    %s114 = sphi 0, %s111
    %s115 = sphi 0, %s114
    %s131 = sphi 0, %s115
  $region4: #{pallas_gemm_bias.1} parent=0 // loop_header_branch
    %12 = sbr.rel (%p10) target = $region8
  $region5: #{pallas_gemm_bias.1} parent=0 // loop_body
    %s14 = ssub.s32 %s9, 1
    %s15 = ssub.s32 %s9, 2
    %s22 = sadd.s32 1, %s17
    %p23 = scmp.ge.s32.totalorder %s22, 1
    %s24 = scalar_select %p23, 0, %s22
    %s25 = sadd.s32 1, %s16
    %s26 = scalar_select %p23, %s25, %s16
    %p27 = scmp.ge.s32.totalorder %s26, 2
    %s28 = scalar_select %p27, 0, %s26
    %s29 = ssub.s32 %s16, %s28
    %p30 = scmp.eq.s32.totalorder %s29, 0
    %s32 = sadd.s32 %s31, 1
    %s33 = scalar_select %p30, %s31, %s32
    %p36 = pneg %p30
    %p37 = scmp.eq.s32.totalorder %s9, 1
    %p38 = por %p36, %p37
    %p39 = scmp.ne.s32.totalorder %s31, %s34
    %p40 = scmp.eq.s32.totalorder %s9, 0
    %p41 = por %p39, %p40
    %p42 = scmp.ne.s32.totalorder %s31, %s34
    %p43 = scmp.eq.s32.totalorder %s14, 1
    %p44 = por %p42, %p43
    %p45 = scmp.ne.s32.totalorder %s34, %s35
    %p46 = scmp.eq.s32.totalorder %s14, 0
    %p47 = por %p45, %p46
    %p48 = scmp.ne.s32.totalorder %s34, %s35
    %p49 = scmp.eq.s32.totalorder %s15, 1
    %p50 = por %p48, %p49
    %p52 = scmp.ne.s32.totalorder %s35, %s51
    %p53 = scmp.eq.s32.totalorder %s15, 0
    %p54 = por %p52, %p53
    %s55 = ssub.s32 %s17, %s24
    %p56 = scmp.eq.s32.totalorder %s55, 0
    %s58 = sadd.s32 %s57, 1
    %s59 = scalar_select %p56, %s57, %s58
    %p62 = pneg %p56
    %p63 = scmp.eq.s32.totalorder %s9, 1
    %p64 = por %p62, %p63
    %p65 = scmp.ne.s32.totalorder %s57, %s60
    %p66 = scmp.eq.s32.totalorder %s9, 0
    %p67 = por %p65, %p66
    %p68 = scmp.ne.s32.totalorder %s57, %s60
    %p69 = scmp.eq.s32.totalorder %s14, 1
    %p70 = por %p68, %p69
    %p71 = scmp.ne.s32.totalorder %s60, %s61
    %p72 = scmp.eq.s32.totalorder %s14, 0
    %p73 = por %p71, %p72
    %p74 = scmp.ne.s32.totalorder %s60, %s61
    %p75 = scmp.eq.s32.totalorder %s15, 1
    %p76 = por %p74, %p75
    %p78 = scmp.ne.s32.totalorder %s61, %s77
    %p79 = scmp.eq.s32.totalorder %s15, 0
    %p80 = por %p78, %p79
    %s81 = ssub.s32 %s17, %s24
    %p82 = scmp.eq.s32.totalorder %s81, 0
    %s84 = sadd.s32 %s83, 1
    %s85 = scalar_select %p82, %s83, %s84
    %p88 = pneg %p82
    %p89 = scmp.eq.s32.totalorder %s9, 1
    %p90 = por %p88, %p89
    %p91 = scmp.ne.s32.totalorder %s83, %s86
    %p92 = scmp.eq.s32.totalorder %s9, 0
    %p93 = por %p91, %p92
    %p94 = scmp.ne.s32.totalorder %s83, %s86
    %p95 = scmp.eq.s32.totalorder %s14, 1
    %p96 = por %p94, %p95
    %p97 = scmp.ne.s32.totalorder %s86, %s87
    %p98 = scmp.eq.s32.totalorder %s14, 0
    %p99 = por %p97, %p98
    %p100 = scmp.ne.s32.totalorder %s86, %s87
    %p101 = scmp.eq.s32.totalorder %s15, 1
    %p102 = por %p100, %p101
    %p104 = scmp.ne.s32.totalorder %s87, %s103
    %p105 = scmp.eq.s32.totalorder %s15, 0
    %p106 = por %p104, %p105
    %s107 = ssub.s32 %s16, %s28
    %s108 = ssub.s32 %s17, %s24
    %s109 = sor.u32 %s107, %s108
    %p110 = scmp.eq.s32.totalorder %s109, 0
    %s112 = sadd.s32 %s111, 1
    %s113 = scalar_select %p110, %s111, %s112
    %p116 = pneg %p110
    %p117 = scmp.eq.s32.totalorder %s9, 1
    %p118 = por %p116, %p117
    %p119 = scmp.ne.s32.totalorder %s111, %s114
    %p120 = scmp.eq.s32.totalorder %s9, 0
    %p121 = por %p119, %p120
    %p122 = scmp.ne.s32.totalorder %s111, %s114
    %p123 = scmp.eq.s32.totalorder %s14, 1
    %p124 = por %p122, %p123
    %p125 = scmp.ne.s32.totalorder %s114, %s115
    %p126 = scmp.eq.s32.totalorder %s14, 0
    %p127 = por %p125, %p126
    %p128 = scmp.ne.s32.totalorder %s114, %s115
    %p129 = scmp.eq.s32.totalorder %s15, 1
    %p130 = por %p128, %p129
    %p132 = scmp.ne.s32.totalorder %s115, %s131
    %p133 = scmp.eq.s32.totalorder %s15, 0
    %p134 = por %p132, %p133
    %p135 = scmp.le.s32.totalorder 1, %s9
    %p136 = scmp.lt.s32.totalorder %s9, 3
    %p137 = pnand %p135, %p136
    %p138 = pneg %p137
    // Predicated region
    $region9: #{pallas_gemm_bias.1} parent=5 // pred_check
      _
    $region10: #{pallas_gemm_bias.1} parent=5 // pred_check_branch
      %140 = sbr.rel (%p137) target = $region12
    $region11: #{pallas_gemm_bias.1} parent=5 // pred_region
      %s141 = ssub.s32 %s9, 1
      // Predicated region
      $region13: #{pallas_gemm_bias.1} parent=11 // pred_check
        %p142 = pneg %p73
      $region14: #{pallas_gemm_bias.1} parent=11 // pred_check_branch
        %144 = sbr.rel (%p142) target = $region16
      $region15: #{pallas_gemm_bias.1} parent=11 // pred_region
        %s145 = smul.u32 2, %s19
        %p146 = scmp.lt.s32.totalorder %s145, 1
        %s147 = scalar_select %p146, %s145, 1
        %s148 = smul.addr %s147, 4
        %s149 = scalar_lea.vmem %s1, %s148
        %s150 = smul.u32 2, %s19
      $region16: #{pallas_gemm_bias.1} parent=11 // pred_fallthru
        _
      // Predicated region
      $region17: #{pallas_gemm_bias.1} parent=11 // pred_check
        %p151 = pneg %p99
      $region18: #{pallas_gemm_bias.1} parent=11 // pred_check_branch
        %153 = sbr.rel (%p151) target = $region20
      $region19: #{pallas_gemm_bias.1} parent=11 // pred_region
        %s154 = smul.u32 2, %s19
        %p155 = scmp.lt.s32.totalorder %s154, 1
        %s156 = scalar_select %p155, %s154, 1
        %s157 = scalar_lea.vmem %s2, %s156
        %s158 = smul.u32 2, %s19
      $region20: #{pallas_gemm_bias.1} parent=11 // pred_fallthru
        _
    $region12: #{pallas_gemm_bias.1} parent=5 // pred_fallthru
      _
    %p159 = scmp.lt.s32.totalorder %s9, 2
    // Predicated region
    $region21: #{pallas_gemm_bias.1} parent=5 // pred_check
      %p160 = pneg %p159
    $region22: #{pallas_gemm_bias.1} parent=5 // pred_check_branch
      %162 = sbr.rel (%p160) target = $region24
    $region23: #{pallas_gemm_bias.1} parent=5 // pred_region
      // Predicated region
      $region25: #{pallas_gemm_bias.1} parent=23 // pred_check
        %p163 = pneg %p41
      $region26: #{pallas_gemm_bias.1} parent=23 // pred_check_branch
        %165 = sbr.rel (%p163) target = $region28
      $region27: #{pallas_gemm_bias.1} parent=23 // pred_region
        %s166 = smul.u32 64, %s16
        %p167 = scmp.lt.s32.totalorder %s166, 127
        %s168 = scalar_select %p167, %s166, 127
        %s169 = smul.addr %s168, 11
        %s170 = smul.addr %s169, 4
        %s171 = scalar_lea.vmem %s0, %s170
        %s172 = smul.u32 64, %s16
      $region28: #{pallas_gemm_bias.1} parent=23 // pred_fallthru
        _
    $region24: #{pallas_gemm_bias.1} parent=5 // pred_fallthru
      _
    %p173 = scmp.le.s32.totalorder 1, %s9
    %p174 = scmp.lt.s32.totalorder %s9, 3
    %p175 = pnand %p173, %p174
    %p176 = pneg %p175
    // Predicated region
    $region29: #{pallas_gemm_bias.1} parent=5 // pred_check
      _
    $region30: #{pallas_gemm_bias.1} parent=5 // pred_check_branch
      %178 = sbr.rel (%p175) target = $region32
    $region31: #{pallas_gemm_bias.1} parent=5 // pred_region
      %s179 = ssub.s32 %s9, 1
      %s180 = smul.u32 64, %s18
      %p181 = scmp.lt.s32.totalorder %s180, 127
      %s182 = scalar_select %p181, %s180, 127
      %s183 = smul.addr %s182, 11
      %s184 = smul.addr %s183, 4
      %s185 = scalar_lea.vmem %s0, %s184
      %p186 = pneg %p47
      %p187 = pneg %p44
      %s188 = smul.u32 2, %s19
      %p189 = scmp.lt.s32.totalorder %s188, 1
      %s190 = scalar_select %p189, %s188, 1
      %s191 = smul.addr %s190, 4
      %s192 = scalar_lea.vmem %s1, %s191
      %p193 = pneg %p73
      %p194 = pneg %p70
      %s195 = smul.u32 2, %s19
      %p196 = scmp.lt.s32.totalorder %s195, 1
      %s197 = scalar_select %p196, %s195, 1
      %s198 = scalar_lea.vmem %s2, %s197
      %p199 = pneg %p99
      %p200 = pneg %p96
      %p201 = pneg %p127
      %p202 = pneg %p124
      %s203 = smul.u32 64, %s18
      %s204 = smul.u32 2, %s19
      %p205 = scmp.lt.s32.totalorder %s203, 127
      %s206 = scalar_select %p205, %s203, 127
      %p207 = scmp.lt.s32.totalorder %s204, 1
      %s208 = scalar_select %p207, %s204, 1
      %s209 = smul.addr %s206, 2
      %s210 = sadd.s32 %s208, %s209
      %s211 = smul.addr %s210, 4
      %s212 = scalar_lea.vmem %s3, %s211
      %s213 = smul.u32 64, %s18
      %p214 = scmp.lt.s32.totalorder %s213, 127
      %s215 = scalar_select %p214, %s213, 127
      %s216 = smul.addr %s215, 11
      %s217 = smul.addr %s216, 4
      %s218 = scalar_lea.vmem %s0, %s217
      %s219 = smul.u32 64, %s18
      %s220 = smul.u32 2, %s19
      %p221 = scmp.lt.s32.totalorder %s220, 1
      %s222 = scalar_select %p221, %s220, 1
      %s223 = smul.addr %s222, 4
      %s224 = scalar_lea.vmem %s1, %s223
      %s225 = smul.u32 2, %s19
      %s226 = smul.u32 2, %s19
      %p227 = scmp.lt.s32.totalorder %s226, 1
      %s228 = scalar_select %p227, %s226, 1
      %s229 = scalar_lea.vmem %s2, %s228
      %s230 = smul.u32 2, %s19
      %s231 = smul.u32 64, %s18
      %s232 = smul.u32 2, %s19
      %p233 = scmp.lt.s32.totalorder %s231, 127
      %s234 = scalar_select %p233, %s231, 127
      %p235 = scmp.lt.s32.totalorder %s232, 1
      %s236 = scalar_select %p235, %s232, 1
      %s237 = smul.addr %s234, 2
      %s238 = sadd.s32 %s236, %s237
      %s239 = smul.addr %s238, 4
      %s240 = scalar_lea.vmem %s3, %s239
      %s241 = smul.u32 64, %s18
      %s242 = smul.u32 2, %s19
      %v244 = vld [vmem:[%s218] sm:$0xff]
      %v245 = vld [vmem:[%s218 + $0x8] sm:$0xff]
      %v246 = vld [vmem:[%s218 + $0x10] sm:$0xff]
      %v247 = vld [vmem:[%s218 + $0x18] sm:$0xff]
      %v248 = vld [vmem:[%s218 + $0x20] sm:$0xff]
      %v249 = vld [vmem:[%s218 + $0x28] sm:$0xf]
      %v250 = vld [vmem:[%s218 + $0x2c] sm:$0xff]
      %v251 = vld [vmem:[%s218 + $0x34] sm:$0xff]
      %v252 = vld [vmem:[%s218 + $0x3c] sm:$0xff]
      %v253 = vld [vmem:[%s218 + $0x44] sm:$0xff]
      %v254 = vld [vmem:[%s218 + $0x4c] sm:$0xff]
      %v255 = vld [vmem:[%s218 + $0x54] sm:$0xf]
      %v256 = vld [vmem:[%s218 + $0x58] sm:$0xff]
      %v257 = vld [vmem:[%s218 + $0x60] sm:$0xff]
      %v258 = vld [vmem:[%s218 + $0x68] sm:$0xff]
      %v259 = vld [vmem:[%s218 + $0x70] sm:$0xff]
      %v260 = vld [vmem:[%s218 + $0x78] sm:$0xff]
      %v261 = vld [vmem:[%s218 + $0x80] sm:$0xf]
      %v262 = vld [vmem:[%s218 + $0x84] sm:$0xff]
      %v263 = vld [vmem:[%s218 + $0x8c] sm:$0xff]
      %v264 = vld [vmem:[%s218 + $0x94] sm:$0xff]
      %v265 = vld [vmem:[%s218 + $0x9c] sm:$0xff]
      %v266 = vld [vmem:[%s218 + $0xa4] sm:$0xff]
      %v267 = vld [vmem:[%s218 + $0xac] sm:$0xf]
      %v268 = vld [vmem:[%s218 + $0xb0] sm:$0xff]
      %v269 = vld [vmem:[%s218 + $0xb8] sm:$0xff]
      %v270 = vld [vmem:[%s218 + $0xc0] sm:$0xff]
      %v271 = vld [vmem:[%s218 + $0xc8] sm:$0xff]
      %v272 = vld [vmem:[%s218 + $0xd0] sm:$0xff]
      %v273 = vld [vmem:[%s218 + $0xd8] sm:$0xf]
      %v274 = vld [vmem:[%s218 + $0xdc] sm:$0xff]
      %v275 = vld [vmem:[%s218 + $0xe4] sm:$0xff]
      %v276 = vld [vmem:[%s218 + $0xec] sm:$0xff]
      %v277 = vld [vmem:[%s218 + $0xf4] sm:$0xff]
      %v278 = vld [vmem:[%s218 + $0xfc] sm:$0xff]
      %v279 = vld [vmem:[%s218 + $0x104] sm:$0xf]
      %v280 = vld [vmem:[%s218 + $0x108] sm:$0xff]
      %v281 = vld [vmem:[%s218 + $0x110] sm:$0xff]
      %v282 = vld [vmem:[%s218 + $0x118] sm:$0xff]
      %v283 = vld [vmem:[%s218 + $0x120] sm:$0xff]
      %v284 = vld [vmem:[%s218 + $0x128] sm:$0xff]
      %v285 = vld [vmem:[%s218 + $0x130] sm:$0xf]
      %v286 = vld [vmem:[%s218 + $0x134] sm:$0xff]
      %v287 = vld [vmem:[%s218 + $0x13c] sm:$0xff]
      %v288 = vld [vmem:[%s218 + $0x144] sm:$0xff]
      %v289 = vld [vmem:[%s218 + $0x14c] sm:$0xff]
      %v290 = vld [vmem:[%s218 + $0x154] sm:$0xff]
      %v291 = vld [vmem:[%s218 + $0x15c] sm:$0xf]
      %v292 = vld [vmem:[%s218 + $0x160] sm:$0xff]
      %v293 = vld [vmem:[%s218 + $0x168] sm:$0xff]
      %v294 = vld [vmem:[%s218 + $0x170] sm:$0xff]
      %v295 = vld [vmem:[%s218 + $0x178] sm:$0xff]
      %v296 = vld [vmem:[%s218 + $0x180] sm:$0xff]
      %v297 = vld [vmem:[%s218 + $0x188] sm:$0xf]
      %v298 = vld [vmem:[%s218 + $0x18c] sm:$0xff]
      %v299 = vld [vmem:[%s218 + $0x194] sm:$0xff]
      %v300 = vld [vmem:[%s218 + $0x19c] sm:$0xff]
      %v301 = vld [vmem:[%s218 + $0x1a4] sm:$0xff]
      %v302 = vld [vmem:[%s218 + $0x1ac] sm:$0xff]
      %v303 = vld [vmem:[%s218 + $0x1b4] sm:$0xf]
      %v304 = vld [vmem:[%s218 + $0x1b8] sm:$0xff]
      %v305 = vld [vmem:[%s218 + $0x1c0] sm:$0xff]
      %v306 = vld [vmem:[%s218 + $0x1c8] sm:$0xff]
      %v307 = vld [vmem:[%s218 + $0x1d0] sm:$0xff]
      %v308 = vld [vmem:[%s218 + $0x1d8] sm:$0xff]
      %v309 = vld [vmem:[%s218 + $0x1e0] sm:$0xf]
      %v310 = vld [vmem:[%s218 + $0x1e4] sm:$0xff]
      %v311 = vld [vmem:[%s218 + $0x1ec] sm:$0xff]
      %v312 = vld [vmem:[%s218 + $0x1f4] sm:$0xff]
      %v313 = vld [vmem:[%s218 + $0x1fc] sm:$0xff]
      %v314 = vld [vmem:[%s218 + $0x204] sm:$0xff]
      %v315 = vld [vmem:[%s218 + $0x20c] sm:$0xf]
      %v316 = vld [vmem:[%s218 + $0x210] sm:$0xff]
      %v317 = vld [vmem:[%s218 + $0x218] sm:$0xff]
      %v318 = vld [vmem:[%s218 + $0x220] sm:$0xff]
      %v319 = vld [vmem:[%s218 + $0x228] sm:$0xff]
      %v320 = vld [vmem:[%s218 + $0x230] sm:$0xff]
      %v321 = vld [vmem:[%s218 + $0x238] sm:$0xf]
      %v322 = vld [vmem:[%s218 + $0x23c] sm:$0xff]
      %v323 = vld [vmem:[%s218 + $0x244] sm:$0xff]
      %v324 = vld [vmem:[%s218 + $0x24c] sm:$0xff]
      %v325 = vld [vmem:[%s218 + $0x254] sm:$0xff]
      %v326 = vld [vmem:[%s218 + $0x25c] sm:$0xff]
      %v327 = vld [vmem:[%s218 + $0x264] sm:$0xf]
      %v328 = vld [vmem:[%s218 + $0x268] sm:$0xff]
      %v329 = vld [vmem:[%s218 + $0x270] sm:$0xff]
      %v330 = vld [vmem:[%s218 + $0x278] sm:$0xff]
      %v331 = vld [vmem:[%s218 + $0x280] sm:$0xff]
      %v332 = vld [vmem:[%s218 + $0x288] sm:$0xff]
      %v333 = vld [vmem:[%s218 + $0x290] sm:$0xf]
      %v334 = vld [vmem:[%s218 + $0x294] sm:$0xff]
      %v335 = vld [vmem:[%s218 + $0x29c] sm:$0xff]
      %v336 = vld [vmem:[%s218 + $0x2a4] sm:$0xff]
      %v337 = vld [vmem:[%s218 + $0x2ac] sm:$0xff]
      %v338 = vld [vmem:[%s218 + $0x2b4] sm:$0xff]
      %v339 = vld [vmem:[%s218 + $0x2bc] sm:$0xf]
      %v340 = vld [vmem:[%s218 + $0x2c0] sm:$0xff]
      %v341 = vld [vmem:[%s218 + $0x2c8] sm:$0xff]
      %v342 = vld [vmem:[%s218 + $0x2d0] sm:$0xff]
      %v343 = vld [vmem:[%s218 + $0x2d8] sm:$0xff]
      %v344 = vld [vmem:[%s218 + $0x2e0] sm:$0xff]
      %v345 = vld [vmem:[%s218 + $0x2e8] sm:$0xf]
      %v346 = vld [vmem:[%s218 + $0x2ec] sm:$0xff]
      %v347 = vld [vmem:[%s218 + $0x2f4] sm:$0xff]
      %v348 = vld [vmem:[%s218 + $0x2fc] sm:$0xff]
      %v349 = vld [vmem:[%s218 + $0x304] sm:$0xff]
      %v350 = vld [vmem:[%s218 + $0x30c] sm:$0xff]
      %v351 = vld [vmem:[%s218 + $0x314] sm:$0xf]
      %v352 = vld [vmem:[%s218 + $0x318] sm:$0xff]
      %v353 = vld [vmem:[%s218 + $0x320] sm:$0xff]
      %v354 = vld [vmem:[%s218 + $0x328] sm:$0xff]
      %v355 = vld [vmem:[%s218 + $0x330] sm:$0xff]
      %v356 = vld [vmem:[%s218 + $0x338] sm:$0xff]
      %v357 = vld [vmem:[%s218 + $0x340] sm:$0xf]
      %v358 = vld [vmem:[%s218 + $0x344] sm:$0xff]
      %v359 = vld [vmem:[%s218 + $0x34c] sm:$0xff]
      %v360 = vld [vmem:[%s218 + $0x354] sm:$0xff]
      %v361 = vld [vmem:[%s218 + $0x35c] sm:$0xff]
      %v362 = vld [vmem:[%s218 + $0x364] sm:$0xff]
      %v363 = vld [vmem:[%s218 + $0x36c] sm:$0xf]
      %v364 = vld [vmem:[%s218 + $0x370] sm:$0xff]
      %v365 = vld [vmem:[%s218 + $0x378] sm:$0xff]
      %v366 = vld [vmem:[%s218 + $0x380] sm:$0xff]
      %v367 = vld [vmem:[%s218 + $0x388] sm:$0xff]
      %v368 = vld [vmem:[%s218 + $0x390] sm:$0xff]
      %v369 = vld [vmem:[%s218 + $0x398] sm:$0xf]
      %v370 = vld [vmem:[%s218 + $0x39c] sm:$0xff]
      %v371 = vld [vmem:[%s218 + $0x3a4] sm:$0xff]
      %v372 = vld [vmem:[%s218 + $0x3ac] sm:$0xff]
      %v373 = vld [vmem:[%s218 + $0x3b4] sm:$0xff]
      %v374 = vld [vmem:[%s218 + $0x3bc] sm:$0xff]
      %v375 = vld [vmem:[%s218 + $0x3c4] sm:$0xf]
      %v376 = vld [vmem:[%s218 + $0x3c8] sm:$0xff]
      %v377 = vld [vmem:[%s218 + $0x3d0] sm:$0xff]
      %v378 = vld [vmem:[%s218 + $0x3d8] sm:$0xff]
      %v379 = vld [vmem:[%s218 + $0x3e0] sm:$0xff]
      %v380 = vld [vmem:[%s218 + $0x3e8] sm:$0xff]
      %v381 = vld [vmem:[%s218 + $0x3f0] sm:$0xf]
      %v382 = vld [vmem:[%s218 + $0x3f4] sm:$0xff]
      %v383 = vld [vmem:[%s218 + $0x3fc] sm:$0xff]
      %v384 = vld [vmem:[%s218 + $0x404] sm:$0xff]
      %v385 = vld [vmem:[%s218 + $0x40c] sm:$0xff]
      %v386 = vld [vmem:[%s218 + $0x414] sm:$0xff]
      %v387 = vld [vmem:[%s218 + $0x41c] sm:$0xf]
      %v388 = vld [vmem:[%s218 + $0x420] sm:$0xff]
      %v389 = vld [vmem:[%s218 + $0x428] sm:$0xff]
      %v390 = vld [vmem:[%s218 + $0x430] sm:$0xff]
      %v391 = vld [vmem:[%s218 + $0x438] sm:$0xff]
      %v392 = vld [vmem:[%s218 + $0x440] sm:$0xff]
      %v393 = vld [vmem:[%s218 + $0x448] sm:$0xf]
      %v394 = vld [vmem:[%s218 + $0x44c] sm:$0xff]
      %v395 = vld [vmem:[%s218 + $0x454] sm:$0xff]
      %v396 = vld [vmem:[%s218 + $0x45c] sm:$0xff]
      %v397 = vld [vmem:[%s218 + $0x464] sm:$0xff]
      %v398 = vld [vmem:[%s218 + $0x46c] sm:$0xff]
      %v399 = vld [vmem:[%s218 + $0x474] sm:$0xf]
      %v400 = vld [vmem:[%s218 + $0x478] sm:$0xff]
      %v401 = vld [vmem:[%s218 + $0x480] sm:$0xff]
      %v402 = vld [vmem:[%s218 + $0x488] sm:$0xff]
      %v403 = vld [vmem:[%s218 + $0x490] sm:$0xff]
      %v404 = vld [vmem:[%s218 + $0x498] sm:$0xff]
      %v405 = vld [vmem:[%s218 + $0x4a0] sm:$0xf]
      %v406 = vld [vmem:[%s218 + $0x4a4] sm:$0xff]
      %v407 = vld [vmem:[%s218 + $0x4ac] sm:$0xff]
      %v408 = vld [vmem:[%s218 + $0x4b4] sm:$0xff]
      %v409 = vld [vmem:[%s218 + $0x4bc] sm:$0xff]
      %v410 = vld [vmem:[%s218 + $0x4c4] sm:$0xff]
      %v411 = vld [vmem:[%s218 + $0x4cc] sm:$0xf]
      %v412 = vld [vmem:[%s218 + $0x4d0] sm:$0xff]
      %v413 = vld [vmem:[%s218 + $0x4d8] sm:$0xff]
      %v414 = vld [vmem:[%s218 + $0x4e0] sm:$0xff]
      %v415 = vld [vmem:[%s218 + $0x4e8] sm:$0xff]
      %v416 = vld [vmem:[%s218 + $0x4f0] sm:$0xff]
      %v417 = vld [vmem:[%s218 + $0x4f8] sm:$0xf]
      %v418 = vld [vmem:[%s218 + $0x4fc] sm:$0xff]
      %v419 = vld [vmem:[%s218 + $0x504] sm:$0xff]
      %v420 = vld [vmem:[%s218 + $0x50c] sm:$0xff]
      %v421 = vld [vmem:[%s218 + $0x514] sm:$0xff]
      %v422 = vld [vmem:[%s218 + $0x51c] sm:$0xff]
      %v423 = vld [vmem:[%s218 + $0x524] sm:$0xf]
      %v424 = vld [vmem:[%s218 + $0x528] sm:$0xff]
      %v425 = vld [vmem:[%s218 + $0x530] sm:$0xff]
      %v426 = vld [vmem:[%s218 + $0x538] sm:$0xff]
      %v427 = vld [vmem:[%s218 + $0x540] sm:$0xff]
      %v428 = vld [vmem:[%s218 + $0x548] sm:$0xff]
      %v429 = vld [vmem:[%s218 + $0x550] sm:$0xf]
      %v430 = vld [vmem:[%s218 + $0x554] sm:$0xff]
      %v431 = vld [vmem:[%s218 + $0x55c] sm:$0xff]
      %v432 = vld [vmem:[%s218 + $0x564] sm:$0xff]
      %v433 = vld [vmem:[%s218 + $0x56c] sm:$0xff]
      %v434 = vld [vmem:[%s218 + $0x574] sm:$0xff]
      %v435 = vld [vmem:[%s218 + $0x57c] sm:$0xf]
      %v436 = vld [vmem:[%s218 + $0x580] sm:$0xff]
      %v437 = vld [vmem:[%s218 + $0x588] sm:$0xff]
      %v438 = vld [vmem:[%s218 + $0x590] sm:$0xff]
      %v439 = vld [vmem:[%s218 + $0x598] sm:$0xff]
      %v440 = vld [vmem:[%s218 + $0x5a0] sm:$0xff]
      %v441 = vld [vmem:[%s218 + $0x5a8] sm:$0xf]
      %v442 = vld [vmem:[%s218 + $0x5ac] sm:$0xff]
      %v443 = vld [vmem:[%s218 + $0x5b4] sm:$0xff]
      %v444 = vld [vmem:[%s218 + $0x5bc] sm:$0xff]
      %v445 = vld [vmem:[%s218 + $0x5c4] sm:$0xff]
      %v446 = vld [vmem:[%s218 + $0x5cc] sm:$0xff]
      %v447 = vld [vmem:[%s218 + $0x5d4] sm:$0xf]
      %v448 = vld [vmem:[%s218 + $0x5d8] sm:$0xff]
      %v449 = vld [vmem:[%s218 + $0x5e0] sm:$0xff]
      %v450 = vld [vmem:[%s218 + $0x5e8] sm:$0xff]
      %v451 = vld [vmem:[%s218 + $0x5f0] sm:$0xff]
      %v452 = vld [vmem:[%s218 + $0x5f8] sm:$0xff]
      %v453 = vld [vmem:[%s218 + $0x600] sm:$0xf]
      %v454 = vld [vmem:[%s218 + $0x604] sm:$0xff]
      %v455 = vld [vmem:[%s218 + $0x60c] sm:$0xff]
      %v456 = vld [vmem:[%s218 + $0x614] sm:$0xff]
      %v457 = vld [vmem:[%s218 + $0x61c] sm:$0xff]
      %v458 = vld [vmem:[%s218 + $0x624] sm:$0xff]
      %v459 = vld [vmem:[%s218 + $0x62c] sm:$0xf]
      %v460 = vld [vmem:[%s218 + $0x630] sm:$0xff]
      %v461 = vld [vmem:[%s218 + $0x638] sm:$0xff]
      %v462 = vld [vmem:[%s218 + $0x640] sm:$0xff]
      %v463 = vld [vmem:[%s218 + $0x648] sm:$0xff]
      %v464 = vld [vmem:[%s218 + $0x650] sm:$0xff]
      %v465 = vld [vmem:[%s218 + $0x658] sm:$0xf]
      %v466 = vld [vmem:[%s218 + $0x65c] sm:$0xff]
      %v467 = vld [vmem:[%s218 + $0x664] sm:$0xff]
      %v468 = vld [vmem:[%s218 + $0x66c] sm:$0xff]
      %v469 = vld [vmem:[%s218 + $0x674] sm:$0xff]
      %v470 = vld [vmem:[%s218 + $0x67c] sm:$0xff]
      %v471 = vld [vmem:[%s218 + $0x684] sm:$0xf]
      %v472 = vld [vmem:[%s218 + $0x688] sm:$0xff]
      %v473 = vld [vmem:[%s218 + $0x690] sm:$0xff]
      %v474 = vld [vmem:[%s218 + $0x698] sm:$0xff]
      %v475 = vld [vmem:[%s218 + $0x6a0] sm:$0xff]
      %v476 = vld [vmem:[%s218 + $0x6a8] sm:$0xff]
      %v477 = vld [vmem:[%s218 + $0x6b0] sm:$0xf]
      %v478 = vld [vmem:[%s218 + $0x6b4] sm:$0xff]
      %v479 = vld [vmem:[%s218 + $0x6bc] sm:$0xff]
      %v480 = vld [vmem:[%s218 + $0x6c4] sm:$0xff]
      %v481 = vld [vmem:[%s218 + $0x6cc] sm:$0xff]
      %v482 = vld [vmem:[%s218 + $0x6d4] sm:$0xff]
      %v483 = vld [vmem:[%s218 + $0x6dc] sm:$0xf]
      %v484 = vld [vmem:[%s218 + $0x6e0] sm:$0xff]
      %v485 = vld [vmem:[%s218 + $0x6e8] sm:$0xff]
      %v486 = vld [vmem:[%s218 + $0x6f0] sm:$0xff]
      %v487 = vld [vmem:[%s218 + $0x6f8] sm:$0xff]
      %v488 = vld [vmem:[%s218 + $0x700] sm:$0xff]
      %v489 = vld [vmem:[%s218 + $0x708] sm:$0xf]
      %v490 = vld [vmem:[%s218 + $0x70c] sm:$0xff]
      %v491 = vld [vmem:[%s218 + $0x714] sm:$0xff]
      %v492 = vld [vmem:[%s218 + $0x71c] sm:$0xff]
      %v493 = vld [vmem:[%s218 + $0x724] sm:$0xff]
      %v494 = vld [vmem:[%s218 + $0x72c] sm:$0xff]
      %v495 = vld [vmem:[%s218 + $0x734] sm:$0xf]
      %v496 = vld [vmem:[%s218 + $0x738] sm:$0xff]
      %v497 = vld [vmem:[%s218 + $0x740] sm:$0xff]
      %v498 = vld [vmem:[%s218 + $0x748] sm:$0xff]
      %v499 = vld [vmem:[%s218 + $0x750] sm:$0xff]
      %v500 = vld [vmem:[%s218 + $0x758] sm:$0xff]
      %v501 = vld [vmem:[%s218 + $0x760] sm:$0xf]
      %v502 = vld [vmem:[%s218 + $0x764] sm:$0xff]
      %v503 = vld [vmem:[%s218 + $0x76c] sm:$0xff]
      %v504 = vld [vmem:[%s218 + $0x774] sm:$0xff]
      %v505 = vld [vmem:[%s218 + $0x77c] sm:$0xff]
      %v506 = vld [vmem:[%s218 + $0x784] sm:$0xff]
      %v507 = vld [vmem:[%s218 + $0x78c] sm:$0xf]
      %v508 = vld [vmem:[%s218 + $0x790] sm:$0xff]
      %v509 = vld [vmem:[%s218 + $0x798] sm:$0xff]
      %v510 = vld [vmem:[%s218 + $0x7a0] sm:$0xff]
      %v511 = vld [vmem:[%s218 + $0x7a8] sm:$0xff]
      %v512 = vld [vmem:[%s218 + $0x7b0] sm:$0xff]
      %v513 = vld [vmem:[%s218 + $0x7b8] sm:$0xf]
      %v514 = vld [vmem:[%s218 + $0x7bc] sm:$0xff]
      %v515 = vld [vmem:[%s218 + $0x7c4] sm:$0xff]
      %v516 = vld [vmem:[%s218 + $0x7cc] sm:$0xff]
      %v517 = vld [vmem:[%s218 + $0x7d4] sm:$0xff]
      %v518 = vld [vmem:[%s218 + $0x7dc] sm:$0xff]
      %v519 = vld [vmem:[%s218 + $0x7e4] sm:$0xf]
      %v520 = vld [vmem:[%s218 + $0x7e8] sm:$0xff]
      %v521 = vld [vmem:[%s218 + $0x7f0] sm:$0xff]
      %v522 = vld [vmem:[%s218 + $0x7f8] sm:$0xff]
      %v523 = vld [vmem:[%s218 + $0x800] sm:$0xff]
      %v524 = vld [vmem:[%s218 + $0x808] sm:$0xff]
      %v525 = vld [vmem:[%s218 + $0x810] sm:$0xf]
      %v526 = vld [vmem:[%s218 + $0x814] sm:$0xff]
      %v527 = vld [vmem:[%s218 + $0x81c] sm:$0xff]
      %v528 = vld [vmem:[%s218 + $0x824] sm:$0xff]
      %v529 = vld [vmem:[%s218 + $0x82c] sm:$0xff]
      %v530 = vld [vmem:[%s218 + $0x834] sm:$0xff]
      %v531 = vld [vmem:[%s218 + $0x83c] sm:$0xf]
      %v532 = vld [vmem:[%s218 + $0x840] sm:$0xff]
      %v533 = vld [vmem:[%s218 + $0x848] sm:$0xff]
      %v534 = vld [vmem:[%s218 + $0x850] sm:$0xff]
      %v535 = vld [vmem:[%s218 + $0x858] sm:$0xff]
      %v536 = vld [vmem:[%s218 + $0x860] sm:$0xff]
      %v537 = vld [vmem:[%s218 + $0x868] sm:$0xf]
      %v538 = vld [vmem:[%s218 + $0x86c] sm:$0xff]
      %v539 = vld [vmem:[%s218 + $0x874] sm:$0xff]
      %v540 = vld [vmem:[%s218 + $0x87c] sm:$0xff]
      %v541 = vld [vmem:[%s218 + $0x884] sm:$0xff]
      %v542 = vld [vmem:[%s218 + $0x88c] sm:$0xff]
      %v543 = vld [vmem:[%s218 + $0x894] sm:$0xf]
      %v544 = vld [vmem:[%s218 + $0x898] sm:$0xff]
      %v545 = vld [vmem:[%s218 + $0x8a0] sm:$0xff]
      %v546 = vld [vmem:[%s218 + $0x8a8] sm:$0xff]
      %v547 = vld [vmem:[%s218 + $0x8b0] sm:$0xff]
      %v548 = vld [vmem:[%s218 + $0x8b8] sm:$0xff]
      %v549 = vld [vmem:[%s218 + $0x8c0] sm:$0xf]
      %v550 = vld [vmem:[%s218 + $0x8c4] sm:$0xff]
      %v551 = vld [vmem:[%s218 + $0x8cc] sm:$0xff]
      %v552 = vld [vmem:[%s218 + $0x8d4] sm:$0xff]
      %v553 = vld [vmem:[%s218 + $0x8dc] sm:$0xff]
      %v554 = vld [vmem:[%s218 + $0x8e4] sm:$0xff]
      %v555 = vld [vmem:[%s218 + $0x8ec] sm:$0xf]
      %v556 = vld [vmem:[%s218 + $0x8f0] sm:$0xff]
      %v557 = vld [vmem:[%s218 + $0x8f8] sm:$0xff]
      %v558 = vld [vmem:[%s218 + $0x900] sm:$0xff]
      %v559 = vld [vmem:[%s218 + $0x908] sm:$0xff]
      %v560 = vld [vmem:[%s218 + $0x910] sm:$0xff]
      %v561 = vld [vmem:[%s218 + $0x918] sm:$0xf]
      %v562 = vld [vmem:[%s218 + $0x91c] sm:$0xff]
      %v563 = vld [vmem:[%s218 + $0x924] sm:$0xff]
      %v564 = vld [vmem:[%s218 + $0x92c] sm:$0xff]
      %v565 = vld [vmem:[%s218 + $0x934] sm:$0xff]
      %v566 = vld [vmem:[%s218 + $0x93c] sm:$0xff]
      %v567 = vld [vmem:[%s218 + $0x944] sm:$0xf]
      %v568 = vld [vmem:[%s218 + $0x948] sm:$0xff]
      %v569 = vld [vmem:[%s218 + $0x950] sm:$0xff]
      %v570 = vld [vmem:[%s218 + $0x958] sm:$0xff]
      %v571 = vld [vmem:[%s218 + $0x960] sm:$0xff]
      %v572 = vld [vmem:[%s218 + $0x968] sm:$0xff]
      %v573 = vld [vmem:[%s218 + $0x970] sm:$0xf]
      %v574 = vld [vmem:[%s218 + $0x974] sm:$0xff]
      %v575 = vld [vmem:[%s218 + $0x97c] sm:$0xff]
      %v576 = vld [vmem:[%s218 + $0x984] sm:$0xff]
      %v577 = vld [vmem:[%s218 + $0x98c] sm:$0xff]
      %v578 = vld [vmem:[%s218 + $0x994] sm:$0xff]
      %v579 = vld [vmem:[%s218 + $0x99c] sm:$0xf]
      %v580 = vld [vmem:[%s218 + $0x9a0] sm:$0xff]
      %v581 = vld [vmem:[%s218 + $0x9a8] sm:$0xff]
      %v582 = vld [vmem:[%s218 + $0x9b0] sm:$0xff]
      %v583 = vld [vmem:[%s218 + $0x9b8] sm:$0xff]
      %v584 = vld [vmem:[%s218 + $0x9c0] sm:$0xff]
      %v585 = vld [vmem:[%s218 + $0x9c8] sm:$0xf]
      %v586 = vld [vmem:[%s218 + $0x9cc] sm:$0xff]
      %v587 = vld [vmem:[%s218 + $0x9d4] sm:$0xff]
      %v588 = vld [vmem:[%s218 + $0x9dc] sm:$0xff]
      %v589 = vld [vmem:[%s218 + $0x9e4] sm:$0xff]
      %v590 = vld [vmem:[%s218 + $0x9ec] sm:$0xff]
      %v591 = vld [vmem:[%s218 + $0x9f4] sm:$0xf]
      %v592 = vld [vmem:[%s218 + $0x9f8] sm:$0xff]
      %v593 = vld [vmem:[%s218 + $0xa00] sm:$0xff]
      %v594 = vld [vmem:[%s218 + $0xa08] sm:$0xff]
      %v595 = vld [vmem:[%s218 + $0xa10] sm:$0xff]
      %v596 = vld [vmem:[%s218 + $0xa18] sm:$0xff]
      %v597 = vld [vmem:[%s218 + $0xa20] sm:$0xf]
      %v598 = vld [vmem:[%s218 + $0xa24] sm:$0xff]
      %v599 = vld [vmem:[%s218 + $0xa2c] sm:$0xff]
      %v600 = vld [vmem:[%s218 + $0xa34] sm:$0xff]
      %v601 = vld [vmem:[%s218 + $0xa3c] sm:$0xff]
      %v602 = vld [vmem:[%s218 + $0xa44] sm:$0xff]
      %v603 = vld [vmem:[%s218 + $0xa4c] sm:$0xf]
      %v604 = vld [vmem:[%s218 + $0xa50] sm:$0xff]
      %v605 = vld [vmem:[%s218 + $0xa58] sm:$0xff]
      %v606 = vld [vmem:[%s218 + $0xa60] sm:$0xff]
      %v607 = vld [vmem:[%s218 + $0xa68] sm:$0xff]
      %v608 = vld [vmem:[%s218 + $0xa70] sm:$0xff]
      %v609 = vld [vmem:[%s218 + $0xa78] sm:$0xf]
      %v610 = vld [vmem:[%s218 + $0xa7c] sm:$0xff]
      %v611 = vld [vmem:[%s218 + $0xa84] sm:$0xff]
      %v612 = vld [vmem:[%s218 + $0xa8c] sm:$0xff]
      %v613 = vld [vmem:[%s218 + $0xa94] sm:$0xff]
      %v614 = vld [vmem:[%s218 + $0xa9c] sm:$0xff]
      %v615 = vld [vmem:[%s218 + $0xaa4] sm:$0xf]
      %v616 = vld [vmem:[%s218 + $0xaa8] sm:$0xff]
      %v617 = vld [vmem:[%s218 + $0xab0] sm:$0xff]
      %v618 = vld [vmem:[%s218 + $0xab8] sm:$0xff]
      %v619 = vld [vmem:[%s218 + $0xac0] sm:$0xff]
      %v620 = vld [vmem:[%s218 + $0xac8] sm:$0xff]
      %v621 = vld [vmem:[%s218 + $0xad0] sm:$0xf]
      %v622 = vld [vmem:[%s218 + $0xad4] sm:$0xff]
      %v623 = vld [vmem:[%s218 + $0xadc] sm:$0xff]
      %v624 = vld [vmem:[%s218 + $0xae4] sm:$0xff]
      %v625 = vld [vmem:[%s218 + $0xaec] sm:$0xff]
      %v626 = vld [vmem:[%s218 + $0xaf4] sm:$0xff]
      %v627 = vld [vmem:[%s218 + $0xafc] sm:$0xf]
      %v628 = vld [vmem:[%s224] sm:$0xff]
      %v629 = vld [vmem:[%s224 + $0x8] sm:$0xff]
      %v630 = vld [vmem:[%s224 + $0x10] sm:$0xff]
      %v631 = vld [vmem:[%s224 + $0x18] sm:$0xff]
      %v632 = vld [vmem:[%s224 + $0x20] sm:$0xff]
      %v633 = vld [vmem:[%s224 + $0x28] sm:$0xff]
      %v634 = vld [vmem:[%s224 + $0x30] sm:$0xff]
      %v635 = vld [vmem:[%s224 + $0x38] sm:$0xff]
      %v636 = vld [vmem:[%s224 + $0x40] sm:$0xff]
      %v637 = vld [vmem:[%s224 + $0x48] sm:$0xff]
      %v638 = vld [vmem:[%s224 + $0x50] sm:$0xff]
      %v639 = vld [vmem:[%s224 + $0x58] sm:$0xff]
      %v640 = vld [vmem:[%s224 + $0x60] sm:$0xff]
      %v641 = vld [vmem:[%s224 + $0x68] sm:$0xff]
      %v642 = vld [vmem:[%s224 + $0x70] sm:$0xff]
      %v643 = vld [vmem:[%s224 + $0x78] sm:$0xff]
      %v644 = vld [vmem:[%s224 + $0x80] sm:$0xff]
      %v645 = vld [vmem:[%s224 + $0x88] sm:$0xff]
      %v646 = vld [vmem:[%s224 + $0x90] sm:$0xff]
      %v647 = vld [vmem:[%s224 + $0x98] sm:$0xff]
      %v648 = vld [vmem:[%s224 + $0xa0] sm:$0xff]
      %v649 = vld [vmem:[%s224 + $0xa8] sm:$0xff]
      %v650 = vld [vmem:[%s224 + $0xb0] sm:$0xff]
      %v651 = vld [vmem:[%s224 + $0xb8] sm:$0xff]
      %v652 = vld [vmem:[%s224 + $0xc0] sm:$0xff]
      %v653 = vld [vmem:[%s224 + $0xc8] sm:$0xff]
      %v654 = vld [vmem:[%s224 + $0xd0] sm:$0xff]
      %v655 = vld [vmem:[%s224 + $0xd8] sm:$0xff]
      %v656 = vld [vmem:[%s224 + $0xe0] sm:$0xff]
      %v657 = vld [vmem:[%s224 + $0xe8] sm:$0xff]
      %v658 = vld [vmem:[%s224 + $0xf0] sm:$0xff]
      %v659 = vld [vmem:[%s224 + $0xf8] sm:$0xff]
      %v660 = vld [vmem:[%s224 + $0x100] sm:$0xff]
      %v661 = vld [vmem:[%s224 + $0x108] sm:$0xff]
      %v662 = vld [vmem:[%s224 + $0x110] sm:$0xff]
      %v663 = vld [vmem:[%s224 + $0x118] sm:$0xff]
      %v664 = vld [vmem:[%s224 + $0x120] sm:$0xff]
      %v665 = vld [vmem:[%s224 + $0x128] sm:$0xff]
      %v666 = vld [vmem:[%s224 + $0x130] sm:$0xff]
      %v667 = vld [vmem:[%s224 + $0x138] sm:$0xff]
      %v668 = vld [vmem:[%s224 + $0x140] sm:$0xff]
      %v669 = vld [vmem:[%s224 + $0x148] sm:$0xff]
      %v670 = vld [vmem:[%s224 + $0x150] sm:$0xff]
      %v671 = vld [vmem:[%s224 + $0x158] sm:$0xff]
      %v672 = vld [vmem:[%s224 + $0x160] sm:$0xff]
      %v673 = vld [vmem:[%s224 + $0x168] sm:$0xff]
      %v674 = vld [vmem:[%s224 + $0x170] sm:$0xff]
      %v675 = vld [vmem:[%s224 + $0x178] sm:$0xff]
      %v676 = vld [vmem:[%s224 + $0x180] sm:$0xff]
      %v677 = vld [vmem:[%s224 + $0x188] sm:$0xff]
      %v678 = vld [vmem:[%s224 + $0x190] sm:$0xff]
      %v679 = vld [vmem:[%s224 + $0x198] sm:$0xff]
      %v680 = vld [vmem:[%s224 + $0x1a0] sm:$0xff]
      %v681 = vld [vmem:[%s224 + $0x1a8] sm:$0xff]
      %v682 = vld [vmem:[%s224 + $0x1b0] sm:$0xff]
      %v683 = vld [vmem:[%s224 + $0x1b8] sm:$0xff]
      %v684 = vld [vmem:[%s224 + $0x1c0] sm:$0xff]
      %v685 = vld [vmem:[%s224 + $0x1c8] sm:$0xff]
      %v686 = vld [vmem:[%s224 + $0x1d0] sm:$0xff]
      %v687 = vld [vmem:[%s224 + $0x1d8] sm:$0xff]
      %v688 = vld [vmem:[%s224 + $0x1e0] sm:$0xff]
      %v689 = vld [vmem:[%s224 + $0x1e8] sm:$0xff]
      %v690 = vld [vmem:[%s224 + $0x1f0] sm:$0xff]
      %v691 = vld [vmem:[%s224 + $0x1f8] sm:$0xff]
      %v692 = vld [vmem:[%s224 + $0x200] sm:$0xff]
      %v693 = vld [vmem:[%s224 + $0x208] sm:$0xff]
      %v694 = vld [vmem:[%s224 + $0x210] sm:$0xff]
      %v695 = vld [vmem:[%s224 + $0x218] sm:$0xff]
      %v696 = vld [vmem:[%s224 + $0x220] sm:$0xff]
      %v697 = vld [vmem:[%s224 + $0x228] sm:$0xff]
      %v698 = vld [vmem:[%s224 + $0x230] sm:$0xff]
      %v699 = vld [vmem:[%s224 + $0x238] sm:$0xff]
      %v700 = vld [vmem:[%s224 + $0x240] sm:$0xff]
      %v701 = vld [vmem:[%s224 + $0x248] sm:$0xff]
      %v702 = vld [vmem:[%s224 + $0x250] sm:$0xff]
      %v703 = vld [vmem:[%s224 + $0x258] sm:$0xff]
      %v704 = vld [vmem:[%s224 + $0x260] sm:$0xff]
      %v705 = vld [vmem:[%s224 + $0x268] sm:$0xff]
      %v706 = vld [vmem:[%s224 + $0x270] sm:$0xff]
      %v707 = vld [vmem:[%s224 + $0x278] sm:$0xff]
      %v708 = vld [vmem:[%s224 + $0x280] sm:$0xff]
      %v709 = vld [vmem:[%s224 + $0x288] sm:$0xff]
      %v710 = vld [vmem:[%s224 + $0x290] sm:$0xff]
      %v711 = vld [vmem:[%s224 + $0x298] sm:$0xff]
      %v712 = vld [vmem:[%s224 + $0x2a0] sm:$0xff]
      %v713 = vld [vmem:[%s224 + $0x2a8] sm:$0xff]
      %v714 = vld [vmem:[%s224 + $0x2b0] sm:$0xff]
      %v715 = vld [vmem:[%s224 + $0x2b8] sm:$0xff]
      %v716 = vld [vmem:[%s224 + $0x2c0] sm:$0xff]
      %v717 = vld [vmem:[%s224 + $0x2c8] sm:$0xff]
      %v718 = vld [vmem:[%s224 + $0x2d0] sm:$0xff]
      %v719 = vld [vmem:[%s224 + $0x2d8] sm:$0xff]
      %v720 = vld [vmem:[%s224 + $0x2e0] sm:$0xff]
      %v721 = vld [vmem:[%s224 + $0x2e8] sm:$0xff]
      %v722 = vld [vmem:[%s224 + $0x2f0] sm:$0xff]
      %v723 = vld [vmem:[%s224 + $0x2f8] sm:$0xff]
      %v724 = vld [vmem:[%s224 + $0x300] sm:$0xff]
      %v725 = vld [vmem:[%s224 + $0x308] sm:$0xff]
      %v726 = vld [vmem:[%s224 + $0x310] sm:$0xff]
      %v727 = vld [vmem:[%s224 + $0x318] sm:$0xff]
      %v728 = vld [vmem:[%s224 + $0x320] sm:$0xff]
      %v729 = vld [vmem:[%s224 + $0x328] sm:$0xff]
      %v730 = vld [vmem:[%s224 + $0x330] sm:$0xff]
      %v731 = vld [vmem:[%s224 + $0x338] sm:$0xff]
      %v732 = vld [vmem:[%s224 + $0x340] sm:$0xff]
      %v733 = vld [vmem:[%s224 + $0x348] sm:$0xff]
      %v734 = vld [vmem:[%s224 + $0x350] sm:$0xff]
      %v735 = vld [vmem:[%s224 + $0x358] sm:$0xff]
      %v736 = vld [vmem:[%s224 + $0x360] sm:$0xff]
      %v737 = vld [vmem:[%s224 + $0x368] sm:$0xff]
      %v738 = vld [vmem:[%s224 + $0x370] sm:$0xff]
      %v739 = vld [vmem:[%s224 + $0x378] sm:$0xff]
      %v740 = vld [vmem:[%s224 + $0x380] sm:$0xff]
      %v741 = vld [vmem:[%s224 + $0x388] sm:$0xff]
      %v742 = vld [vmem:[%s224 + $0x390] sm:$0xff]
      %v743 = vld [vmem:[%s224 + $0x398] sm:$0xff]
      %v744 = vld [vmem:[%s224 + $0x3a0] sm:$0xff]
      %v745 = vld [vmem:[%s224 + $0x3a8] sm:$0xff]
      %v746 = vld [vmem:[%s224 + $0x3b0] sm:$0xff]
      %v747 = vld [vmem:[%s224 + $0x3b8] sm:$0xff]
      %v748 = vld [vmem:[%s224 + $0x3c0] sm:$0xff]
      %v749 = vld [vmem:[%s224 + $0x3c8] sm:$0xff]
      %v750 = vld [vmem:[%s224 + $0x3d0] sm:$0xff]
      %v751 = vld [vmem:[%s224 + $0x3d8] sm:$0xff]
      %v752 = vld [vmem:[%s224 + $0x3e0] sm:$0xff]
      %v753 = vld [vmem:[%s224 + $0x3e8] sm:$0xff]
      %v754 = vld [vmem:[%s224 + $0x3f0] sm:$0xff]
      %v755 = vld [vmem:[%s224 + $0x3f8] sm:$0xff]
      %v756 = vld [vmem:[%s224 + $0x400] sm:$0xff]
      %v757 = vld [vmem:[%s224 + $0x408] sm:$0xff]
      %v758 = vld [vmem:[%s224 + $0x410] sm:$0xff]
      %v759 = vld [vmem:[%s224 + $0x418] sm:$0xff]
      %v760 = vld [vmem:[%s224 + $0x420] sm:$0xff]
      %v761 = vld [vmem:[%s224 + $0x428] sm:$0xff]
      %v762 = vld [vmem:[%s224 + $0x430] sm:$0xff]
      %v763 = vld [vmem:[%s224 + $0x438] sm:$0xff]
      %v764 = vld [vmem:[%s224 + $0x440] sm:$0xff]
      %v765 = vld [vmem:[%s224 + $0x448] sm:$0xff]
      %v766 = vld [vmem:[%s224 + $0x450] sm:$0xff]
      %v767 = vld [vmem:[%s224 + $0x458] sm:$0xff]
      %v768 = vld [vmem:[%s224 + $0x460] sm:$0xff]
      %v769 = vld [vmem:[%s224 + $0x468] sm:$0xff]
      %v770 = vld [vmem:[%s224 + $0x470] sm:$0xff]
      %v771 = vld [vmem:[%s224 + $0x478] sm:$0xff]
      %v772 = vld [vmem:[%s224 + $0x480] sm:$0xff]
      %v773 = vld [vmem:[%s224 + $0x488] sm:$0xff]
      %v774 = vld [vmem:[%s224 + $0x490] sm:$0xff]
      %v775 = vld [vmem:[%s224 + $0x498] sm:$0xff]
      %v776 = vld [vmem:[%s224 + $0x4a0] sm:$0xff]
      %v777 = vld [vmem:[%s224 + $0x4a8] sm:$0xff]
      %v778 = vld [vmem:[%s224 + $0x4b0] sm:$0xff]
      %v779 = vld [vmem:[%s224 + $0x4b8] sm:$0xff]
      %v780 = vld [vmem:[%s224 + $0x4c0] sm:$0xff]
      %v781 = vld [vmem:[%s224 + $0x4c8] sm:$0xff]
      %v782 = vld [vmem:[%s224 + $0x4d0] sm:$0xff]
      %v783 = vld [vmem:[%s224 + $0x4d8] sm:$0xff]
      %v784 = vld [vmem:[%s224 + $0x4e0] sm:$0xff]
      %v785 = vld [vmem:[%s224 + $0x4e8] sm:$0xff]
      %v786 = vld [vmem:[%s224 + $0x4f0] sm:$0xff]
      %v787 = vld [vmem:[%s224 + $0x4f8] sm:$0xff]
      %v788 = vld [vmem:[%s224 + $0x500] sm:$0xff]
      %v789 = vld [vmem:[%s224 + $0x508] sm:$0xff]
      %v790 = vld [vmem:[%s224 + $0x510] sm:$0xff]
      %v791 = vld [vmem:[%s224 + $0x518] sm:$0xff]
      %v792 = vld [vmem:[%s224 + $0x520] sm:$0xff]
      %v793 = vld [vmem:[%s224 + $0x528] sm:$0xff]
      %v794 = vld [vmem:[%s224 + $0x530] sm:$0xff]
      %v795 = vld [vmem:[%s224 + $0x538] sm:$0xff]
      %v796 = vld [vmem:[%s224 + $0x540] sm:$0xff]
      %v797 = vld [vmem:[%s224 + $0x548] sm:$0xff]
      %v798 = vld [vmem:[%s224 + $0x550] sm:$0xff]
      %v799 = vld [vmem:[%s224 + $0x558] sm:$0xff]
      %v800 = vld [vmem:[%s229] sm:$0x3]
      %v802 = vlaneseq
      %v803 = vshrl.u32 %v802, 7
      %v804 = vsub.s32 0, %v803
      %v805 = vrot.slane %v800, %v804
      %v806 = vlaneseq
      %v807 = vshrl.u32 %v806, 7
      %v808 = vsub.s32 1, %v807
      %v809 = vrot.slane %v800, %v808
      %v1196 = vunpack.c.l.b16 %v244
      %v1197 = vunpack.c.h.b16 %v244
      %v1198 = vunpack.c.l.b16 %v245
      %v1199 = vunpack.c.h.b16 %v245
      %v1200 = vunpack.c.l.b16 %v246
      %v1201 = vunpack.c.h.b16 %v246
      %v1202 = vunpack.c.l.b16 %v247
      %v1203 = vunpack.c.h.b16 %v247
      %v1204 = vunpack.c.l.b16 %v248
      %v1205 = vunpack.c.h.b16 %v248
      %v1206 = vunpack.c.l.b16 %v249
      %v1207 = vunpack.c.l.b16 %v250
      %v1208 = vunpack.c.h.b16 %v250
      %v1209 = vunpack.c.l.b16 %v251
      %v1210 = vunpack.c.h.b16 %v251
      %v1211 = vunpack.c.l.b16 %v252
      %v1212 = vunpack.c.h.b16 %v252
      %v1213 = vunpack.c.l.b16 %v253
      %v1214 = vunpack.c.h.b16 %v253
      %v1215 = vunpack.c.l.b16 %v254
      %v1216 = vunpack.c.h.b16 %v254
      %v1217 = vunpack.c.l.b16 %v255
      %v1218 = vunpack.c.l.b16 %v256
      %v1219 = vunpack.c.h.b16 %v256
      %v1220 = vunpack.c.l.b16 %v257
      %v1221 = vunpack.c.h.b16 %v257
      %v1222 = vunpack.c.l.b16 %v258
      %v1223 = vunpack.c.h.b16 %v258
      %v1224 = vunpack.c.l.b16 %v259
      %v1225 = vunpack.c.h.b16 %v259
      %v1226 = vunpack.c.l.b16 %v260
      %v1227 = vunpack.c.h.b16 %v260
      %v1228 = vunpack.c.l.b16 %v261
      %v1229 = vunpack.c.l.b16 %v262
      %v1230 = vunpack.c.h.b16 %v262
      %v1231 = vunpack.c.l.b16 %v263
      %v1232 = vunpack.c.h.b16 %v263
      %v1233 = vunpack.c.l.b16 %v264
      %v1234 = vunpack.c.h.b16 %v264
      %v1235 = vunpack.c.l.b16 %v265
      %v1236 = vunpack.c.h.b16 %v265
      %v1237 = vunpack.c.l.b16 %v266
      %v1238 = vunpack.c.h.b16 %v266
      %v1239 = vunpack.c.l.b16 %v267
      %v1240 = vunpack.c.l.b16 %v268
      %v1241 = vunpack.c.h.b16 %v268
      %v1242 = vunpack.c.l.b16 %v269
      %v1243 = vunpack.c.h.b16 %v269
      %v1244 = vunpack.c.l.b16 %v270
      %v1245 = vunpack.c.h.b16 %v270
      %v1246 = vunpack.c.l.b16 %v271
      %v1247 = vunpack.c.h.b16 %v271
      %v1248 = vunpack.c.l.b16 %v272
      %v1249 = vunpack.c.h.b16 %v272
      %v1250 = vunpack.c.l.b16 %v273
      %v1251 = vunpack.c.l.b16 %v274
      %v1252 = vunpack.c.h.b16 %v274
      %v1253 = vunpack.c.l.b16 %v275
      %v1254 = vunpack.c.h.b16 %v275
      %v1255 = vunpack.c.l.b16 %v276
      %v1256 = vunpack.c.h.b16 %v276
      %v1257 = vunpack.c.l.b16 %v277
      %v1258 = vunpack.c.h.b16 %v277
      %v1259 = vunpack.c.l.b16 %v278
      %v1260 = vunpack.c.h.b16 %v278
      %v1261 = vunpack.c.l.b16 %v279
      %v1262 = vunpack.c.l.b16 %v280
      %v1263 = vunpack.c.h.b16 %v280
      %v1264 = vunpack.c.l.b16 %v281
      %v1265 = vunpack.c.h.b16 %v281
      %v1266 = vunpack.c.l.b16 %v282
      %v1267 = vunpack.c.h.b16 %v282
      %v1268 = vunpack.c.l.b16 %v283
      %v1269 = vunpack.c.h.b16 %v283
      %v1270 = vunpack.c.l.b16 %v284
      %v1271 = vunpack.c.h.b16 %v284
      %v1272 = vunpack.c.l.b16 %v285
      %v1273 = vunpack.c.l.b16 %v286
      %v1274 = vunpack.c.h.b16 %v286
      %v1275 = vunpack.c.l.b16 %v287
      %v1276 = vunpack.c.h.b16 %v287
      %v1277 = vunpack.c.l.b16 %v288
      %v1278 = vunpack.c.h.b16 %v288
      %v1279 = vunpack.c.l.b16 %v289
      %v1280 = vunpack.c.h.b16 %v289
      %v1281 = vunpack.c.l.b16 %v290
      %v1282 = vunpack.c.h.b16 %v290
      %v1283 = vunpack.c.l.b16 %v291
      %v1284 = vunpack.c.l.b16 %v292
      %v1285 = vunpack.c.h.b16 %v292
      %v1286 = vunpack.c.l.b16 %v293
      %v1287 = vunpack.c.h.b16 %v293
      %v1288 = vunpack.c.l.b16 %v294
      %v1289 = vunpack.c.h.b16 %v294
      %v1290 = vunpack.c.l.b16 %v295
      %v1291 = vunpack.c.h.b16 %v295
      %v1292 = vunpack.c.l.b16 %v296
      %v1293 = vunpack.c.h.b16 %v296
      %v1294 = vunpack.c.l.b16 %v297
      %v1295 = vunpack.c.l.b16 %v298
      %v1296 = vunpack.c.h.b16 %v298
      %v1297 = vunpack.c.l.b16 %v299
      %v1298 = vunpack.c.h.b16 %v299
      %v1299 = vunpack.c.l.b16 %v300
      %v1300 = vunpack.c.h.b16 %v300
      %v1301 = vunpack.c.l.b16 %v301
      %v1302 = vunpack.c.h.b16 %v301
      %v1303 = vunpack.c.l.b16 %v302
      %v1304 = vunpack.c.h.b16 %v302
      %v1305 = vunpack.c.l.b16 %v303
      %v1306 = vunpack.c.l.b16 %v304
      %v1307 = vunpack.c.h.b16 %v304
      %v1308 = vunpack.c.l.b16 %v305
      %v1309 = vunpack.c.h.b16 %v305
      %v1310 = vunpack.c.l.b16 %v306
      %v1311 = vunpack.c.h.b16 %v306
      %v1312 = vunpack.c.l.b16 %v307
      %v1313 = vunpack.c.h.b16 %v307
      %v1314 = vunpack.c.l.b16 %v308
      %v1315 = vunpack.c.h.b16 %v308
      %v1316 = vunpack.c.l.b16 %v309
      %v1317 = vunpack.c.l.b16 %v310
      %v1318 = vunpack.c.h.b16 %v310
      %v1319 = vunpack.c.l.b16 %v311
      %v1320 = vunpack.c.h.b16 %v311
      %v1321 = vunpack.c.l.b16 %v312
      %v1322 = vunpack.c.h.b16 %v312
      %v1323 = vunpack.c.l.b16 %v313
      %v1324 = vunpack.c.h.b16 %v313
      %v1325 = vunpack.c.l.b16 %v314
      %v1326 = vunpack.c.h.b16 %v314
      %v1327 = vunpack.c.l.b16 %v315
      %v1328 = vunpack.c.l.b16 %v316
      %v1329 = vunpack.c.h.b16 %v316
      %v1330 = vunpack.c.l.b16 %v317
      %v1331 = vunpack.c.h.b16 %v317
      %v1332 = vunpack.c.l.b16 %v318
      %v1333 = vunpack.c.h.b16 %v318
      %v1334 = vunpack.c.l.b16 %v319
      %v1335 = vunpack.c.h.b16 %v319
      %v1336 = vunpack.c.l.b16 %v320
      %v1337 = vunpack.c.h.b16 %v320
      %v1338 = vunpack.c.l.b16 %v321
      %v1339 = vunpack.c.l.b16 %v322
      %v1340 = vunpack.c.h.b16 %v322
      %v1341 = vunpack.c.l.b16 %v323
      %v1342 = vunpack.c.h.b16 %v323
      %v1343 = vunpack.c.l.b16 %v324
      %v1344 = vunpack.c.h.b16 %v324
      %v1345 = vunpack.c.l.b16 %v325
      %v1346 = vunpack.c.h.b16 %v325
      %v1347 = vunpack.c.l.b16 %v326
      %v1348 = vunpack.c.h.b16 %v326
      %v1349 = vunpack.c.l.b16 %v327
      %v1350 = vunpack.c.l.b16 %v328
      %v1351 = vunpack.c.h.b16 %v328
      %v1352 = vunpack.c.l.b16 %v329
      %v1353 = vunpack.c.h.b16 %v329
      %v1354 = vunpack.c.l.b16 %v330
      %v1355 = vunpack.c.h.b16 %v330
      %v1356 = vunpack.c.l.b16 %v331
      %v1357 = vunpack.c.h.b16 %v331
      %v1358 = vunpack.c.l.b16 %v332
      %v1359 = vunpack.c.h.b16 %v332
      %v1360 = vunpack.c.l.b16 %v333
      %v1361 = vunpack.c.l.b16 %v334
      %v1362 = vunpack.c.h.b16 %v334
      %v1363 = vunpack.c.l.b16 %v335
      %v1364 = vunpack.c.h.b16 %v335
      %v1365 = vunpack.c.l.b16 %v336
      %v1366 = vunpack.c.h.b16 %v336
      %v1367 = vunpack.c.l.b16 %v337
      %v1368 = vunpack.c.h.b16 %v337
      %v1369 = vunpack.c.l.b16 %v338
      %v1370 = vunpack.c.h.b16 %v338
      %v1371 = vunpack.c.l.b16 %v339
      %v1372 = vunpack.c.l.b16 %v340
      %v1373 = vunpack.c.h.b16 %v340
      %v1374 = vunpack.c.l.b16 %v341
      %v1375 = vunpack.c.h.b16 %v341
      %v1376 = vunpack.c.l.b16 %v342
      %v1377 = vunpack.c.h.b16 %v342
      %v1378 = vunpack.c.l.b16 %v343
      %v1379 = vunpack.c.h.b16 %v343
      %v1380 = vunpack.c.l.b16 %v344
      %v1381 = vunpack.c.h.b16 %v344
      %v1382 = vunpack.c.l.b16 %v345
      %v1383 = vunpack.c.l.b16 %v346
      %v1384 = vunpack.c.h.b16 %v346
      %v1385 = vunpack.c.l.b16 %v347
      %v1386 = vunpack.c.h.b16 %v347
      %v1387 = vunpack.c.l.b16 %v348
      %v1388 = vunpack.c.h.b16 %v348
      %v1389 = vunpack.c.l.b16 %v349
      %v1390 = vunpack.c.h.b16 %v349
      %v1391 = vunpack.c.l.b16 %v350
      %v1392 = vunpack.c.h.b16 %v350
      %v1393 = vunpack.c.l.b16 %v351
      %v1394 = vunpack.c.l.b16 %v352
      %v1395 = vunpack.c.h.b16 %v352
      %v1396 = vunpack.c.l.b16 %v353
      %v1397 = vunpack.c.h.b16 %v353
      %v1398 = vunpack.c.l.b16 %v354
      %v1399 = vunpack.c.h.b16 %v354
      %v1400 = vunpack.c.l.b16 %v355
      %v1401 = vunpack.c.h.b16 %v355
      %v1402 = vunpack.c.l.b16 %v356
      %v1403 = vunpack.c.h.b16 %v356
      %v1404 = vunpack.c.l.b16 %v357
      %v1405 = vunpack.c.l.b16 %v358
      %v1406 = vunpack.c.h.b16 %v358
      %v1407 = vunpack.c.l.b16 %v359
      %v1408 = vunpack.c.h.b16 %v359
      %v1409 = vunpack.c.l.b16 %v360
      %v1410 = vunpack.c.h.b16 %v360
      %v1411 = vunpack.c.l.b16 %v361
      %v1412 = vunpack.c.h.b16 %v361
      %v1413 = vunpack.c.l.b16 %v362
      %v1414 = vunpack.c.h.b16 %v362
      %v1415 = vunpack.c.l.b16 %v363
      %v1416 = vunpack.c.l.b16 %v364
      %v1417 = vunpack.c.h.b16 %v364
      %v1418 = vunpack.c.l.b16 %v365
      %v1419 = vunpack.c.h.b16 %v365
      %v1420 = vunpack.c.l.b16 %v366
      %v1421 = vunpack.c.h.b16 %v366
      %v1422 = vunpack.c.l.b16 %v367
      %v1423 = vunpack.c.h.b16 %v367
      %v1424 = vunpack.c.l.b16 %v368
      %v1425 = vunpack.c.h.b16 %v368
      %v1426 = vunpack.c.l.b16 %v369
      %v1427 = vunpack.c.l.b16 %v370
      %v1428 = vunpack.c.h.b16 %v370
      %v1429 = vunpack.c.l.b16 %v371
      %v1430 = vunpack.c.h.b16 %v371
      %v1431 = vunpack.c.l.b16 %v372
      %v1432 = vunpack.c.h.b16 %v372
      %v1433 = vunpack.c.l.b16 %v373
      %v1434 = vunpack.c.h.b16 %v373
      %v1435 = vunpack.c.l.b16 %v374
      %v1436 = vunpack.c.h.b16 %v374
      %v1437 = vunpack.c.l.b16 %v375
      %v1438 = vunpack.c.l.b16 %v376
      %v1439 = vunpack.c.h.b16 %v376
      %v1440 = vunpack.c.l.b16 %v377
      %v1441 = vunpack.c.h.b16 %v377
      %v1442 = vunpack.c.l.b16 %v378
      %v1443 = vunpack.c.h.b16 %v378
      %v1444 = vunpack.c.l.b16 %v379
      %v1445 = vunpack.c.h.b16 %v379
      %v1446 = vunpack.c.l.b16 %v380
      %v1447 = vunpack.c.h.b16 %v380
      %v1448 = vunpack.c.l.b16 %v381
      %v1449 = vunpack.c.l.b16 %v382
      %v1450 = vunpack.c.h.b16 %v382
      %v1451 = vunpack.c.l.b16 %v383
      %v1452 = vunpack.c.h.b16 %v383
      %v1453 = vunpack.c.l.b16 %v384
      %v1454 = vunpack.c.h.b16 %v384
      %v1455 = vunpack.c.l.b16 %v385
      %v1456 = vunpack.c.h.b16 %v385
      %v1457 = vunpack.c.l.b16 %v386
      %v1458 = vunpack.c.h.b16 %v386
      %v1459 = vunpack.c.l.b16 %v387
      %v1460 = vunpack.c.l.b16 %v388
      %v1461 = vunpack.c.h.b16 %v388
      %v1462 = vunpack.c.l.b16 %v389
      %v1463 = vunpack.c.h.b16 %v389
      %v1464 = vunpack.c.l.b16 %v390
      %v1465 = vunpack.c.h.b16 %v390
      %v1466 = vunpack.c.l.b16 %v391
      %v1467 = vunpack.c.h.b16 %v391
      %v1468 = vunpack.c.l.b16 %v392
      %v1469 = vunpack.c.h.b16 %v392
      %v1470 = vunpack.c.l.b16 %v393
      %v1471 = vunpack.c.l.b16 %v394
      %v1472 = vunpack.c.h.b16 %v394
      %v1473 = vunpack.c.l.b16 %v395
      %v1474 = vunpack.c.h.b16 %v395
      %v1475 = vunpack.c.l.b16 %v396
      %v1476 = vunpack.c.h.b16 %v396
      %v1477 = vunpack.c.l.b16 %v397
      %v1478 = vunpack.c.h.b16 %v397
      %v1479 = vunpack.c.l.b16 %v398
      %v1480 = vunpack.c.h.b16 %v398
      %v1481 = vunpack.c.l.b16 %v399
      %v1482 = vunpack.c.l.b16 %v400
      %v1483 = vunpack.c.h.b16 %v400
      %v1484 = vunpack.c.l.b16 %v401
      %v1485 = vunpack.c.h.b16 %v401
      %v1486 = vunpack.c.l.b16 %v402
      %v1487 = vunpack.c.h.b16 %v402
      %v1488 = vunpack.c.l.b16 %v403
      %v1489 = vunpack.c.h.b16 %v403
      %v1490 = vunpack.c.l.b16 %v404
      %v1491 = vunpack.c.h.b16 %v404
      %v1492 = vunpack.c.l.b16 %v405
      %v1493 = vunpack.c.l.b16 %v406
      %v1494 = vunpack.c.h.b16 %v406
      %v1495 = vunpack.c.l.b16 %v407
      %v1496 = vunpack.c.h.b16 %v407
      %v1497 = vunpack.c.l.b16 %v408
      %v1498 = vunpack.c.h.b16 %v408
      %v1499 = vunpack.c.l.b16 %v409
      %v1500 = vunpack.c.h.b16 %v409
      %v1501 = vunpack.c.l.b16 %v410
      %v1502 = vunpack.c.h.b16 %v410
      %v1503 = vunpack.c.l.b16 %v411
      %v1504 = vunpack.c.l.b16 %v412
      %v1505 = vunpack.c.h.b16 %v412
      %v1506 = vunpack.c.l.b16 %v413
      %v1507 = vunpack.c.h.b16 %v413
      %v1508 = vunpack.c.l.b16 %v414
      %v1509 = vunpack.c.h.b16 %v414
      %v1510 = vunpack.c.l.b16 %v415
      %v1511 = vunpack.c.h.b16 %v415
      %v1512 = vunpack.c.l.b16 %v416
      %v1513 = vunpack.c.h.b16 %v416
      %v1514 = vunpack.c.l.b16 %v417
      %v1515 = vunpack.c.l.b16 %v418
      %v1516 = vunpack.c.h.b16 %v418
      %v1517 = vunpack.c.l.b16 %v419
      %v1518 = vunpack.c.h.b16 %v419
      %v1519 = vunpack.c.l.b16 %v420
      %v1520 = vunpack.c.h.b16 %v420
      %v1521 = vunpack.c.l.b16 %v421
      %v1522 = vunpack.c.h.b16 %v421
      %v1523 = vunpack.c.l.b16 %v422
      %v1524 = vunpack.c.h.b16 %v422
      %v1525 = vunpack.c.l.b16 %v423
      %v1526 = vunpack.c.l.b16 %v424
      %v1527 = vunpack.c.h.b16 %v424
      %v1528 = vunpack.c.l.b16 %v425
      %v1529 = vunpack.c.h.b16 %v425
      %v1530 = vunpack.c.l.b16 %v426
      %v1531 = vunpack.c.h.b16 %v426
      %v1532 = vunpack.c.l.b16 %v427
      %v1533 = vunpack.c.h.b16 %v427
      %v1534 = vunpack.c.l.b16 %v428
      %v1535 = vunpack.c.h.b16 %v428
      %v1536 = vunpack.c.l.b16 %v429
      %v1537 = vunpack.c.l.b16 %v430
      %v1538 = vunpack.c.h.b16 %v430
      %v1539 = vunpack.c.l.b16 %v431
      %v1540 = vunpack.c.h.b16 %v431
      %v1541 = vunpack.c.l.b16 %v432
      %v1542 = vunpack.c.h.b16 %v432
      %v1543 = vunpack.c.l.b16 %v433
      %v1544 = vunpack.c.h.b16 %v433
      %v1545 = vunpack.c.l.b16 %v434
      %v1546 = vunpack.c.h.b16 %v434
      %v1547 = vunpack.c.l.b16 %v435
      %v1548 = vunpack.c.l.b16 %v436
      %v1549 = vunpack.c.h.b16 %v436
      %v1550 = vunpack.c.l.b16 %v437
      %v1551 = vunpack.c.h.b16 %v437
      %v1552 = vunpack.c.l.b16 %v438
      %v1553 = vunpack.c.h.b16 %v438
      %v1554 = vunpack.c.l.b16 %v439
      %v1555 = vunpack.c.h.b16 %v439
      %v1556 = vunpack.c.l.b16 %v440
      %v1557 = vunpack.c.h.b16 %v440
      %v1558 = vunpack.c.l.b16 %v441
      %v1559 = vunpack.c.l.b16 %v442
      %v1560 = vunpack.c.h.b16 %v442
      %v1561 = vunpack.c.l.b16 %v443
      %v1562 = vunpack.c.h.b16 %v443
      %v1563 = vunpack.c.l.b16 %v444
      %v1564 = vunpack.c.h.b16 %v444
      %v1565 = vunpack.c.l.b16 %v445
      %v1566 = vunpack.c.h.b16 %v445
      %v1567 = vunpack.c.l.b16 %v446
      %v1568 = vunpack.c.h.b16 %v446
      %v1569 = vunpack.c.l.b16 %v447
      %v1570 = vunpack.c.l.b16 %v448
      %v1571 = vunpack.c.h.b16 %v448
      %v1572 = vunpack.c.l.b16 %v449
      %v1573 = vunpack.c.h.b16 %v449
      %v1574 = vunpack.c.l.b16 %v450
      %v1575 = vunpack.c.h.b16 %v450
      %v1576 = vunpack.c.l.b16 %v451
      %v1577 = vunpack.c.h.b16 %v451
      %v1578 = vunpack.c.l.b16 %v452
      %v1579 = vunpack.c.h.b16 %v452
      %v1580 = vunpack.c.l.b16 %v453
      %v1581 = vunpack.c.l.b16 %v454
      %v1582 = vunpack.c.h.b16 %v454
      %v1583 = vunpack.c.l.b16 %v455
      %v1584 = vunpack.c.h.b16 %v455
      %v1585 = vunpack.c.l.b16 %v456
      %v1586 = vunpack.c.h.b16 %v456
      %v1587 = vunpack.c.l.b16 %v457
      %v1588 = vunpack.c.h.b16 %v457
      %v1589 = vunpack.c.l.b16 %v458
      %v1590 = vunpack.c.h.b16 %v458
      %v1591 = vunpack.c.l.b16 %v459
      %v1592 = vunpack.c.l.b16 %v460
      %v1593 = vunpack.c.h.b16 %v460
      %v1594 = vunpack.c.l.b16 %v461
      %v1595 = vunpack.c.h.b16 %v461
      %v1596 = vunpack.c.l.b16 %v462
      %v1597 = vunpack.c.h.b16 %v462
      %v1598 = vunpack.c.l.b16 %v463
      %v1599 = vunpack.c.h.b16 %v463
      %v1600 = vunpack.c.l.b16 %v464
      %v1601 = vunpack.c.h.b16 %v464
      %v1602 = vunpack.c.l.b16 %v465
      %v1603 = vunpack.c.l.b16 %v466
      %v1604 = vunpack.c.h.b16 %v466
      %v1605 = vunpack.c.l.b16 %v467
      %v1606 = vunpack.c.h.b16 %v467
      %v1607 = vunpack.c.l.b16 %v468
      %v1608 = vunpack.c.h.b16 %v468
      %v1609 = vunpack.c.l.b16 %v469
      %v1610 = vunpack.c.h.b16 %v469
      %v1611 = vunpack.c.l.b16 %v470
      %v1612 = vunpack.c.h.b16 %v470
      %v1613 = vunpack.c.l.b16 %v471
      %v1614 = vunpack.c.l.b16 %v472
      %v1615 = vunpack.c.h.b16 %v472
      %v1616 = vunpack.c.l.b16 %v473
      %v1617 = vunpack.c.h.b16 %v473
      %v1618 = vunpack.c.l.b16 %v474
      %v1619 = vunpack.c.h.b16 %v474
      %v1620 = vunpack.c.l.b16 %v475
      %v1621 = vunpack.c.h.b16 %v475
      %v1622 = vunpack.c.l.b16 %v476
      %v1623 = vunpack.c.h.b16 %v476
      %v1624 = vunpack.c.l.b16 %v477
      %v1625 = vunpack.c.l.b16 %v478
      %v1626 = vunpack.c.h.b16 %v478
      %v1627 = vunpack.c.l.b16 %v479
      %v1628 = vunpack.c.h.b16 %v479
      %v1629 = vunpack.c.l.b16 %v480
      %v1630 = vunpack.c.h.b16 %v480
      %v1631 = vunpack.c.l.b16 %v481
      %v1632 = vunpack.c.h.b16 %v481
      %v1633 = vunpack.c.l.b16 %v482
      %v1634 = vunpack.c.h.b16 %v482
      %v1635 = vunpack.c.l.b16 %v483
      %v1636 = vunpack.c.l.b16 %v484
      %v1637 = vunpack.c.h.b16 %v484
      %v1638 = vunpack.c.l.b16 %v485
      %v1639 = vunpack.c.h.b16 %v485
      %v1640 = vunpack.c.l.b16 %v486
      %v1641 = vunpack.c.h.b16 %v486
      %v1642 = vunpack.c.l.b16 %v487
      %v1643 = vunpack.c.h.b16 %v487
      %v1644 = vunpack.c.l.b16 %v488
      %v1645 = vunpack.c.h.b16 %v488
      %v1646 = vunpack.c.l.b16 %v489
      %v1647 = vunpack.c.l.b16 %v490
      %v1648 = vunpack.c.h.b16 %v490
      %v1649 = vunpack.c.l.b16 %v491
      %v1650 = vunpack.c.h.b16 %v491
      %v1651 = vunpack.c.l.b16 %v492
      %v1652 = vunpack.c.h.b16 %v492
      %v1653 = vunpack.c.l.b16 %v493
      %v1654 = vunpack.c.h.b16 %v493
      %v1655 = vunpack.c.l.b16 %v494
      %v1656 = vunpack.c.h.b16 %v494
      %v1657 = vunpack.c.l.b16 %v495
      %v1658 = vunpack.c.l.b16 %v496
      %v1659 = vunpack.c.h.b16 %v496
      %v1660 = vunpack.c.l.b16 %v497
      %v1661 = vunpack.c.h.b16 %v497
      %v1662 = vunpack.c.l.b16 %v498
      %v1663 = vunpack.c.h.b16 %v498
      %v1664 = vunpack.c.l.b16 %v499
      %v1665 = vunpack.c.h.b16 %v499
      %v1666 = vunpack.c.l.b16 %v500
      %v1667 = vunpack.c.h.b16 %v500
      %v1668 = vunpack.c.l.b16 %v501
      %v1669 = vunpack.c.l.b16 %v502
      %v1670 = vunpack.c.h.b16 %v502
      %v1671 = vunpack.c.l.b16 %v503
      %v1672 = vunpack.c.h.b16 %v503
      %v1673 = vunpack.c.l.b16 %v504
      %v1674 = vunpack.c.h.b16 %v504
      %v1675 = vunpack.c.l.b16 %v505
      %v1676 = vunpack.c.h.b16 %v505
      %v1677 = vunpack.c.l.b16 %v506
      %v1678 = vunpack.c.h.b16 %v506
      %v1679 = vunpack.c.l.b16 %v507
      %v1680 = vunpack.c.l.b16 %v508
      %v1681 = vunpack.c.h.b16 %v508
      %v1682 = vunpack.c.l.b16 %v509
      %v1683 = vunpack.c.h.b16 %v509
      %v1684 = vunpack.c.l.b16 %v510
      %v1685 = vunpack.c.h.b16 %v510
      %v1686 = vunpack.c.l.b16 %v511
      %v1687 = vunpack.c.h.b16 %v511
      %v1688 = vunpack.c.l.b16 %v512
      %v1689 = vunpack.c.h.b16 %v512
      %v1690 = vunpack.c.l.b16 %v513
      %v1691 = vunpack.c.l.b16 %v514
      %v1692 = vunpack.c.h.b16 %v514
      %v1693 = vunpack.c.l.b16 %v515
      %v1694 = vunpack.c.h.b16 %v515
      %v1695 = vunpack.c.l.b16 %v516
      %v1696 = vunpack.c.h.b16 %v516
      %v1697 = vunpack.c.l.b16 %v517
      %v1698 = vunpack.c.h.b16 %v517
      %v1699 = vunpack.c.l.b16 %v518
      %v1700 = vunpack.c.h.b16 %v518
      %v1701 = vunpack.c.l.b16 %v519
      %v1702 = vunpack.c.l.b16 %v520
      %v1703 = vunpack.c.h.b16 %v520
      %v1704 = vunpack.c.l.b16 %v521
      %v1705 = vunpack.c.h.b16 %v521
      %v1706 = vunpack.c.l.b16 %v522
      %v1707 = vunpack.c.h.b16 %v522
      %v1708 = vunpack.c.l.b16 %v523
      %v1709 = vunpack.c.h.b16 %v523
      %v1710 = vunpack.c.l.b16 %v524
      %v1711 = vunpack.c.h.b16 %v524
      %v1712 = vunpack.c.l.b16 %v525
      %v1713 = vunpack.c.l.b16 %v526
      %v1714 = vunpack.c.h.b16 %v526
      %v1715 = vunpack.c.l.b16 %v527
      %v1716 = vunpack.c.h.b16 %v527
      %v1717 = vunpack.c.l.b16 %v528
      %v1718 = vunpack.c.h.b16 %v528
      %v1719 = vunpack.c.l.b16 %v529
      %v1720 = vunpack.c.h.b16 %v529
      %v1721 = vunpack.c.l.b16 %v530
      %v1722 = vunpack.c.h.b16 %v530
      %v1723 = vunpack.c.l.b16 %v531
      %v1724 = vunpack.c.l.b16 %v532
      %v1725 = vunpack.c.h.b16 %v532
      %v1726 = vunpack.c.l.b16 %v533
      %v1727 = vunpack.c.h.b16 %v533
      %v1728 = vunpack.c.l.b16 %v534
      %v1729 = vunpack.c.h.b16 %v534
      %v1730 = vunpack.c.l.b16 %v535
      %v1731 = vunpack.c.h.b16 %v535
      %v1732 = vunpack.c.l.b16 %v536
      %v1733 = vunpack.c.h.b16 %v536
      %v1734 = vunpack.c.l.b16 %v537
      %v1735 = vunpack.c.l.b16 %v538
      %v1736 = vunpack.c.h.b16 %v538
      %v1737 = vunpack.c.l.b16 %v539
      %v1738 = vunpack.c.h.b16 %v539
      %v1739 = vunpack.c.l.b16 %v540
      %v1740 = vunpack.c.h.b16 %v540
      %v1741 = vunpack.c.l.b16 %v541
      %v1742 = vunpack.c.h.b16 %v541
      %v1743 = vunpack.c.l.b16 %v542
      %v1744 = vunpack.c.h.b16 %v542
      %v1745 = vunpack.c.l.b16 %v543
      %v1746 = vunpack.c.l.b16 %v544
      %v1747 = vunpack.c.h.b16 %v544
      %v1748 = vunpack.c.l.b16 %v545
      %v1749 = vunpack.c.h.b16 %v545
      %v1750 = vunpack.c.l.b16 %v546
      %v1751 = vunpack.c.h.b16 %v546
      %v1752 = vunpack.c.l.b16 %v547
      %v1753 = vunpack.c.h.b16 %v547
      %v1754 = vunpack.c.l.b16 %v548
      %v1755 = vunpack.c.h.b16 %v548
      %v1756 = vunpack.c.l.b16 %v549
      %v1757 = vunpack.c.l.b16 %v550
      %v1758 = vunpack.c.h.b16 %v550
      %v1759 = vunpack.c.l.b16 %v551
      %v1760 = vunpack.c.h.b16 %v551
      %v1761 = vunpack.c.l.b16 %v552
      %v1762 = vunpack.c.h.b16 %v552
      %v1763 = vunpack.c.l.b16 %v553
      %v1764 = vunpack.c.h.b16 %v553
      %v1765 = vunpack.c.l.b16 %v554
      %v1766 = vunpack.c.h.b16 %v554
      %v1767 = vunpack.c.l.b16 %v555
      %v1768 = vunpack.c.l.b16 %v556
      %v1769 = vunpack.c.h.b16 %v556
      %v1770 = vunpack.c.l.b16 %v557
      %v1771 = vunpack.c.h.b16 %v557
      %v1772 = vunpack.c.l.b16 %v558
      %v1773 = vunpack.c.h.b16 %v558
      %v1774 = vunpack.c.l.b16 %v559
      %v1775 = vunpack.c.h.b16 %v559
      %v1776 = vunpack.c.l.b16 %v560
      %v1777 = vunpack.c.h.b16 %v560
      %v1778 = vunpack.c.l.b16 %v561
      %v1779 = vunpack.c.l.b16 %v562
      %v1780 = vunpack.c.h.b16 %v562
      %v1781 = vunpack.c.l.b16 %v563
      %v1782 = vunpack.c.h.b16 %v563
      %v1783 = vunpack.c.l.b16 %v564
      %v1784 = vunpack.c.h.b16 %v564
      %v1785 = vunpack.c.l.b16 %v565
      %v1786 = vunpack.c.h.b16 %v565
      %v1787 = vunpack.c.l.b16 %v566
      %v1788 = vunpack.c.h.b16 %v566
      %v1789 = vunpack.c.l.b16 %v567
      %v1790 = vunpack.c.l.b16 %v568
      %v1791 = vunpack.c.h.b16 %v568
      %v1792 = vunpack.c.l.b16 %v569
      %v1793 = vunpack.c.h.b16 %v569
      %v1794 = vunpack.c.l.b16 %v570
      %v1795 = vunpack.c.h.b16 %v570
      %v1796 = vunpack.c.l.b16 %v571
      %v1797 = vunpack.c.h.b16 %v571
      %v1798 = vunpack.c.l.b16 %v572
      %v1799 = vunpack.c.h.b16 %v572
      %v1800 = vunpack.c.l.b16 %v573
      %v1801 = vunpack.c.l.b16 %v574
      %v1802 = vunpack.c.h.b16 %v574
      %v1803 = vunpack.c.l.b16 %v575
      %v1804 = vunpack.c.h.b16 %v575
      %v1805 = vunpack.c.l.b16 %v576
      %v1806 = vunpack.c.h.b16 %v576
      %v1807 = vunpack.c.l.b16 %v577
      %v1808 = vunpack.c.h.b16 %v577
      %v1809 = vunpack.c.l.b16 %v578
      %v1810 = vunpack.c.h.b16 %v578
      %v1811 = vunpack.c.l.b16 %v579
      %v1812 = vunpack.c.l.b16 %v580
      %v1813 = vunpack.c.h.b16 %v580
      %v1814 = vunpack.c.l.b16 %v581
      %v1815 = vunpack.c.h.b16 %v581
      %v1816 = vunpack.c.l.b16 %v582
      %v1817 = vunpack.c.h.b16 %v582
      %v1818 = vunpack.c.l.b16 %v583
      %v1819 = vunpack.c.h.b16 %v583
      %v1820 = vunpack.c.l.b16 %v584
      %v1821 = vunpack.c.h.b16 %v584
      %v1822 = vunpack.c.l.b16 %v585
      %v1823 = vunpack.c.l.b16 %v586
      %v1824 = vunpack.c.h.b16 %v586
      %v1825 = vunpack.c.l.b16 %v587
      %v1826 = vunpack.c.h.b16 %v587
      %v1827 = vunpack.c.l.b16 %v588
      %v1828 = vunpack.c.h.b16 %v588
      %v1829 = vunpack.c.l.b16 %v589
      %v1830 = vunpack.c.h.b16 %v589
      %v1831 = vunpack.c.l.b16 %v590
      %v1832 = vunpack.c.h.b16 %v590
      %v1833 = vunpack.c.l.b16 %v591
      %v1834 = vunpack.c.l.b16 %v592
      %v1835 = vunpack.c.h.b16 %v592
      %v1836 = vunpack.c.l.b16 %v593
      %v1837 = vunpack.c.h.b16 %v593
      %v1838 = vunpack.c.l.b16 %v594
      %v1839 = vunpack.c.h.b16 %v594
      %v1840 = vunpack.c.l.b16 %v595
      %v1841 = vunpack.c.h.b16 %v595
      %v1842 = vunpack.c.l.b16 %v596
      %v1843 = vunpack.c.h.b16 %v596
      %v1844 = vunpack.c.l.b16 %v597
      %v1845 = vunpack.c.l.b16 %v598
      %v1846 = vunpack.c.h.b16 %v598
      %v1847 = vunpack.c.l.b16 %v599
      %v1848 = vunpack.c.h.b16 %v599
      %v1849 = vunpack.c.l.b16 %v600
      %v1850 = vunpack.c.h.b16 %v600
      %v1851 = vunpack.c.l.b16 %v601
      %v1852 = vunpack.c.h.b16 %v601
      %v1853 = vunpack.c.l.b16 %v602
      %v1854 = vunpack.c.h.b16 %v602
      %v1855 = vunpack.c.l.b16 %v603
      %v1856 = vunpack.c.l.b16 %v604
      %v1857 = vunpack.c.h.b16 %v604
      %v1858 = vunpack.c.l.b16 %v605
      %v1859 = vunpack.c.h.b16 %v605
      %v1860 = vunpack.c.l.b16 %v606
      %v1861 = vunpack.c.h.b16 %v606
      %v1862 = vunpack.c.l.b16 %v607
      %v1863 = vunpack.c.h.b16 %v607
      %v1864 = vunpack.c.l.b16 %v608
      %v1865 = vunpack.c.h.b16 %v608
      %v1866 = vunpack.c.l.b16 %v609
      %v1867 = vunpack.c.l.b16 %v610
      %v1868 = vunpack.c.h.b16 %v610
      %v1869 = vunpack.c.l.b16 %v611
      %v1870 = vunpack.c.h.b16 %v611
      %v1871 = vunpack.c.l.b16 %v612
      %v1872 = vunpack.c.h.b16 %v612
      %v1873 = vunpack.c.l.b16 %v613
      %v1874 = vunpack.c.h.b16 %v613
      %v1875 = vunpack.c.l.b16 %v614
      %v1876 = vunpack.c.h.b16 %v614
      %v1877 = vunpack.c.l.b16 %v615
      %v1878 = vunpack.c.l.b16 %v616
      %v1879 = vunpack.c.h.b16 %v616
      %v1880 = vunpack.c.l.b16 %v617
      %v1881 = vunpack.c.h.b16 %v617
      %v1882 = vunpack.c.l.b16 %v618
      %v1883 = vunpack.c.h.b16 %v618
      %v1884 = vunpack.c.l.b16 %v619
      %v1885 = vunpack.c.h.b16 %v619
      %v1886 = vunpack.c.l.b16 %v620
      %v1887 = vunpack.c.h.b16 %v620
      %v1888 = vunpack.c.l.b16 %v621
      %v1889 = vunpack.c.l.b16 %v622
      %v1890 = vunpack.c.h.b16 %v622
      %v1891 = vunpack.c.l.b16 %v623
      %v1892 = vunpack.c.h.b16 %v623
      %v1893 = vunpack.c.l.b16 %v624
      %v1894 = vunpack.c.h.b16 %v624
      %v1895 = vunpack.c.l.b16 %v625
      %v1896 = vunpack.c.h.b16 %v625
      %v1897 = vunpack.c.l.b16 %v626
      %v1898 = vunpack.c.h.b16 %v626
      %v1899 = vunpack.c.l.b16 %v627
      %v1900 = vpack.c.b16 %v1207, %v1196
      %v1901 = vpack.c.b16 %v1208, %v1197
      %v1902 = vpack.c.b16 %v1209, %v1198
      %v1903 = vpack.c.b16 %v1210, %v1199
      %v1904 = vpack.c.b16 %v1211, %v1200
      %v1905 = vpack.c.b16 %v1212, %v1201
      %v1906 = vpack.c.b16 %v1213, %v1202
      %v1907 = vpack.c.b16 %v1214, %v1203
      %v1908 = vpack.c.b16 %v1215, %v1204
      %v1909 = vpack.c.b16 %v1216, %v1205
      %v1910 = vpack.c.b16 %v1217, %v1206
      %v1911 = vpack.c.b16 %v1229, %v1218
      %v1912 = vpack.c.b16 %v1230, %v1219
      %v1913 = vpack.c.b16 %v1231, %v1220
      %v1914 = vpack.c.b16 %v1232, %v1221
      %v1915 = vpack.c.b16 %v1233, %v1222
      %v1916 = vpack.c.b16 %v1234, %v1223
      %v1917 = vpack.c.b16 %v1235, %v1224
      %v1918 = vpack.c.b16 %v1236, %v1225
      %v1919 = vpack.c.b16 %v1237, %v1226
      %v1920 = vpack.c.b16 %v1238, %v1227
      %v1921 = vpack.c.b16 %v1239, %v1228
      %v1922 = vpack.c.b16 %v1251, %v1240
      %v1923 = vpack.c.b16 %v1252, %v1241
      %v1924 = vpack.c.b16 %v1253, %v1242
      %v1925 = vpack.c.b16 %v1254, %v1243
      %v1926 = vpack.c.b16 %v1255, %v1244
      %v1927 = vpack.c.b16 %v1256, %v1245
      %v1928 = vpack.c.b16 %v1257, %v1246
      %v1929 = vpack.c.b16 %v1258, %v1247
      %v1930 = vpack.c.b16 %v1259, %v1248
      %v1931 = vpack.c.b16 %v1260, %v1249
      %v1932 = vpack.c.b16 %v1261, %v1250
      %v1933 = vpack.c.b16 %v1273, %v1262
      %v1934 = vpack.c.b16 %v1274, %v1263
      %v1935 = vpack.c.b16 %v1275, %v1264
      %v1936 = vpack.c.b16 %v1276, %v1265
      %v1937 = vpack.c.b16 %v1277, %v1266
      %v1938 = vpack.c.b16 %v1278, %v1267
      %v1939 = vpack.c.b16 %v1279, %v1268
      %v1940 = vpack.c.b16 %v1280, %v1269
      %v1941 = vpack.c.b16 %v1281, %v1270
      %v1942 = vpack.c.b16 %v1282, %v1271
      %v1943 = vpack.c.b16 %v1283, %v1272
      %v1944 = vpack.c.b16 %v1295, %v1284
      %v1945 = vpack.c.b16 %v1296, %v1285
      %v1946 = vpack.c.b16 %v1297, %v1286
      %v1947 = vpack.c.b16 %v1298, %v1287
      %v1948 = vpack.c.b16 %v1299, %v1288
      %v1949 = vpack.c.b16 %v1300, %v1289
      %v1950 = vpack.c.b16 %v1301, %v1290
      %v1951 = vpack.c.b16 %v1302, %v1291
      %v1952 = vpack.c.b16 %v1303, %v1292
      %v1953 = vpack.c.b16 %v1304, %v1293
      %v1954 = vpack.c.b16 %v1305, %v1294
      %v1955 = vpack.c.b16 %v1317, %v1306
      %v1956 = vpack.c.b16 %v1318, %v1307
      %v1957 = vpack.c.b16 %v1319, %v1308
      %v1958 = vpack.c.b16 %v1320, %v1309
      %v1959 = vpack.c.b16 %v1321, %v1310
      %v1960 = vpack.c.b16 %v1322, %v1311
      %v1961 = vpack.c.b16 %v1323, %v1312
      %v1962 = vpack.c.b16 %v1324, %v1313
      %v1963 = vpack.c.b16 %v1325, %v1314
      %v1964 = vpack.c.b16 %v1326, %v1315
      %v1965 = vpack.c.b16 %v1327, %v1316
      %v1966 = vpack.c.b16 %v1339, %v1328
      %v1967 = vpack.c.b16 %v1340, %v1329
      %v1968 = vpack.c.b16 %v1341, %v1330
      %v1969 = vpack.c.b16 %v1342, %v1331
      %v1970 = vpack.c.b16 %v1343, %v1332
      %v1971 = vpack.c.b16 %v1344, %v1333
      %v1972 = vpack.c.b16 %v1345, %v1334
      %v1973 = vpack.c.b16 %v1346, %v1335
      %v1974 = vpack.c.b16 %v1347, %v1336
      %v1975 = vpack.c.b16 %v1348, %v1337
      %v1976 = vpack.c.b16 %v1349, %v1338
      %v1977 = vpack.c.b16 %v1361, %v1350
      %v1978 = vpack.c.b16 %v1362, %v1351
      %v1979 = vpack.c.b16 %v1363, %v1352
      %v1980 = vpack.c.b16 %v1364, %v1353
      %v1981 = vpack.c.b16 %v1365, %v1354
      %v1982 = vpack.c.b16 %v1366, %v1355
      %v1983 = vpack.c.b16 %v1367, %v1356
      %v1984 = vpack.c.b16 %v1368, %v1357
      %v1985 = vpack.c.b16 %v1369, %v1358
      %v1986 = vpack.c.b16 %v1370, %v1359
      %v1987 = vpack.c.b16 %v1371, %v1360
      %v1988 = vpack.c.b16 %v1383, %v1372
      %v1989 = vpack.c.b16 %v1384, %v1373
      %v1990 = vpack.c.b16 %v1385, %v1374
      %v1991 = vpack.c.b16 %v1386, %v1375
      %v1992 = vpack.c.b16 %v1387, %v1376
      %v1993 = vpack.c.b16 %v1388, %v1377
      %v1994 = vpack.c.b16 %v1389, %v1378
      %v1995 = vpack.c.b16 %v1390, %v1379
      %v1996 = vpack.c.b16 %v1391, %v1380
      %v1997 = vpack.c.b16 %v1392, %v1381
      %v1998 = vpack.c.b16 %v1393, %v1382
      %v1999 = vpack.c.b16 %v1405, %v1394
      %v2000 = vpack.c.b16 %v1406, %v1395
      %v2001 = vpack.c.b16 %v1407, %v1396
      %v2002 = vpack.c.b16 %v1408, %v1397
      %v2003 = vpack.c.b16 %v1409, %v1398
      %v2004 = vpack.c.b16 %v1410, %v1399
      %v2005 = vpack.c.b16 %v1411, %v1400
      %v2006 = vpack.c.b16 %v1412, %v1401
      %v2007 = vpack.c.b16 %v1413, %v1402
      %v2008 = vpack.c.b16 %v1414, %v1403
      %v2009 = vpack.c.b16 %v1415, %v1404
      %v2010 = vpack.c.b16 %v1427, %v1416
      %v2011 = vpack.c.b16 %v1428, %v1417
      %v2012 = vpack.c.b16 %v1429, %v1418
      %v2013 = vpack.c.b16 %v1430, %v1419
      %v2014 = vpack.c.b16 %v1431, %v1420
      %v2015 = vpack.c.b16 %v1432, %v1421
      %v2016 = vpack.c.b16 %v1433, %v1422
      %v2017 = vpack.c.b16 %v1434, %v1423
      %v2018 = vpack.c.b16 %v1435, %v1424
      %v2019 = vpack.c.b16 %v1436, %v1425
      %v2020 = vpack.c.b16 %v1437, %v1426
      %v2021 = vpack.c.b16 %v1449, %v1438
      %v2022 = vpack.c.b16 %v1450, %v1439
      %v2023 = vpack.c.b16 %v1451, %v1440
      %v2024 = vpack.c.b16 %v1452, %v1441
      %v2025 = vpack.c.b16 %v1453, %v1442
      %v2026 = vpack.c.b16 %v1454, %v1443
      %v2027 = vpack.c.b16 %v1455, %v1444
      %v2028 = vpack.c.b16 %v1456, %v1445
      %v2029 = vpack.c.b16 %v1457, %v1446
      %v2030 = vpack.c.b16 %v1458, %v1447
      %v2031 = vpack.c.b16 %v1459, %v1448
      %v2032 = vpack.c.b16 %v1471, %v1460
      %v2033 = vpack.c.b16 %v1472, %v1461
      %v2034 = vpack.c.b16 %v1473, %v1462
      %v2035 = vpack.c.b16 %v1474, %v1463
      %v2036 = vpack.c.b16 %v1475, %v1464
      %v2037 = vpack.c.b16 %v1476, %v1465
      %v2038 = vpack.c.b16 %v1477, %v1466
      %v2039 = vpack.c.b16 %v1478, %v1467
      %v2040 = vpack.c.b16 %v1479, %v1468
      %v2041 = vpack.c.b16 %v1480, %v1469
      %v2042 = vpack.c.b16 %v1481, %v1470
      %v2043 = vpack.c.b16 %v1493, %v1482
      %v2044 = vpack.c.b16 %v1494, %v1483
      %v2045 = vpack.c.b16 %v1495, %v1484
      %v2046 = vpack.c.b16 %v1496, %v1485
      %v2047 = vpack.c.b16 %v1497, %v1486
      %v2048 = vpack.c.b16 %v1498, %v1487
      %v2049 = vpack.c.b16 %v1499, %v1488
      %v2050 = vpack.c.b16 %v1500, %v1489
      %v2051 = vpack.c.b16 %v1501, %v1490
      %v2052 = vpack.c.b16 %v1502, %v1491
      %v2053 = vpack.c.b16 %v1503, %v1492
      %v2054 = vpack.c.b16 %v1515, %v1504
      %v2055 = vpack.c.b16 %v1516, %v1505
      %v2056 = vpack.c.b16 %v1517, %v1506
      %v2057 = vpack.c.b16 %v1518, %v1507
      %v2058 = vpack.c.b16 %v1519, %v1508
      %v2059 = vpack.c.b16 %v1520, %v1509
      %v2060 = vpack.c.b16 %v1521, %v1510
      %v2061 = vpack.c.b16 %v1522, %v1511
      %v2062 = vpack.c.b16 %v1523, %v1512
      %v2063 = vpack.c.b16 %v1524, %v1513
      %v2064 = vpack.c.b16 %v1525, %v1514
      %v2065 = vpack.c.b16 %v1537, %v1526
      %v2066 = vpack.c.b16 %v1538, %v1527
      %v2067 = vpack.c.b16 %v1539, %v1528
      %v2068 = vpack.c.b16 %v1540, %v1529
      %v2069 = vpack.c.b16 %v1541, %v1530
      %v2070 = vpack.c.b16 %v1542, %v1531
      %v2071 = vpack.c.b16 %v1543, %v1532
      %v2072 = vpack.c.b16 %v1544, %v1533
      %v2073 = vpack.c.b16 %v1545, %v1534
      %v2074 = vpack.c.b16 %v1546, %v1535
      %v2075 = vpack.c.b16 %v1547, %v1536
      %v2076 = vpack.c.b16 %v1559, %v1548
      %v2077 = vpack.c.b16 %v1560, %v1549
      %v2078 = vpack.c.b16 %v1561, %v1550
      %v2079 = vpack.c.b16 %v1562, %v1551
      %v2080 = vpack.c.b16 %v1563, %v1552
      %v2081 = vpack.c.b16 %v1564, %v1553
      %v2082 = vpack.c.b16 %v1565, %v1554
      %v2083 = vpack.c.b16 %v1566, %v1555
      %v2084 = vpack.c.b16 %v1567, %v1556
      %v2085 = vpack.c.b16 %v1568, %v1557
      %v2086 = vpack.c.b16 %v1569, %v1558
      %v2087 = vpack.c.b16 %v1581, %v1570
      %v2088 = vpack.c.b16 %v1582, %v1571
      %v2089 = vpack.c.b16 %v1583, %v1572
      %v2090 = vpack.c.b16 %v1584, %v1573
      %v2091 = vpack.c.b16 %v1585, %v1574
      %v2092 = vpack.c.b16 %v1586, %v1575
      %v2093 = vpack.c.b16 %v1587, %v1576
      %v2094 = vpack.c.b16 %v1588, %v1577
      %v2095 = vpack.c.b16 %v1589, %v1578
      %v2096 = vpack.c.b16 %v1590, %v1579
      %v2097 = vpack.c.b16 %v1591, %v1580
      %v2098 = vpack.c.b16 %v1603, %v1592
      %v2099 = vpack.c.b16 %v1604, %v1593
      %v2100 = vpack.c.b16 %v1605, %v1594
      %v2101 = vpack.c.b16 %v1606, %v1595
      %v2102 = vpack.c.b16 %v1607, %v1596
      %v2103 = vpack.c.b16 %v1608, %v1597
      %v2104 = vpack.c.b16 %v1609, %v1598
      %v2105 = vpack.c.b16 %v1610, %v1599
      %v2106 = vpack.c.b16 %v1611, %v1600
      %v2107 = vpack.c.b16 %v1612, %v1601
      %v2108 = vpack.c.b16 %v1613, %v1602
      %v2109 = vpack.c.b16 %v1625, %v1614
      %v2110 = vpack.c.b16 %v1626, %v1615
      %v2111 = vpack.c.b16 %v1627, %v1616
      %v2112 = vpack.c.b16 %v1628, %v1617
      %v2113 = vpack.c.b16 %v1629, %v1618
      %v2114 = vpack.c.b16 %v1630, %v1619
      %v2115 = vpack.c.b16 %v1631, %v1620
      %v2116 = vpack.c.b16 %v1632, %v1621
      %v2117 = vpack.c.b16 %v1633, %v1622
      %v2118 = vpack.c.b16 %v1634, %v1623
      %v2119 = vpack.c.b16 %v1635, %v1624
      %v2120 = vpack.c.b16 %v1647, %v1636
      %v2121 = vpack.c.b16 %v1648, %v1637
      %v2122 = vpack.c.b16 %v1649, %v1638
      %v2123 = vpack.c.b16 %v1650, %v1639
      %v2124 = vpack.c.b16 %v1651, %v1640
      %v2125 = vpack.c.b16 %v1652, %v1641
      %v2126 = vpack.c.b16 %v1653, %v1642
      %v2127 = vpack.c.b16 %v1654, %v1643
      %v2128 = vpack.c.b16 %v1655, %v1644
      %v2129 = vpack.c.b16 %v1656, %v1645
      %v2130 = vpack.c.b16 %v1657, %v1646
      %v2131 = vpack.c.b16 %v1669, %v1658
      %v2132 = vpack.c.b16 %v1670, %v1659
      %v2133 = vpack.c.b16 %v1671, %v1660
      %v2134 = vpack.c.b16 %v1672, %v1661
      %v2135 = vpack.c.b16 %v1673, %v1662
      %v2136 = vpack.c.b16 %v1674, %v1663
      %v2137 = vpack.c.b16 %v1675, %v1664
      %v2138 = vpack.c.b16 %v1676, %v1665
      %v2139 = vpack.c.b16 %v1677, %v1666
      %v2140 = vpack.c.b16 %v1678, %v1667
      %v2141 = vpack.c.b16 %v1679, %v1668
      %v2142 = vpack.c.b16 %v1691, %v1680
      %v2143 = vpack.c.b16 %v1692, %v1681
      %v2144 = vpack.c.b16 %v1693, %v1682
      %v2145 = vpack.c.b16 %v1694, %v1683
      %v2146 = vpack.c.b16 %v1695, %v1684
      %v2147 = vpack.c.b16 %v1696, %v1685
      %v2148 = vpack.c.b16 %v1697, %v1686
      %v2149 = vpack.c.b16 %v1698, %v1687
      %v2150 = vpack.c.b16 %v1699, %v1688
      %v2151 = vpack.c.b16 %v1700, %v1689
      %v2152 = vpack.c.b16 %v1701, %v1690
      %v2153 = vpack.c.b16 %v1713, %v1702
      %v2154 = vpack.c.b16 %v1714, %v1703
      %v2155 = vpack.c.b16 %v1715, %v1704
      %v2156 = vpack.c.b16 %v1716, %v1705
      %v2157 = vpack.c.b16 %v1717, %v1706
      %v2158 = vpack.c.b16 %v1718, %v1707
      %v2159 = vpack.c.b16 %v1719, %v1708
      %v2160 = vpack.c.b16 %v1720, %v1709
      %v2161 = vpack.c.b16 %v1721, %v1710
      %v2162 = vpack.c.b16 %v1722, %v1711
      %v2163 = vpack.c.b16 %v1723, %v1712
      %v2164 = vpack.c.b16 %v1735, %v1724
      %v2165 = vpack.c.b16 %v1736, %v1725
      %v2166 = vpack.c.b16 %v1737, %v1726
      %v2167 = vpack.c.b16 %v1738, %v1727
      %v2168 = vpack.c.b16 %v1739, %v1728
      %v2169 = vpack.c.b16 %v1740, %v1729
      %v2170 = vpack.c.b16 %v1741, %v1730
      %v2171 = vpack.c.b16 %v1742, %v1731
      %v2172 = vpack.c.b16 %v1743, %v1732
      %v2173 = vpack.c.b16 %v1744, %v1733
      %v2174 = vpack.c.b16 %v1745, %v1734
      %v2175 = vpack.c.b16 %v1757, %v1746
      %v2176 = vpack.c.b16 %v1758, %v1747
      %v2177 = vpack.c.b16 %v1759, %v1748
      %v2178 = vpack.c.b16 %v1760, %v1749
      %v2179 = vpack.c.b16 %v1761, %v1750
      %v2180 = vpack.c.b16 %v1762, %v1751
      %v2181 = vpack.c.b16 %v1763, %v1752
      %v2182 = vpack.c.b16 %v1764, %v1753
      %v2183 = vpack.c.b16 %v1765, %v1754
      %v2184 = vpack.c.b16 %v1766, %v1755
      %v2185 = vpack.c.b16 %v1767, %v1756
      %v2186 = vpack.c.b16 %v1779, %v1768
      %v2187 = vpack.c.b16 %v1780, %v1769
      %v2188 = vpack.c.b16 %v1781, %v1770
      %v2189 = vpack.c.b16 %v1782, %v1771
      %v2190 = vpack.c.b16 %v1783, %v1772
      %v2191 = vpack.c.b16 %v1784, %v1773
      %v2192 = vpack.c.b16 %v1785, %v1774
      %v2193 = vpack.c.b16 %v1786, %v1775
      %v2194 = vpack.c.b16 %v1787, %v1776
      %v2195 = vpack.c.b16 %v1788, %v1777
      %v2196 = vpack.c.b16 %v1789, %v1778
      %v2197 = vpack.c.b16 %v1801, %v1790
      %v2198 = vpack.c.b16 %v1802, %v1791
      %v2199 = vpack.c.b16 %v1803, %v1792
      %v2200 = vpack.c.b16 %v1804, %v1793
      %v2201 = vpack.c.b16 %v1805, %v1794
      %v2202 = vpack.c.b16 %v1806, %v1795
      %v2203 = vpack.c.b16 %v1807, %v1796
      %v2204 = vpack.c.b16 %v1808, %v1797
      %v2205 = vpack.c.b16 %v1809, %v1798
      %v2206 = vpack.c.b16 %v1810, %v1799
      %v2207 = vpack.c.b16 %v1811, %v1800
      %v2208 = vpack.c.b16 %v1823, %v1812
      %v2209 = vpack.c.b16 %v1824, %v1813
      %v2210 = vpack.c.b16 %v1825, %v1814
      %v2211 = vpack.c.b16 %v1826, %v1815
      %v2212 = vpack.c.b16 %v1827, %v1816
      %v2213 = vpack.c.b16 %v1828, %v1817
      %v2214 = vpack.c.b16 %v1829, %v1818
      %v2215 = vpack.c.b16 %v1830, %v1819
      %v2216 = vpack.c.b16 %v1831, %v1820
      %v2217 = vpack.c.b16 %v1832, %v1821
      %v2218 = vpack.c.b16 %v1833, %v1822
      %v2219 = vpack.c.b16 %v1845, %v1834
      %v2220 = vpack.c.b16 %v1846, %v1835
      %v2221 = vpack.c.b16 %v1847, %v1836
      %v2222 = vpack.c.b16 %v1848, %v1837
      %v2223 = vpack.c.b16 %v1849, %v1838
      %v2224 = vpack.c.b16 %v1850, %v1839
      %v2225 = vpack.c.b16 %v1851, %v1840
      %v2226 = vpack.c.b16 %v1852, %v1841
      %v2227 = vpack.c.b16 %v1853, %v1842
      %v2228 = vpack.c.b16 %v1854, %v1843
      %v2229 = vpack.c.b16 %v1855, %v1844
      %v2230 = vpack.c.b16 %v1867, %v1856
      %v2231 = vpack.c.b16 %v1868, %v1857
      %v2232 = vpack.c.b16 %v1869, %v1858
      %v2233 = vpack.c.b16 %v1870, %v1859
      %v2234 = vpack.c.b16 %v1871, %v1860
      %v2235 = vpack.c.b16 %v1872, %v1861
      %v2236 = vpack.c.b16 %v1873, %v1862
      %v2237 = vpack.c.b16 %v1874, %v1863
      %v2238 = vpack.c.b16 %v1875, %v1864
      %v2239 = vpack.c.b16 %v1876, %v1865
      %v2240 = vpack.c.b16 %v1877, %v1866
      %v2241 = vpack.c.b16 %v1889, %v1878
      %v2242 = vpack.c.b16 %v1890, %v1879
      %v2243 = vpack.c.b16 %v1891, %v1880
      %v2244 = vpack.c.b16 %v1892, %v1881
      %v2245 = vpack.c.b16 %v1893, %v1882
      %v2246 = vpack.c.b16 %v1894, %v1883
      %v2247 = vpack.c.b16 %v1895, %v1884
      %v2248 = vpack.c.b16 %v1896, %v1885
      %v2249 = vpack.c.b16 %v1897, %v1886
      %v2250 = vpack.c.b16 %v1898, %v1887
      %v2251 = vpack.c.b16 %v1899, %v1888
      %v2744 = vunpack.c.l.b16 %v628
      %v2745 = vunpack.c.h.b16 %v628
      %v2746 = vunpack.c.l.b16 %v629
      %v2747 = vunpack.c.h.b16 %v629
      %v2748 = vunpack.c.l.b16 %v630
      %v2749 = vunpack.c.h.b16 %v630
      %v2750 = vunpack.c.l.b16 %v631
      %v2751 = vunpack.c.h.b16 %v631
      %v2752 = vunpack.c.l.b16 %v632
      %v2753 = vunpack.c.h.b16 %v632
      %v2754 = vunpack.c.l.b16 %v633
      %v2755 = vunpack.c.h.b16 %v633
      %v2756 = vunpack.c.l.b16 %v634
      %v2757 = vunpack.c.h.b16 %v634
      %v2758 = vunpack.c.l.b16 %v635
      %v2759 = vunpack.c.h.b16 %v635
      %v2760 = vunpack.c.l.b16 %v636
      %v2761 = vunpack.c.h.b16 %v636
      %v2762 = vunpack.c.l.b16 %v637
      %v2763 = vunpack.c.h.b16 %v637
      %v2764 = vunpack.c.l.b16 %v638
      %v2765 = vunpack.c.h.b16 %v638
      %v2766 = vunpack.c.l.b16 %v639
      %v2767 = vunpack.c.h.b16 %v639
      %v2768 = vunpack.c.l.b16 %v640
      %v2769 = vunpack.c.h.b16 %v640
      %v2770 = vunpack.c.l.b16 %v641
      %v2771 = vunpack.c.h.b16 %v641
      %v2772 = vunpack.c.l.b16 %v642
      %v2773 = vunpack.c.h.b16 %v642
      %v2774 = vunpack.c.l.b16 %v643
      %v2775 = vunpack.c.h.b16 %v643
      %v2776 = vunpack.c.l.b16 %v644
      %v2777 = vunpack.c.h.b16 %v644
      %v2778 = vunpack.c.l.b16 %v645
      %v2779 = vunpack.c.h.b16 %v645
      %v2780 = vunpack.c.l.b16 %v646
      %v2781 = vunpack.c.h.b16 %v646
      %v2782 = vunpack.c.l.b16 %v647
      %v2783 = vunpack.c.h.b16 %v647
      %v2784 = vunpack.c.l.b16 %v648
      %v2785 = vunpack.c.h.b16 %v648
      %v2786 = vunpack.c.l.b16 %v649
      %v2787 = vunpack.c.h.b16 %v649
      %v2788 = vunpack.c.l.b16 %v650
      %v2789 = vunpack.c.h.b16 %v650
      %v2790 = vunpack.c.l.b16 %v651
      %v2791 = vunpack.c.h.b16 %v651
      %v2792 = vunpack.c.l.b16 %v652
      %v2793 = vunpack.c.h.b16 %v652
      %v2794 = vunpack.c.l.b16 %v653
      %v2795 = vunpack.c.h.b16 %v653
      %v2796 = vunpack.c.l.b16 %v654
      %v2797 = vunpack.c.h.b16 %v654
      %v2798 = vunpack.c.l.b16 %v655
      %v2799 = vunpack.c.h.b16 %v655
      %v2800 = vunpack.c.l.b16 %v656
      %v2801 = vunpack.c.h.b16 %v656
      %v2802 = vunpack.c.l.b16 %v657
      %v2803 = vunpack.c.h.b16 %v657
      %v2804 = vunpack.c.l.b16 %v658
      %v2805 = vunpack.c.h.b16 %v658
      %v2806 = vunpack.c.l.b16 %v659
      %v2807 = vunpack.c.h.b16 %v659
      %v2808 = vunpack.c.l.b16 %v660
      %v2809 = vunpack.c.h.b16 %v660
      %v2810 = vunpack.c.l.b16 %v661
      %v2811 = vunpack.c.h.b16 %v661
      %v2812 = vunpack.c.l.b16 %v662
      %v2813 = vunpack.c.h.b16 %v662
      %v2814 = vunpack.c.l.b16 %v663
      %v2815 = vunpack.c.h.b16 %v663
      %v2816 = vunpack.c.l.b16 %v664
      %v2817 = vunpack.c.h.b16 %v664
      %v2818 = vunpack.c.l.b16 %v665
      %v2819 = vunpack.c.h.b16 %v665
      %v2820 = vunpack.c.l.b16 %v666
      %v2821 = vunpack.c.h.b16 %v666
      %v2822 = vunpack.c.l.b16 %v667
      %v2823 = vunpack.c.h.b16 %v667
      %v2824 = vunpack.c.l.b16 %v668
      %v2825 = vunpack.c.h.b16 %v668
      %v2826 = vunpack.c.l.b16 %v669
      %v2827 = vunpack.c.h.b16 %v669
      %v2828 = vunpack.c.l.b16 %v670
      %v2829 = vunpack.c.h.b16 %v670
      %v2830 = vunpack.c.l.b16 %v671
      %v2831 = vunpack.c.h.b16 %v671
      %v2832 = vunpack.c.l.b16 %v672
      %v2833 = vunpack.c.h.b16 %v672
      %v2834 = vunpack.c.l.b16 %v673
      %v2835 = vunpack.c.h.b16 %v673
      %v2836 = vunpack.c.l.b16 %v674
      %v2837 = vunpack.c.h.b16 %v674
      %v2838 = vunpack.c.l.b16 %v675
      %v2839 = vunpack.c.h.b16 %v675
      %v2840 = vunpack.c.l.b16 %v676
      %v2841 = vunpack.c.h.b16 %v676
      %v2842 = vunpack.c.l.b16 %v677
      %v2843 = vunpack.c.h.b16 %v677
      %v2844 = vunpack.c.l.b16 %v678
      %v2845 = vunpack.c.h.b16 %v678
      %v2846 = vunpack.c.l.b16 %v679
      %v2847 = vunpack.c.h.b16 %v679
      %v2848 = vunpack.c.l.b16 %v680
      %v2849 = vunpack.c.h.b16 %v680
      %v2850 = vunpack.c.l.b16 %v681
      %v2851 = vunpack.c.h.b16 %v681
      %v2852 = vunpack.c.l.b16 %v682
      %v2853 = vunpack.c.h.b16 %v682
      %v2854 = vunpack.c.l.b16 %v683
      %v2855 = vunpack.c.h.b16 %v683
      %v2856 = vunpack.c.l.b16 %v684
      %v2857 = vunpack.c.h.b16 %v684
      %v2858 = vunpack.c.l.b16 %v685
      %v2859 = vunpack.c.h.b16 %v685
      %v2860 = vunpack.c.l.b16 %v686
      %v2861 = vunpack.c.h.b16 %v686
      %v2862 = vunpack.c.l.b16 %v687
      %v2863 = vunpack.c.h.b16 %v687
      %v2864 = vunpack.c.l.b16 %v688
      %v2865 = vunpack.c.h.b16 %v688
      %v2866 = vunpack.c.l.b16 %v689
      %v2867 = vunpack.c.h.b16 %v689
      %v2868 = vunpack.c.l.b16 %v690
      %v2869 = vunpack.c.h.b16 %v690
      %v2870 = vunpack.c.l.b16 %v691
      %v2871 = vunpack.c.h.b16 %v691
      %v2872 = vunpack.c.l.b16 %v692
      %v2873 = vunpack.c.h.b16 %v692
      %v2874 = vunpack.c.l.b16 %v693
      %v2875 = vunpack.c.h.b16 %v693
      %v2876 = vunpack.c.l.b16 %v694
      %v2877 = vunpack.c.h.b16 %v694
      %v2878 = vunpack.c.l.b16 %v695
      %v2879 = vunpack.c.h.b16 %v695
      %v2880 = vunpack.c.l.b16 %v696
      %v2881 = vunpack.c.h.b16 %v696
      %v2882 = vunpack.c.l.b16 %v697
      %v2883 = vunpack.c.h.b16 %v697
      %v2884 = vunpack.c.l.b16 %v698
      %v2885 = vunpack.c.h.b16 %v698
      %v2886 = vunpack.c.l.b16 %v699
      %v2887 = vunpack.c.h.b16 %v699
      %v2888 = vunpack.c.l.b16 %v700
      %v2889 = vunpack.c.h.b16 %v700
      %v2890 = vunpack.c.l.b16 %v701
      %v2891 = vunpack.c.h.b16 %v701
      %v2892 = vunpack.c.l.b16 %v702
      %v2893 = vunpack.c.h.b16 %v702
      %v2894 = vunpack.c.l.b16 %v703
      %v2895 = vunpack.c.h.b16 %v703
      %v2896 = vunpack.c.l.b16 %v704
      %v2897 = vunpack.c.h.b16 %v704
      %v2898 = vunpack.c.l.b16 %v705
      %v2899 = vunpack.c.h.b16 %v705
      %v2900 = vunpack.c.l.b16 %v706
      %v2901 = vunpack.c.h.b16 %v706
      %v2902 = vunpack.c.l.b16 %v707
      %v2903 = vunpack.c.h.b16 %v707
      %v2904 = vunpack.c.l.b16 %v708
      %v2905 = vunpack.c.h.b16 %v708
      %v2906 = vunpack.c.l.b16 %v709
      %v2907 = vunpack.c.h.b16 %v709
      %v2908 = vunpack.c.l.b16 %v710
      %v2909 = vunpack.c.h.b16 %v710
      %v2910 = vunpack.c.l.b16 %v711
      %v2911 = vunpack.c.h.b16 %v711
      %v2912 = vunpack.c.l.b16 %v712
      %v2913 = vunpack.c.h.b16 %v712
      %v2914 = vunpack.c.l.b16 %v713
      %v2915 = vunpack.c.h.b16 %v713
      %v2916 = vunpack.c.l.b16 %v714
      %v2917 = vunpack.c.h.b16 %v714
      %v2918 = vunpack.c.l.b16 %v715
      %v2919 = vunpack.c.h.b16 %v715
      %v2920 = vunpack.c.l.b16 %v716
      %v2921 = vunpack.c.h.b16 %v716
      %v2922 = vunpack.c.l.b16 %v717
      %v2923 = vunpack.c.h.b16 %v717
      %v2924 = vunpack.c.l.b16 %v718
      %v2925 = vunpack.c.h.b16 %v718
      %v2926 = vunpack.c.l.b16 %v719
      %v2927 = vunpack.c.h.b16 %v719
      %v2928 = vunpack.c.l.b16 %v720
      %v2929 = vunpack.c.h.b16 %v720
      %v2930 = vunpack.c.l.b16 %v721
      %v2931 = vunpack.c.h.b16 %v721
      %v2932 = vunpack.c.l.b16 %v722
      %v2933 = vunpack.c.h.b16 %v722
      %v2934 = vunpack.c.l.b16 %v723
      %v2935 = vunpack.c.h.b16 %v723
      %v2936 = vunpack.c.l.b16 %v724
      %v2937 = vunpack.c.h.b16 %v724
      %v2938 = vunpack.c.l.b16 %v725
      %v2939 = vunpack.c.h.b16 %v725
      %v2940 = vunpack.c.l.b16 %v726
      %v2941 = vunpack.c.h.b16 %v726
      %v2942 = vunpack.c.l.b16 %v727
      %v2943 = vunpack.c.h.b16 %v727
      %v2944 = vunpack.c.l.b16 %v728
      %v2945 = vunpack.c.h.b16 %v728
      %v2946 = vunpack.c.l.b16 %v729
      %v2947 = vunpack.c.h.b16 %v729
      %v2948 = vunpack.c.l.b16 %v730
      %v2949 = vunpack.c.h.b16 %v730
      %v2950 = vunpack.c.l.b16 %v731
      %v2951 = vunpack.c.h.b16 %v731
      %v2952 = vunpack.c.l.b16 %v732
      %v2953 = vunpack.c.h.b16 %v732
      %v2954 = vunpack.c.l.b16 %v733
      %v2955 = vunpack.c.h.b16 %v733
      %v2956 = vunpack.c.l.b16 %v734
      %v2957 = vunpack.c.h.b16 %v734
      %v2958 = vunpack.c.l.b16 %v735
      %v2959 = vunpack.c.h.b16 %v735
      %v2960 = vunpack.c.l.b16 %v736
      %v2961 = vunpack.c.h.b16 %v736
      %v2962 = vunpack.c.l.b16 %v737
      %v2963 = vunpack.c.h.b16 %v737
      %v2964 = vunpack.c.l.b16 %v738
      %v2965 = vunpack.c.h.b16 %v738
      %v2966 = vunpack.c.l.b16 %v739
      %v2967 = vunpack.c.h.b16 %v739
      %v2968 = vunpack.c.l.b16 %v740
      %v2969 = vunpack.c.h.b16 %v740
      %v2970 = vunpack.c.l.b16 %v741
      %v2971 = vunpack.c.h.b16 %v741
      %v2972 = vunpack.c.l.b16 %v742
      %v2973 = vunpack.c.h.b16 %v742
      %v2974 = vunpack.c.l.b16 %v743
      %v2975 = vunpack.c.h.b16 %v743
      %v2976 = vunpack.c.l.b16 %v744
      %v2977 = vunpack.c.h.b16 %v744
      %v2978 = vunpack.c.l.b16 %v745
      %v2979 = vunpack.c.h.b16 %v745
      %v2980 = vunpack.c.l.b16 %v746
      %v2981 = vunpack.c.h.b16 %v746
      %v2982 = vunpack.c.l.b16 %v747
      %v2983 = vunpack.c.h.b16 %v747
      %v2984 = vunpack.c.l.b16 %v748
      %v2985 = vunpack.c.h.b16 %v748
      %v2986 = vunpack.c.l.b16 %v749
      %v2987 = vunpack.c.h.b16 %v749
      %v2988 = vunpack.c.l.b16 %v750
      %v2989 = vunpack.c.h.b16 %v750
      %v2990 = vunpack.c.l.b16 %v751
      %v2991 = vunpack.c.h.b16 %v751
      %v2992 = vunpack.c.l.b16 %v752
      %v2993 = vunpack.c.h.b16 %v752
      %v2994 = vunpack.c.l.b16 %v753
      %v2995 = vunpack.c.h.b16 %v753
      %v2996 = vunpack.c.l.b16 %v754
      %v2997 = vunpack.c.h.b16 %v754
      %v2998 = vunpack.c.l.b16 %v755
      %v2999 = vunpack.c.h.b16 %v755
      %v3000 = vunpack.c.l.b16 %v756
      %v3001 = vunpack.c.h.b16 %v756
      %v3002 = vunpack.c.l.b16 %v757
      %v3003 = vunpack.c.h.b16 %v757
      %v3004 = vunpack.c.l.b16 %v758
      %v3005 = vunpack.c.h.b16 %v758
      %v3006 = vunpack.c.l.b16 %v759
      %v3007 = vunpack.c.h.b16 %v759
      %v3008 = vunpack.c.l.b16 %v760
      %v3009 = vunpack.c.h.b16 %v760
      %v3010 = vunpack.c.l.b16 %v761
      %v3011 = vunpack.c.h.b16 %v761
      %v3012 = vunpack.c.l.b16 %v762
      %v3013 = vunpack.c.h.b16 %v762
      %v3014 = vunpack.c.l.b16 %v763
      %v3015 = vunpack.c.h.b16 %v763
      %v3016 = vunpack.c.l.b16 %v764
      %v3017 = vunpack.c.h.b16 %v764
      %v3018 = vunpack.c.l.b16 %v765
      %v3019 = vunpack.c.h.b16 %v765
      %v3020 = vunpack.c.l.b16 %v766
      %v3021 = vunpack.c.h.b16 %v766
      %v3022 = vunpack.c.l.b16 %v767
      %v3023 = vunpack.c.h.b16 %v767
      %v3024 = vunpack.c.l.b16 %v768
      %v3025 = vunpack.c.h.b16 %v768
      %v3026 = vunpack.c.l.b16 %v769
      %v3027 = vunpack.c.h.b16 %v769
      %v3028 = vunpack.c.l.b16 %v770
      %v3029 = vunpack.c.h.b16 %v770
      %v3030 = vunpack.c.l.b16 %v771
      %v3031 = vunpack.c.h.b16 %v771
      %v3032 = vunpack.c.l.b16 %v772
      %v3033 = vunpack.c.h.b16 %v772
      %v3034 = vunpack.c.l.b16 %v773
      %v3035 = vunpack.c.h.b16 %v773
      %v3036 = vunpack.c.l.b16 %v774
      %v3037 = vunpack.c.h.b16 %v774
      %v3038 = vunpack.c.l.b16 %v775
      %v3039 = vunpack.c.h.b16 %v775
      %v3040 = vunpack.c.l.b16 %v776
      %v3041 = vunpack.c.h.b16 %v776
      %v3042 = vunpack.c.l.b16 %v777
      %v3043 = vunpack.c.h.b16 %v777
      %v3044 = vunpack.c.l.b16 %v778
      %v3045 = vunpack.c.h.b16 %v778
      %v3046 = vunpack.c.l.b16 %v779
      %v3047 = vunpack.c.h.b16 %v779
      %v3048 = vunpack.c.l.b16 %v780
      %v3049 = vunpack.c.h.b16 %v780
      %v3050 = vunpack.c.l.b16 %v781
      %v3051 = vunpack.c.h.b16 %v781
      %v3052 = vunpack.c.l.b16 %v782
      %v3053 = vunpack.c.h.b16 %v782
      %v3054 = vunpack.c.l.b16 %v783
      %v3055 = vunpack.c.h.b16 %v783
      %v3056 = vunpack.c.l.b16 %v784
      %v3057 = vunpack.c.h.b16 %v784
      %v3058 = vunpack.c.l.b16 %v785
      %v3059 = vunpack.c.h.b16 %v785
      %v3060 = vunpack.c.l.b16 %v786
      %v3061 = vunpack.c.h.b16 %v786
      %v3062 = vunpack.c.l.b16 %v787
      %v3063 = vunpack.c.h.b16 %v787
      %v3064 = vunpack.c.l.b16 %v788
      %v3065 = vunpack.c.h.b16 %v788
      %v3066 = vunpack.c.l.b16 %v789
      %v3067 = vunpack.c.h.b16 %v789
      %v3068 = vunpack.c.l.b16 %v790
      %v3069 = vunpack.c.h.b16 %v790
      %v3070 = vunpack.c.l.b16 %v791
      %v3071 = vunpack.c.h.b16 %v791
      %v3072 = vunpack.c.l.b16 %v792
      %v3073 = vunpack.c.h.b16 %v792
      %v3074 = vunpack.c.l.b16 %v793
      %v3075 = vunpack.c.h.b16 %v793
      %v3076 = vunpack.c.l.b16 %v794
      %v3077 = vunpack.c.h.b16 %v794
      %v3078 = vunpack.c.l.b16 %v795
      %v3079 = vunpack.c.h.b16 %v795
      %v3080 = vunpack.c.l.b16 %v796
      %v3081 = vunpack.c.h.b16 %v796
      %v3082 = vunpack.c.l.b16 %v797
      %v3083 = vunpack.c.h.b16 %v797
      %v3084 = vunpack.c.l.b16 %v798
      %v3085 = vunpack.c.h.b16 %v798
      %v3086 = vunpack.c.l.b16 %v799
      %v3087 = vunpack.c.h.b16 %v799
      %v3088 = vpack.c.b16 %v2746, %v2744
      %v3089 = vpack.c.b16 %v2747, %v2745
      %v3090 = vpack.c.b16 %v2750, %v2748
      %v3091 = vpack.c.b16 %v2751, %v2749
      %v3092 = vpack.c.b16 %v2754, %v2752
      %v3093 = vpack.c.b16 %v2755, %v2753
      %v3094 = vpack.c.b16 %v2758, %v2756
      %v3095 = vpack.c.b16 %v2759, %v2757
      %v3096 = vpack.c.b16 %v2762, %v2760
      %v3097 = vpack.c.b16 %v2763, %v2761
      %v3098 = vpack.c.b16 %v2766, %v2764
      %v3099 = vpack.c.b16 %v2767, %v2765
      %v3100 = vpack.c.b16 %v2770, %v2768
      %v3101 = vpack.c.b16 %v2771, %v2769
      %v3102 = vpack.c.b16 %v2774, %v2772
      %v3103 = vpack.c.b16 %v2775, %v2773
      %v3104 = vpack.c.b16 %v2778, %v2776
      %v3105 = vpack.c.b16 %v2779, %v2777
      %v3106 = vpack.c.b16 %v2782, %v2780
      %v3107 = vpack.c.b16 %v2783, %v2781
      %v3108 = vpack.c.b16 %v2786, %v2784
      %v3109 = vpack.c.b16 %v2787, %v2785
      %v3110 = vpack.c.b16 %v2790, %v2788
      %v3111 = vpack.c.b16 %v2791, %v2789
      %v3112 = vpack.c.b16 %v2794, %v2792
      %v3113 = vpack.c.b16 %v2795, %v2793
      %v3114 = vpack.c.b16 %v2798, %v2796
      %v3115 = vpack.c.b16 %v2799, %v2797
      %v3116 = vpack.c.b16 %v2802, %v2800
      %v3117 = vpack.c.b16 %v2803, %v2801
      %v3118 = vpack.c.b16 %v2806, %v2804
      %v3119 = vpack.c.b16 %v2807, %v2805
      %v3120 = vpack.c.b16 %v2810, %v2808
      %v3121 = vpack.c.b16 %v2811, %v2809
      %v3122 = vpack.c.b16 %v2814, %v2812
      %v3123 = vpack.c.b16 %v2815, %v2813
      %v3124 = vpack.c.b16 %v2818, %v2816
      %v3125 = vpack.c.b16 %v2819, %v2817
      %v3126 = vpack.c.b16 %v2822, %v2820
      %v3127 = vpack.c.b16 %v2823, %v2821
      %v3128 = vpack.c.b16 %v2826, %v2824
      %v3129 = vpack.c.b16 %v2827, %v2825
      %v3130 = vpack.c.b16 %v2830, %v2828
      %v3131 = vpack.c.b16 %v2831, %v2829
      %v3132 = vpack.c.b16 %v2834, %v2832
      %v3133 = vpack.c.b16 %v2835, %v2833
      %v3134 = vpack.c.b16 %v2838, %v2836
      %v3135 = vpack.c.b16 %v2839, %v2837
      %v3136 = vpack.c.b16 %v2842, %v2840
      %v3137 = vpack.c.b16 %v2843, %v2841
      %v3138 = vpack.c.b16 %v2846, %v2844
      %v3139 = vpack.c.b16 %v2847, %v2845
      %v3140 = vpack.c.b16 %v2850, %v2848
      %v3141 = vpack.c.b16 %v2851, %v2849
      %v3142 = vpack.c.b16 %v2854, %v2852
      %v3143 = vpack.c.b16 %v2855, %v2853
      %v3144 = vpack.c.b16 %v2858, %v2856
      %v3145 = vpack.c.b16 %v2859, %v2857
      %v3146 = vpack.c.b16 %v2862, %v2860
      %v3147 = vpack.c.b16 %v2863, %v2861
      %v3148 = vpack.c.b16 %v2866, %v2864
      %v3149 = vpack.c.b16 %v2867, %v2865
      %v3150 = vpack.c.b16 %v2870, %v2868
      %v3151 = vpack.c.b16 %v2871, %v2869
      %v3152 = vpack.c.b16 %v2874, %v2872
      %v3153 = vpack.c.b16 %v2875, %v2873
      %v3154 = vpack.c.b16 %v2878, %v2876
      %v3155 = vpack.c.b16 %v2879, %v2877
      %v3156 = vpack.c.b16 %v2882, %v2880
      %v3157 = vpack.c.b16 %v2883, %v2881
      %v3158 = vpack.c.b16 %v2886, %v2884
      %v3159 = vpack.c.b16 %v2887, %v2885
      %v3160 = vpack.c.b16 %v2890, %v2888
      %v3161 = vpack.c.b16 %v2891, %v2889
      %v3162 = vpack.c.b16 %v2894, %v2892
      %v3163 = vpack.c.b16 %v2895, %v2893
      %v3164 = vpack.c.b16 %v2898, %v2896
      %v3165 = vpack.c.b16 %v2899, %v2897
      %v3166 = vpack.c.b16 %v2902, %v2900
      %v3167 = vpack.c.b16 %v2903, %v2901
      %v3168 = vpack.c.b16 %v2906, %v2904
      %v3169 = vpack.c.b16 %v2907, %v2905
      %v3170 = vpack.c.b16 %v2910, %v2908
      %v3171 = vpack.c.b16 %v2911, %v2909
      %v3172 = vpack.c.b16 %v2914, %v2912
      %v3173 = vpack.c.b16 %v2915, %v2913
      %v3174 = vpack.c.b16 %v2918, %v2916
      %v3175 = vpack.c.b16 %v2919, %v2917
      %v3176 = vpack.c.b16 %v2922, %v2920
      %v3177 = vpack.c.b16 %v2923, %v2921
      %v3178 = vpack.c.b16 %v2926, %v2924
      %v3179 = vpack.c.b16 %v2927, %v2925
      %v3180 = vpack.c.b16 %v2930, %v2928
      %v3181 = vpack.c.b16 %v2931, %v2929
      %v3182 = vpack.c.b16 %v2934, %v2932
      %v3183 = vpack.c.b16 %v2935, %v2933
      %v3184 = vpack.c.b16 %v2938, %v2936
      %v3185 = vpack.c.b16 %v2939, %v2937
      %v3186 = vpack.c.b16 %v2942, %v2940
      %v3187 = vpack.c.b16 %v2943, %v2941
      %v3188 = vpack.c.b16 %v2946, %v2944
      %v3189 = vpack.c.b16 %v2947, %v2945
      %v3190 = vpack.c.b16 %v2950, %v2948
      %v3191 = vpack.c.b16 %v2951, %v2949
      %v3192 = vpack.c.b16 %v2954, %v2952
      %v3193 = vpack.c.b16 %v2955, %v2953
      %v3194 = vpack.c.b16 %v2958, %v2956
      %v3195 = vpack.c.b16 %v2959, %v2957
      %v3196 = vpack.c.b16 %v2962, %v2960
      %v3197 = vpack.c.b16 %v2963, %v2961
      %v3198 = vpack.c.b16 %v2966, %v2964
      %v3199 = vpack.c.b16 %v2967, %v2965
      %v3200 = vpack.c.b16 %v2970, %v2968
      %v3201 = vpack.c.b16 %v2971, %v2969
      %v3202 = vpack.c.b16 %v2974, %v2972
      %v3203 = vpack.c.b16 %v2975, %v2973
      %v3204 = vpack.c.b16 %v2978, %v2976
      %v3205 = vpack.c.b16 %v2979, %v2977
      %v3206 = vpack.c.b16 %v2982, %v2980
      %v3207 = vpack.c.b16 %v2983, %v2981
      %v3208 = vpack.c.b16 %v2986, %v2984
      %v3209 = vpack.c.b16 %v2987, %v2985
      %v3210 = vpack.c.b16 %v2990, %v2988
      %v3211 = vpack.c.b16 %v2991, %v2989
      %v3212 = vpack.c.b16 %v2994, %v2992
      %v3213 = vpack.c.b16 %v2995, %v2993
      %v3214 = vpack.c.b16 %v2998, %v2996
      %v3215 = vpack.c.b16 %v2999, %v2997
      %v3216 = vpack.c.b16 %v3002, %v3000
      %v3217 = vpack.c.b16 %v3003, %v3001
      %v3218 = vpack.c.b16 %v3006, %v3004
      %v3219 = vpack.c.b16 %v3007, %v3005
      %v3220 = vpack.c.b16 %v3010, %v3008
      %v3221 = vpack.c.b16 %v3011, %v3009
      %v3222 = vpack.c.b16 %v3014, %v3012
      %v3223 = vpack.c.b16 %v3015, %v3013
      %v3224 = vpack.c.b16 %v3018, %v3016
      %v3225 = vpack.c.b16 %v3019, %v3017
      %v3226 = vpack.c.b16 %v3022, %v3020
      %v3227 = vpack.c.b16 %v3023, %v3021
      %v3228 = vpack.c.b16 %v3026, %v3024
      %v3229 = vpack.c.b16 %v3027, %v3025
      %v3230 = vpack.c.b16 %v3030, %v3028
      %v3231 = vpack.c.b16 %v3031, %v3029
      %v3232 = vpack.c.b16 %v3034, %v3032
      %v3233 = vpack.c.b16 %v3035, %v3033
      %v3234 = vpack.c.b16 %v3038, %v3036
      %v3235 = vpack.c.b16 %v3039, %v3037
      %v3236 = vpack.c.b16 %v3042, %v3040
      %v3237 = vpack.c.b16 %v3043, %v3041
      %v3238 = vpack.c.b16 %v3046, %v3044
      %v3239 = vpack.c.b16 %v3047, %v3045
      %v3240 = vpack.c.b16 %v3050, %v3048
      %v3241 = vpack.c.b16 %v3051, %v3049
      %v3242 = vpack.c.b16 %v3054, %v3052
      %v3243 = vpack.c.b16 %v3055, %v3053
      %v3244 = vpack.c.b16 %v3058, %v3056
      %v3245 = vpack.c.b16 %v3059, %v3057
      %v3246 = vpack.c.b16 %v3062, %v3060
      %v3247 = vpack.c.b16 %v3063, %v3061
      %v3248 = vpack.c.b16 %v3066, %v3064
      %v3249 = vpack.c.b16 %v3067, %v3065
      %v3250 = vpack.c.b16 %v3070, %v3068
      %v3251 = vpack.c.b16 %v3071, %v3069
      %v3252 = vpack.c.b16 %v3074, %v3072
      %v3253 = vpack.c.b16 %v3075, %v3073
      %v3254 = vpack.c.b16 %v3078, %v3076
      %v3255 = vpack.c.b16 %v3079, %v3077
      %v3256 = vpack.c.b16 %v3082, %v3080
      %v3257 = vpack.c.b16 %v3083, %v3081
      %v3258 = vpack.c.b16 %v3086, %v3084
      %v3259 = vpack.c.b16 %v3087, %v3085
      %vm3432 = vcmask 785408
      %v3434 = vsel %vm3432, %v1910, 0
      %v3437 = vsel %vm3432, %v1921, 0
      %v3440 = vsel %vm3432, %v1932, 0
      %v3443 = vsel %vm3432, %v1943, 0
      %v3446 = vsel %vm3432, %v1954, 0
      %v3449 = vsel %vm3432, %v1965, 0
      %v3452 = vsel %vm3432, %v1976, 0
      %v3455 = vsel %vm3432, %v1987, 0
      %v3458 = vsel %vm3432, %v1998, 0
      %v3461 = vsel %vm3432, %v2009, 0
      %v3464 = vsel %vm3432, %v2020, 0
      %v3467 = vsel %vm3432, %v2031, 0
      %v3470 = vsel %vm3432, %v2042, 0
      %v3473 = vsel %vm3432, %v2053, 0
      %v3476 = vsel %vm3432, %v2064, 0
      %v3479 = vsel %vm3432, %v2075, 0
      %v3482 = vsel %vm3432, %v2086, 0
      %v3485 = vsel %vm3432, %v2097, 0
      %v3488 = vsel %vm3432, %v2108, 0
      %v3491 = vsel %vm3432, %v2119, 0
      %v3494 = vsel %vm3432, %v2130, 0
      %v3497 = vsel %vm3432, %v2141, 0
      %v3500 = vsel %vm3432, %v2152, 0
      %v3503 = vsel %vm3432, %v2163, 0
      %v3506 = vsel %vm3432, %v2174, 0
      %v3509 = vsel %vm3432, %v2185, 0
      %v3512 = vsel %vm3432, %v2196, 0
      %v3515 = vsel %vm3432, %v2207, 0
      %v3518 = vsel %vm3432, %v2218, 0
      %v3521 = vsel %vm3432, %v2229, 0
      %v3524 = vsel %vm3432, %v2240, 0
      %v3527 = vsel %vm3432, %v2251, 0
      %3529 = vmatprep.subr.bf16.mxu0 %v3103
      %3530 = vmatpush1.bf16.msra.mxu0 %v3102
      %3531 = vmatprep.subr.bf16.mxu0 %v3101
      %3532 = vmatpush1.bf16.msra.mxu0 %v3100
      %3533 = vmatprep.subr.bf16.mxu0 %v3099
      %3534 = vmatpush1.bf16.msra.mxu0 %v3098
      %3535 = vmatprep.subr.bf16.mxu0 %v3097
      %3536 = vmatpush1.bf16.msra.mxu0 %v3096
      %3537 = vmatprep.subr.bf16.mxu0 %v3095
      %3538 = vmatpush1.bf16.msra.mxu0 %v3094
      %3539 = vmatprep.subr.bf16.mxu0 %v3093
      %3540 = vmatpush1.bf16.msra.mxu0 %v3092
      %3541 = vmatprep.subr.bf16.mxu0 %v3091
      %3542 = vmatpush1.bf16.msra.mxu0 %v3090
      %3543 = vmatprep.subr.bf16.mxu0 %v3089
      %3544 = vmatpush1.bf16.msra.mxu0 %v3088
      %3545 = vmatprep.subr.bf16.mxu0 %v3119
      %3546 = vmatpush2.bf16.msra.mxu0 %v3118
      %3547 = vmatprep.subr.bf16.mxu0 %v3117
      %3548 = vmatpush2.bf16.msra.mxu0 %v3116
      %3549 = vmatprep.subr.bf16.mxu0 %v3115
      %3550 = vmatpush2.bf16.msra.mxu0 %v3114
      %3551 = vmatprep.subr.bf16.mxu0 %v3113
      %3552 = vmatpush2.bf16.msra.mxu0 %v3112
      %3553 = vmatprep.subr.bf16.mxu0 %v3111
      %3554 = vmatpush2.bf16.msra.mxu0 %v3110
      %3555 = vmatprep.subr.bf16.mxu0 %v3109
      %3556 = vmatpush2.bf16.msra.mxu0 %v3108
      %3557 = vmatprep.subr.bf16.mxu0 %v3107
      %3558 = vmatpush2.bf16.msra.mxu0 %v3106
      %3559 = vmatprep.subr.bf16.mxu0 %v3105
      %3560 = vmatpush2.bf16.msra.mxu0 %v3104
      %3561 = vmatprep.mubr.bf16.mxu0 %v1901
      %3562 = vmatmul.mubr.bf16.gmra.mxu0 %v1900
      %v3563 = vpop.f32.mrf.mxu0
      %v3564 = vadd.f32 %v805, %v3563
      %v3565 = vpop.f32.mrf.mxu0
      %v3566 = vadd.f32 %v809, %v3565
      %v3567 = vpop.f32.mrf.mxu0
      %v3568 = vadd.f32 %v805, %v3567
      %v3569 = vpop.f32.mrf.mxu0
      %v3570 = vadd.f32 %v809, %v3569
      %3571 = vmatprep.mubr.bf16.mxu0 %v1912
      %3572 = vmatmul.mubr.bf16.gmra.mxu0 %v1911
      %v3573 = vpop.f32.mrf.mxu0
      %v3574 = vadd.f32 %v805, %v3573
      %v3575 = vpop.f32.mrf.mxu0
      %v3576 = vadd.f32 %v809, %v3575
      %v3577 = vpop.f32.mrf.mxu0
      %v3578 = vadd.f32 %v805, %v3577
      %v3579 = vpop.f32.mrf.mxu0
      %v3580 = vadd.f32 %v809, %v3579
      %3581 = vmatprep.mubr.bf16.mxu0 %v1923
      %3582 = vmatmul.mubr.bf16.gmra.mxu0 %v1922
      %v3583 = vpop.f32.mrf.mxu0
      %v3584 = vadd.f32 %v805, %v3583
      %v3585 = vpop.f32.mrf.mxu0
      %v3586 = vadd.f32 %v809, %v3585
      %v3587 = vpop.f32.mrf.mxu0
      %v3588 = vadd.f32 %v805, %v3587
      %v3589 = vpop.f32.mrf.mxu0
      %v3590 = vadd.f32 %v809, %v3589
      %3591 = vmatprep.mubr.bf16.mxu0 %v1934
      %3592 = vmatmul.mubr.bf16.gmra.mxu0 %v1933
      %v3593 = vpop.f32.mrf.mxu0
      %v3594 = vadd.f32 %v805, %v3593
      %v3595 = vpop.f32.mrf.mxu0
      %v3596 = vadd.f32 %v809, %v3595
      %v3597 = vpop.f32.mrf.mxu0
      %v3598 = vadd.f32 %v805, %v3597
      %v3599 = vpop.f32.mrf.mxu0
      %v3600 = vadd.f32 %v809, %v3599
      %3601 = vmatprep.mubr.bf16.mxu0 %v1945
      %3602 = vmatmul.mubr.bf16.gmra.mxu0 %v1944
      %v3603 = vpop.f32.mrf.mxu0
      %v3604 = vadd.f32 %v805, %v3603
      %v3605 = vpop.f32.mrf.mxu0
      %v3606 = vadd.f32 %v809, %v3605
      %v3607 = vpop.f32.mrf.mxu0
      %v3608 = vadd.f32 %v805, %v3607
      %v3609 = vpop.f32.mrf.mxu0
      %v3610 = vadd.f32 %v809, %v3609
      %3611 = vmatprep.mubr.bf16.mxu0 %v1956
      %3612 = vmatmul.mubr.bf16.gmra.mxu0 %v1955
      %v3613 = vpop.f32.mrf.mxu0
      %v3614 = vadd.f32 %v805, %v3613
      %v3615 = vpop.f32.mrf.mxu0
      %v3616 = vadd.f32 %v809, %v3615
      %v3617 = vpop.f32.mrf.mxu0
      %v3618 = vadd.f32 %v805, %v3617
      %v3619 = vpop.f32.mrf.mxu0
      %v3620 = vadd.f32 %v809, %v3619
      %3621 = vmatprep.mubr.bf16.mxu0 %v1967
      %3622 = vmatmul.mubr.bf16.gmra.mxu0 %v1966
      %v3623 = vpop.f32.mrf.mxu0
      %v3624 = vadd.f32 %v805, %v3623
      %v3625 = vpop.f32.mrf.mxu0
      %v3626 = vadd.f32 %v809, %v3625
      %v3627 = vpop.f32.mrf.mxu0
      %v3628 = vadd.f32 %v805, %v3627
      %v3629 = vpop.f32.mrf.mxu0
      %v3630 = vadd.f32 %v809, %v3629
      %3631 = vmatprep.mubr.bf16.mxu0 %v1978
      %3632 = vmatmul.mubr.bf16.gmra.mxu0 %v1977
      %v3633 = vpop.f32.mrf.mxu0
      %v3634 = vadd.f32 %v805, %v3633
      %v3635 = vpop.f32.mrf.mxu0
      %v3636 = vadd.f32 %v809, %v3635
      %v3637 = vpop.f32.mrf.mxu0
      %v3638 = vadd.f32 %v805, %v3637
      %v3639 = vpop.f32.mrf.mxu0
      %v3640 = vadd.f32 %v809, %v3639
      %3641 = vmatprep.mubr.bf16.mxu0 %v1989
      %3642 = vmatmul.mubr.bf16.gmra.mxu0 %v1988
      %v3643 = vpop.f32.mrf.mxu0
      %v3644 = vadd.f32 %v805, %v3643
      %v3645 = vpop.f32.mrf.mxu0
      %v3646 = vadd.f32 %v809, %v3645
      %v3647 = vpop.f32.mrf.mxu0
      %v3648 = vadd.f32 %v805, %v3647
      %v3649 = vpop.f32.mrf.mxu0
      %v3650 = vadd.f32 %v809, %v3649
      %3651 = vmatprep.mubr.bf16.mxu0 %v2000
      %3652 = vmatmul.mubr.bf16.gmra.mxu0 %v1999
      %v3653 = vpop.f32.mrf.mxu0
      %v3654 = vadd.f32 %v805, %v3653
      %v3655 = vpop.f32.mrf.mxu0
      %v3656 = vadd.f32 %v809, %v3655
      %v3657 = vpop.f32.mrf.mxu0
      %v3658 = vadd.f32 %v805, %v3657
      %v3659 = vpop.f32.mrf.mxu0
      %v3660 = vadd.f32 %v809, %v3659
      %3661 = vmatprep.mubr.bf16.mxu0 %v2011
      %3662 = vmatmul.mubr.bf16.gmra.mxu0 %v2010
      %v3663 = vpop.f32.mrf.mxu0
      %v3664 = vadd.f32 %v805, %v3663
      %v3665 = vpop.f32.mrf.mxu0
      %v3666 = vadd.f32 %v809, %v3665
      %v3667 = vpop.f32.mrf.mxu0
      %v3668 = vadd.f32 %v805, %v3667
      %v3669 = vpop.f32.mrf.mxu0
      %v3670 = vadd.f32 %v809, %v3669
      %3671 = vmatprep.mubr.bf16.mxu0 %v2022
      %3672 = vmatmul.mubr.bf16.gmra.mxu0 %v2021
      %v3673 = vpop.f32.mrf.mxu0
      %v3674 = vadd.f32 %v805, %v3673
      %v3675 = vpop.f32.mrf.mxu0
      %v3676 = vadd.f32 %v809, %v3675
      %v3677 = vpop.f32.mrf.mxu0
      %v3678 = vadd.f32 %v805, %v3677
      %v3679 = vpop.f32.mrf.mxu0
      %v3680 = vadd.f32 %v809, %v3679
      %3681 = vmatprep.mubr.bf16.mxu0 %v2033
      %3682 = vmatmul.mubr.bf16.gmra.mxu0 %v2032
      %v3683 = vpop.f32.mrf.mxu0
      %v3684 = vadd.f32 %v805, %v3683
      %v3685 = vpop.f32.mrf.mxu0
      %v3686 = vadd.f32 %v809, %v3685
      %v3687 = vpop.f32.mrf.mxu0
      %v3688 = vadd.f32 %v805, %v3687
      %v3689 = vpop.f32.mrf.mxu0
      %v3690 = vadd.f32 %v809, %v3689
      %3691 = vmatprep.mubr.bf16.mxu0 %v2044
      %3692 = vmatmul.mubr.bf16.gmra.mxu0 %v2043
      %v3693 = vpop.f32.mrf.mxu0
      %v3694 = vadd.f32 %v805, %v3693
      %v3695 = vpop.f32.mrf.mxu0
      %v3696 = vadd.f32 %v809, %v3695
      %v3697 = vpop.f32.mrf.mxu0
      %v3698 = vadd.f32 %v805, %v3697
      %v3699 = vpop.f32.mrf.mxu0
      %v3700 = vadd.f32 %v809, %v3699
      %3701 = vmatprep.mubr.bf16.mxu0 %v2055
      %3702 = vmatmul.mubr.bf16.gmra.mxu0 %v2054
      %v3703 = vpop.f32.mrf.mxu0
      %v3704 = vadd.f32 %v805, %v3703
      %v3705 = vpop.f32.mrf.mxu0
      %v3706 = vadd.f32 %v809, %v3705
      %v3707 = vpop.f32.mrf.mxu0
      %v3708 = vadd.f32 %v805, %v3707
      %v3709 = vpop.f32.mrf.mxu0
      %v3710 = vadd.f32 %v809, %v3709
      %3711 = vmatprep.mubr.bf16.mxu0 %v2066
      %3712 = vmatmul.mubr.bf16.gmra.mxu0 %v2065
      %v3713 = vpop.f32.mrf.mxu0
      %v3714 = vadd.f32 %v805, %v3713
      %v3715 = vpop.f32.mrf.mxu0
      %v3716 = vadd.f32 %v809, %v3715
      %v3717 = vpop.f32.mrf.mxu0
      %v3718 = vadd.f32 %v805, %v3717
      %v3719 = vpop.f32.mrf.mxu0
      %v3720 = vadd.f32 %v809, %v3719
      %3721 = vmatprep.mubr.bf16.mxu0 %v2077
      %3722 = vmatmul.mubr.bf16.gmra.mxu0 %v2076
      %v3723 = vpop.f32.mrf.mxu0
      %v3724 = vadd.f32 %v805, %v3723
      %v3725 = vpop.f32.mrf.mxu0
      %v3726 = vadd.f32 %v809, %v3725
      %v3727 = vpop.f32.mrf.mxu0
      %v3728 = vadd.f32 %v805, %v3727
      %v3729 = vpop.f32.mrf.mxu0
      %v3730 = vadd.f32 %v809, %v3729
      %3731 = vmatprep.mubr.bf16.mxu0 %v2088
      %3732 = vmatmul.mubr.bf16.gmra.mxu0 %v2087
      %v3733 = vpop.f32.mrf.mxu0
      %v3734 = vadd.f32 %v805, %v3733
      %v3735 = vpop.f32.mrf.mxu0
      %v3736 = vadd.f32 %v809, %v3735
      %v3737 = vpop.f32.mrf.mxu0
      %v3738 = vadd.f32 %v805, %v3737
      %v3739 = vpop.f32.mrf.mxu0
      %v3740 = vadd.f32 %v809, %v3739
      %3741 = vmatprep.mubr.bf16.mxu0 %v2099
      %3742 = vmatmul.mubr.bf16.gmra.mxu0 %v2098
      %v3743 = vpop.f32.mrf.mxu0
      %v3744 = vadd.f32 %v805, %v3743
      %v3745 = vpop.f32.mrf.mxu0
      %v3746 = vadd.f32 %v809, %v3745
      %v3747 = vpop.f32.mrf.mxu0
      %v3748 = vadd.f32 %v805, %v3747
      %v3749 = vpop.f32.mrf.mxu0
      %v3750 = vadd.f32 %v809, %v3749
      %3751 = vmatprep.mubr.bf16.mxu0 %v2110
      %3752 = vmatmul.mubr.bf16.gmra.mxu0 %v2109
      %v3753 = vpop.f32.mrf.mxu0
      %v3754 = vadd.f32 %v805, %v3753
      %v3755 = vpop.f32.mrf.mxu0
      %v3756 = vadd.f32 %v809, %v3755
      %v3757 = vpop.f32.mrf.mxu0
      %v3758 = vadd.f32 %v805, %v3757
      %v3759 = vpop.f32.mrf.mxu0
      %v3760 = vadd.f32 %v809, %v3759
      %3761 = vmatprep.mubr.bf16.mxu0 %v2121
      %3762 = vmatmul.mubr.bf16.gmra.mxu0 %v2120
      %v3763 = vpop.f32.mrf.mxu0
      %v3764 = vadd.f32 %v805, %v3763
      %v3765 = vpop.f32.mrf.mxu0
      %v3766 = vadd.f32 %v809, %v3765
      %v3767 = vpop.f32.mrf.mxu0
      %v3768 = vadd.f32 %v805, %v3767
      %v3769 = vpop.f32.mrf.mxu0
      %v3770 = vadd.f32 %v809, %v3769
      %3771 = vmatprep.mubr.bf16.mxu0 %v2132
      %3772 = vmatmul.mubr.bf16.gmra.mxu0 %v2131
      %v3773 = vpop.f32.mrf.mxu0
      %v3774 = vadd.f32 %v805, %v3773
      %v3775 = vpop.f32.mrf.mxu0
      %v3776 = vadd.f32 %v809, %v3775
      %v3777 = vpop.f32.mrf.mxu0
      %v3778 = vadd.f32 %v805, %v3777
      %v3779 = vpop.f32.mrf.mxu0
      %v3780 = vadd.f32 %v809, %v3779
      %3781 = vmatprep.mubr.bf16.mxu0 %v2143
      %3782 = vmatmul.mubr.bf16.gmra.mxu0 %v2142
      %v3783 = vpop.f32.mrf.mxu0
      %v3784 = vadd.f32 %v805, %v3783
      %v3785 = vpop.f32.mrf.mxu0
      %v3786 = vadd.f32 %v809, %v3785
      %v3787 = vpop.f32.mrf.mxu0
      %v3788 = vadd.f32 %v805, %v3787
      %v3789 = vpop.f32.mrf.mxu0
      %v3790 = vadd.f32 %v809, %v3789
      %3791 = vmatprep.mubr.bf16.mxu0 %v2154
      %3792 = vmatmul.mubr.bf16.gmra.mxu0 %v2153
      %v3793 = vpop.f32.mrf.mxu0
      %v3794 = vadd.f32 %v805, %v3793
      %v3795 = vpop.f32.mrf.mxu0
      %v3796 = vadd.f32 %v809, %v3795
      %v3797 = vpop.f32.mrf.mxu0
      %v3798 = vadd.f32 %v805, %v3797
      %v3799 = vpop.f32.mrf.mxu0
      %v3800 = vadd.f32 %v809, %v3799
      %3801 = vmatprep.mubr.bf16.mxu0 %v2165
      %3802 = vmatmul.mubr.bf16.gmra.mxu0 %v2164
      %v3803 = vpop.f32.mrf.mxu0
      %v3804 = vadd.f32 %v805, %v3803
      %v3805 = vpop.f32.mrf.mxu0
      %v3806 = vadd.f32 %v809, %v3805
      %v3807 = vpop.f32.mrf.mxu0
      %v3808 = vadd.f32 %v805, %v3807
      %v3809 = vpop.f32.mrf.mxu0
      %v3810 = vadd.f32 %v809, %v3809
      %3811 = vmatprep.mubr.bf16.mxu0 %v2176
      %3812 = vmatmul.mubr.bf16.gmra.mxu0 %v2175
      %v3813 = vpop.f32.mrf.mxu0
      %v3814 = vadd.f32 %v805, %v3813
      %v3815 = vpop.f32.mrf.mxu0
      %v3816 = vadd.f32 %v809, %v3815
      %v3817 = vpop.f32.mrf.mxu0
      %v3818 = vadd.f32 %v805, %v3817
      %v3819 = vpop.f32.mrf.mxu0
      %v3820 = vadd.f32 %v809, %v3819
      %3821 = vmatprep.mubr.bf16.mxu0 %v2187
      %3822 = vmatmul.mubr.bf16.gmra.mxu0 %v2186
      %v3823 = vpop.f32.mrf.mxu0
      %v3824 = vadd.f32 %v805, %v3823
      %v3825 = vpop.f32.mrf.mxu0
      %v3826 = vadd.f32 %v809, %v3825
      %v3827 = vpop.f32.mrf.mxu0
      %v3828 = vadd.f32 %v805, %v3827
      %v3829 = vpop.f32.mrf.mxu0
      %v3830 = vadd.f32 %v809, %v3829
      %3831 = vmatprep.mubr.bf16.mxu0 %v2198
      %3832 = vmatmul.mubr.bf16.gmra.mxu0 %v2197
      %v3833 = vpop.f32.mrf.mxu0
      %v3834 = vadd.f32 %v805, %v3833
      %v3835 = vpop.f32.mrf.mxu0
      %v3836 = vadd.f32 %v809, %v3835
      %v3837 = vpop.f32.mrf.mxu0
      %v3838 = vadd.f32 %v805, %v3837
      %v3839 = vpop.f32.mrf.mxu0
      %v3840 = vadd.f32 %v809, %v3839
      %3841 = vmatprep.mubr.bf16.mxu0 %v2209
      %3842 = vmatmul.mubr.bf16.gmra.mxu0 %v2208
      %v3843 = vpop.f32.mrf.mxu0
      %v3844 = vadd.f32 %v805, %v3843
      %v3845 = vpop.f32.mrf.mxu0
      %v3846 = vadd.f32 %v809, %v3845
      %v3847 = vpop.f32.mrf.mxu0
      %v3848 = vadd.f32 %v805, %v3847
      %v3849 = vpop.f32.mrf.mxu0
      %v3850 = vadd.f32 %v809, %v3849
      %3851 = vmatprep.mubr.bf16.mxu0 %v2220
      %3852 = vmatmul.mubr.bf16.gmra.mxu0 %v2219
      %v3853 = vpop.f32.mrf.mxu0
      %v3854 = vadd.f32 %v805, %v3853
      %v3855 = vpop.f32.mrf.mxu0
      %v3856 = vadd.f32 %v809, %v3855
      %v3857 = vpop.f32.mrf.mxu0
      %v3858 = vadd.f32 %v805, %v3857
      %v3859 = vpop.f32.mrf.mxu0
      %v3860 = vadd.f32 %v809, %v3859
      %3861 = vmatprep.mubr.bf16.mxu0 %v2231
      %3862 = vmatmul.mubr.bf16.gmra.mxu0 %v2230
      %v3863 = vpop.f32.mrf.mxu0
      %v3864 = vadd.f32 %v805, %v3863
      %v3865 = vpop.f32.mrf.mxu0
      %v3866 = vadd.f32 %v809, %v3865
      %v3867 = vpop.f32.mrf.mxu0
      %v3868 = vadd.f32 %v805, %v3867
      %v3869 = vpop.f32.mrf.mxu0
      %v3870 = vadd.f32 %v809, %v3869
      %3871 = vmatprep.mubr.bf16.mxu0 %v2242
      %3872 = vmatmul.mubr.bf16.gmra.mxu0 %v2241
      %v3873 = vpop.f32.mrf.mxu0
      %v3874 = vadd.f32 %v805, %v3873
      %v3875 = vpop.f32.mrf.mxu0
      %v3876 = vadd.f32 %v809, %v3875
      %v3877 = vpop.f32.mrf.mxu0
      %v3878 = vadd.f32 %v805, %v3877
      %v3879 = vpop.f32.mrf.mxu0
      %v3880 = vadd.f32 %v809, %v3879
      %3881 = vdwg.mxu0
      %3882 = vmatprep.subr.bf16.mxu0 %v3135
      %3883 = vmatpush1.bf16.msra.mxu0 %v3134
      %3884 = vmatprep.subr.bf16.mxu0 %v3133
      %3885 = vmatpush1.bf16.msra.mxu0 %v3132
      %3886 = vmatprep.subr.bf16.mxu0 %v3131
      %3887 = vmatpush1.bf16.msra.mxu0 %v3130
      %3888 = vmatprep.subr.bf16.mxu0 %v3129
      %3889 = vmatpush1.bf16.msra.mxu0 %v3128
      %3890 = vmatprep.subr.bf16.mxu0 %v3127
      %3891 = vmatpush1.bf16.msra.mxu0 %v3126
      %3892 = vmatprep.subr.bf16.mxu0 %v3125
      %3893 = vmatpush1.bf16.msra.mxu0 %v3124
      %3894 = vmatprep.subr.bf16.mxu0 %v3123
      %3895 = vmatpush1.bf16.msra.mxu0 %v3122
      %3896 = vmatprep.subr.bf16.mxu0 %v3121
      %3897 = vmatpush1.bf16.msra.mxu0 %v3120
      %3898 = vmatprep.subr.bf16.mxu0 %v3151
      %3899 = vmatpush2.bf16.msra.mxu0 %v3150
      %3900 = vmatprep.subr.bf16.mxu0 %v3149
      %3901 = vmatpush2.bf16.msra.mxu0 %v3148
      %3902 = vmatprep.subr.bf16.mxu0 %v3147
      %3903 = vmatpush2.bf16.msra.mxu0 %v3146
      %3904 = vmatprep.subr.bf16.mxu0 %v3145
      %3905 = vmatpush2.bf16.msra.mxu0 %v3144
      %3906 = vmatprep.subr.bf16.mxu0 %v3143
      %3907 = vmatpush2.bf16.msra.mxu0 %v3142
      %3908 = vmatprep.subr.bf16.mxu0 %v3141
      %3909 = vmatpush2.bf16.msra.mxu0 %v3140
      %3910 = vmatprep.subr.bf16.mxu0 %v3139
      %3911 = vmatpush2.bf16.msra.mxu0 %v3138
      %3912 = vmatprep.subr.bf16.mxu0 %v3137
      %3913 = vmatpush2.bf16.msra.mxu0 %v3136
      %3914 = vmatprep.mubr.bf16.mxu0 %v1903
      %3915 = vmatmul.mubr.bf16.gmra.mxu0 %v1902
      %v3916 = vpop.f32.mrf.mxu0
      %v3917 = vadd.f32 %v3564, %v3916
      %v3918 = vpop.f32.mrf.mxu0
      %v3919 = vadd.f32 %v3566, %v3918
      %v3920 = vpop.f32.mrf.mxu0
      %v3921 = vadd.f32 %v3568, %v3920
      %v3922 = vpop.f32.mrf.mxu0
      %v3923 = vadd.f32 %v3570, %v3922
      %3924 = vmatprep.mubr.bf16.mxu0 %v1914
      %3925 = vmatmul.mubr.bf16.gmra.mxu0 %v1913
      %v3926 = vpop.f32.mrf.mxu0
      %v3927 = vadd.f32 %v3574, %v3926
      %v3928 = vpop.f32.mrf.mxu0
      %v3929 = vadd.f32 %v3576, %v3928
      %v3930 = vpop.f32.mrf.mxu0
      %v3931 = vadd.f32 %v3578, %v3930
      %v3932 = vpop.f32.mrf.mxu0
      %v3933 = vadd.f32 %v3580, %v3932
      %3934 = vmatprep.mubr.bf16.mxu0 %v1925
      %3935 = vmatmul.mubr.bf16.gmra.mxu0 %v1924
      %v3936 = vpop.f32.mrf.mxu0
      %v3937 = vadd.f32 %v3584, %v3936
      %v3938 = vpop.f32.mrf.mxu0
      %v3939 = vadd.f32 %v3586, %v3938
      %v3940 = vpop.f32.mrf.mxu0
      %v3941 = vadd.f32 %v3588, %v3940
      %v3942 = vpop.f32.mrf.mxu0
      %v3943 = vadd.f32 %v3590, %v3942
      %3944 = vmatprep.mubr.bf16.mxu0 %v1936
      %3945 = vmatmul.mubr.bf16.gmra.mxu0 %v1935
      %v3946 = vpop.f32.mrf.mxu0
      %v3947 = vadd.f32 %v3594, %v3946
      %v3948 = vpop.f32.mrf.mxu0
      %v3949 = vadd.f32 %v3596, %v3948
      %v3950 = vpop.f32.mrf.mxu0
      %v3951 = vadd.f32 %v3598, %v3950
      %v3952 = vpop.f32.mrf.mxu0
      %v3953 = vadd.f32 %v3600, %v3952
      %3954 = vmatprep.mubr.bf16.mxu0 %v1947
      %3955 = vmatmul.mubr.bf16.gmra.mxu0 %v1946
      %v3956 = vpop.f32.mrf.mxu0
      %v3957 = vadd.f32 %v3604, %v3956
      %v3958 = vpop.f32.mrf.mxu0
      %v3959 = vadd.f32 %v3606, %v3958
      %v3960 = vpop.f32.mrf.mxu0
      %v3961 = vadd.f32 %v3608, %v3960
      %v3962 = vpop.f32.mrf.mxu0
      %v3963 = vadd.f32 %v3610, %v3962
      %3964 = vmatprep.mubr.bf16.mxu0 %v1958
      %3965 = vmatmul.mubr.bf16.gmra.mxu0 %v1957
      %v3966 = vpop.f32.mrf.mxu0
      %v3967 = vadd.f32 %v3614, %v3966
      %v3968 = vpop.f32.mrf.mxu0
      %v3969 = vadd.f32 %v3616, %v3968
      %v3970 = vpop.f32.mrf.mxu0
      %v3971 = vadd.f32 %v3618, %v3970
      %v3972 = vpop.f32.mrf.mxu0
      %v3973 = vadd.f32 %v3620, %v3972
      %3974 = vmatprep.mubr.bf16.mxu0 %v1969
      %3975 = vmatmul.mubr.bf16.gmra.mxu0 %v1968
      %v3976 = vpop.f32.mrf.mxu0
      %v3977 = vadd.f32 %v3624, %v3976
      %v3978 = vpop.f32.mrf.mxu0
      %v3979 = vadd.f32 %v3626, %v3978
      %v3980 = vpop.f32.mrf.mxu0
      %v3981 = vadd.f32 %v3628, %v3980
      %v3982 = vpop.f32.mrf.mxu0
      %v3983 = vadd.f32 %v3630, %v3982
      %3984 = vmatprep.mubr.bf16.mxu0 %v1980
      %3985 = vmatmul.mubr.bf16.gmra.mxu0 %v1979
      %v3986 = vpop.f32.mrf.mxu0
      %v3987 = vadd.f32 %v3634, %v3986
      %v3988 = vpop.f32.mrf.mxu0
      %v3989 = vadd.f32 %v3636, %v3988
      %v3990 = vpop.f32.mrf.mxu0
      %v3991 = vadd.f32 %v3638, %v3990
      %v3992 = vpop.f32.mrf.mxu0
      %v3993 = vadd.f32 %v3640, %v3992
      %3994 = vmatprep.mubr.bf16.mxu0 %v1991
      %3995 = vmatmul.mubr.bf16.gmra.mxu0 %v1990
      %v3996 = vpop.f32.mrf.mxu0
      %v3997 = vadd.f32 %v3644, %v3996
      %v3998 = vpop.f32.mrf.mxu0
      %v3999 = vadd.f32 %v3646, %v3998
      %v4000 = vpop.f32.mrf.mxu0
      %v4001 = vadd.f32 %v3648, %v4000
      %v4002 = vpop.f32.mrf.mxu0
      %v4003 = vadd.f32 %v3650, %v4002
      %4004 = vmatprep.mubr.bf16.mxu0 %v2002
      %4005 = vmatmul.mubr.bf16.gmra.mxu0 %v2001
      %v4006 = vpop.f32.mrf.mxu0
      %v4007 = vadd.f32 %v3654, %v4006
      %v4008 = vpop.f32.mrf.mxu0
      %v4009 = vadd.f32 %v3656, %v4008
      %v4010 = vpop.f32.mrf.mxu0
      %v4011 = vadd.f32 %v3658, %v4010
      %v4012 = vpop.f32.mrf.mxu0
      %v4013 = vadd.f32 %v3660, %v4012
      %4014 = vmatprep.mubr.bf16.mxu0 %v2013
      %4015 = vmatmul.mubr.bf16.gmra.mxu0 %v2012
      %v4016 = vpop.f32.mrf.mxu0
      %v4017 = vadd.f32 %v3664, %v4016
      %v4018 = vpop.f32.mrf.mxu0
      %v4019 = vadd.f32 %v3666, %v4018
      %v4020 = vpop.f32.mrf.mxu0
      %v4021 = vadd.f32 %v3668, %v4020
      %v4022 = vpop.f32.mrf.mxu0
      %v4023 = vadd.f32 %v3670, %v4022
      %4024 = vmatprep.mubr.bf16.mxu0 %v2024
      %4025 = vmatmul.mubr.bf16.gmra.mxu0 %v2023
      %v4026 = vpop.f32.mrf.mxu0
      %v4027 = vadd.f32 %v3674, %v4026
      %v4028 = vpop.f32.mrf.mxu0
      %v4029 = vadd.f32 %v3676, %v4028
      %v4030 = vpop.f32.mrf.mxu0
      %v4031 = vadd.f32 %v3678, %v4030
      %v4032 = vpop.f32.mrf.mxu0
      %v4033 = vadd.f32 %v3680, %v4032
      %4034 = vmatprep.mubr.bf16.mxu0 %v2035
      %4035 = vmatmul.mubr.bf16.gmra.mxu0 %v2034
      %v4036 = vpop.f32.mrf.mxu0
      %v4037 = vadd.f32 %v3684, %v4036
      %v4038 = vpop.f32.mrf.mxu0
      %v4039 = vadd.f32 %v3686, %v4038
      %v4040 = vpop.f32.mrf.mxu0
      %v4041 = vadd.f32 %v3688, %v4040
      %v4042 = vpop.f32.mrf.mxu0
      %v4043 = vadd.f32 %v3690, %v4042
      %4044 = vmatprep.mubr.bf16.mxu0 %v2046
      %4045 = vmatmul.mubr.bf16.gmra.mxu0 %v2045
      %v4046 = vpop.f32.mrf.mxu0
      %v4047 = vadd.f32 %v3694, %v4046
      %v4048 = vpop.f32.mrf.mxu0
      %v4049 = vadd.f32 %v3696, %v4048
      %v4050 = vpop.f32.mrf.mxu0
      %v4051 = vadd.f32 %v3698, %v4050
      %v4052 = vpop.f32.mrf.mxu0
      %v4053 = vadd.f32 %v3700, %v4052
      %4054 = vmatprep.mubr.bf16.mxu0 %v2057
      %4055 = vmatmul.mubr.bf16.gmra.mxu0 %v2056
      %v4056 = vpop.f32.mrf.mxu0
      %v4057 = vadd.f32 %v3704, %v4056
      %v4058 = vpop.f32.mrf.mxu0
      %v4059 = vadd.f32 %v3706, %v4058
      %v4060 = vpop.f32.mrf.mxu0
      %v4061 = vadd.f32 %v3708, %v4060
      %v4062 = vpop.f32.mrf.mxu0
      %v4063 = vadd.f32 %v3710, %v4062
      %4064 = vmatprep.mubr.bf16.mxu0 %v2068
      %4065 = vmatmul.mubr.bf16.gmra.mxu0 %v2067
      %v4066 = vpop.f32.mrf.mxu0
      %v4067 = vadd.f32 %v3714, %v4066
      %v4068 = vpop.f32.mrf.mxu0
      %v4069 = vadd.f32 %v3716, %v4068
      %v4070 = vpop.f32.mrf.mxu0
      %v4071 = vadd.f32 %v3718, %v4070
      %v4072 = vpop.f32.mrf.mxu0
      %v4073 = vadd.f32 %v3720, %v4072
      %4074 = vmatprep.mubr.bf16.mxu0 %v2079
      %4075 = vmatmul.mubr.bf16.gmra.mxu0 %v2078
      %v4076 = vpop.f32.mrf.mxu0
      %v4077 = vadd.f32 %v3724, %v4076
      %v4078 = vpop.f32.mrf.mxu0
      %v4079 = vadd.f32 %v3726, %v4078
      %v4080 = vpop.f32.mrf.mxu0
      %v4081 = vadd.f32 %v3728, %v4080
      %v4082 = vpop.f32.mrf.mxu0
      %v4083 = vadd.f32 %v3730, %v4082
      %4084 = vmatprep.mubr.bf16.mxu0 %v2090
      %4085 = vmatmul.mubr.bf16.gmra.mxu0 %v2089
      %v4086 = vpop.f32.mrf.mxu0
      %v4087 = vadd.f32 %v3734, %v4086
      %v4088 = vpop.f32.mrf.mxu0
      %v4089 = vadd.f32 %v3736, %v4088
      %v4090 = vpop.f32.mrf.mxu0
      %v4091 = vadd.f32 %v3738, %v4090
      %v4092 = vpop.f32.mrf.mxu0
      %v4093 = vadd.f32 %v3740, %v4092
      %4094 = vmatprep.mubr.bf16.mxu0 %v2101
      %4095 = vmatmul.mubr.bf16.gmra.mxu0 %v2100
      %v4096 = vpop.f32.mrf.mxu0
      %v4097 = vadd.f32 %v3744, %v4096
      %v4098 = vpop.f32.mrf.mxu0
      %v4099 = vadd.f32 %v3746, %v4098
      %v4100 = vpop.f32.mrf.mxu0
      %v4101 = vadd.f32 %v3748, %v4100
      %v4102 = vpop.f32.mrf.mxu0
      %v4103 = vadd.f32 %v3750, %v4102
      %4104 = vmatprep.mubr.bf16.mxu0 %v2112
      %4105 = vmatmul.mubr.bf16.gmra.mxu0 %v2111
      %v4106 = vpop.f32.mrf.mxu0
      %v4107 = vadd.f32 %v3754, %v4106
      %v4108 = vpop.f32.mrf.mxu0
      %v4109 = vadd.f32 %v3756, %v4108
      %v4110 = vpop.f32.mrf.mxu0
      %v4111 = vadd.f32 %v3758, %v4110
      %v4112 = vpop.f32.mrf.mxu0
      %v4113 = vadd.f32 %v3760, %v4112
      %4114 = vmatprep.mubr.bf16.mxu0 %v2123
      %4115 = vmatmul.mubr.bf16.gmra.mxu0 %v2122
      %v4116 = vpop.f32.mrf.mxu0
      %v4117 = vadd.f32 %v3764, %v4116
      %v4118 = vpop.f32.mrf.mxu0
      %v4119 = vadd.f32 %v3766, %v4118
      %v4120 = vpop.f32.mrf.mxu0
      %v4121 = vadd.f32 %v3768, %v4120
      %v4122 = vpop.f32.mrf.mxu0
      %v4123 = vadd.f32 %v3770, %v4122
      %4124 = vmatprep.mubr.bf16.mxu0 %v2134
      %4125 = vmatmul.mubr.bf16.gmra.mxu0 %v2133
      %v4126 = vpop.f32.mrf.mxu0
      %v4127 = vadd.f32 %v3774, %v4126
      %v4128 = vpop.f32.mrf.mxu0
      %v4129 = vadd.f32 %v3776, %v4128
      %v4130 = vpop.f32.mrf.mxu0
      %v4131 = vadd.f32 %v3778, %v4130
      %v4132 = vpop.f32.mrf.mxu0
      %v4133 = vadd.f32 %v3780, %v4132
      %4134 = vmatprep.mubr.bf16.mxu0 %v2145
      %4135 = vmatmul.mubr.bf16.gmra.mxu0 %v2144
      %v4136 = vpop.f32.mrf.mxu0
      %v4137 = vadd.f32 %v3784, %v4136
      %v4138 = vpop.f32.mrf.mxu0
      %v4139 = vadd.f32 %v3786, %v4138
      %v4140 = vpop.f32.mrf.mxu0
      %v4141 = vadd.f32 %v3788, %v4140
      %v4142 = vpop.f32.mrf.mxu0
      %v4143 = vadd.f32 %v3790, %v4142
      %4144 = vmatprep.mubr.bf16.mxu0 %v2156
      %4145 = vmatmul.mubr.bf16.gmra.mxu0 %v2155
      %v4146 = vpop.f32.mrf.mxu0
      %v4147 = vadd.f32 %v3794, %v4146
      %v4148 = vpop.f32.mrf.mxu0
      %v4149 = vadd.f32 %v3796, %v4148
      %v4150 = vpop.f32.mrf.mxu0
      %v4151 = vadd.f32 %v3798, %v4150
      %v4152 = vpop.f32.mrf.mxu0
      %v4153 = vadd.f32 %v3800, %v4152
      %4154 = vmatprep.mubr.bf16.mxu0 %v2167
      %4155 = vmatmul.mubr.bf16.gmra.mxu0 %v2166
      %v4156 = vpop.f32.mrf.mxu0
      %v4157 = vadd.f32 %v3804, %v4156
      %v4158 = vpop.f32.mrf.mxu0
      %v4159 = vadd.f32 %v3806, %v4158
      %v4160 = vpop.f32.mrf.mxu0
      %v4161 = vadd.f32 %v3808, %v4160
      %v4162 = vpop.f32.mrf.mxu0
      %v4163 = vadd.f32 %v3810, %v4162
      %4164 = vmatprep.mubr.bf16.mxu0 %v2178
      %4165 = vmatmul.mubr.bf16.gmra.mxu0 %v2177
      %v4166 = vpop.f32.mrf.mxu0
      %v4167 = vadd.f32 %v3814, %v4166
      %v4168 = vpop.f32.mrf.mxu0
      %v4169 = vadd.f32 %v3816, %v4168
      %v4170 = vpop.f32.mrf.mxu0
      %v4171 = vadd.f32 %v3818, %v4170
      %v4172 = vpop.f32.mrf.mxu0
      %v4173 = vadd.f32 %v3820, %v4172
      %4174 = vmatprep.mubr.bf16.mxu0 %v2189
      %4175 = vmatmul.mubr.bf16.gmra.mxu0 %v2188
      %v4176 = vpop.f32.mrf.mxu0
      %v4177 = vadd.f32 %v3824, %v4176
      %v4178 = vpop.f32.mrf.mxu0
      %v4179 = vadd.f32 %v3826, %v4178
      %v4180 = vpop.f32.mrf.mxu0
      %v4181 = vadd.f32 %v3828, %v4180
      %v4182 = vpop.f32.mrf.mxu0
      %v4183 = vadd.f32 %v3830, %v4182
      %4184 = vmatprep.mubr.bf16.mxu0 %v2200
      %4185 = vmatmul.mubr.bf16.gmra.mxu0 %v2199
      %v4186 = vpop.f32.mrf.mxu0
      %v4187 = vadd.f32 %v3834, %v4186
      %v4188 = vpop.f32.mrf.mxu0
      %v4189 = vadd.f32 %v3836, %v4188
      %v4190 = vpop.f32.mrf.mxu0
      %v4191 = vadd.f32 %v3838, %v4190
      %v4192 = vpop.f32.mrf.mxu0
      %v4193 = vadd.f32 %v3840, %v4192
      %4194 = vmatprep.mubr.bf16.mxu0 %v2211
      %4195 = vmatmul.mubr.bf16.gmra.mxu0 %v2210
      %v4196 = vpop.f32.mrf.mxu0
      %v4197 = vadd.f32 %v3844, %v4196
      %v4198 = vpop.f32.mrf.mxu0
      %v4199 = vadd.f32 %v3846, %v4198
      %v4200 = vpop.f32.mrf.mxu0
      %v4201 = vadd.f32 %v3848, %v4200
      %v4202 = vpop.f32.mrf.mxu0
      %v4203 = vadd.f32 %v3850, %v4202
      %4204 = vmatprep.mubr.bf16.mxu0 %v2222
      %4205 = vmatmul.mubr.bf16.gmra.mxu0 %v2221
      %v4206 = vpop.f32.mrf.mxu0
      %v4207 = vadd.f32 %v3854, %v4206
      %v4208 = vpop.f32.mrf.mxu0
      %v4209 = vadd.f32 %v3856, %v4208
      %v4210 = vpop.f32.mrf.mxu0
      %v4211 = vadd.f32 %v3858, %v4210
      %v4212 = vpop.f32.mrf.mxu0
      %v4213 = vadd.f32 %v3860, %v4212
      %4214 = vmatprep.mubr.bf16.mxu0 %v2233
      %4215 = vmatmul.mubr.bf16.gmra.mxu0 %v2232
      %v4216 = vpop.f32.mrf.mxu0
      %v4217 = vadd.f32 %v3864, %v4216
      %v4218 = vpop.f32.mrf.mxu0
      %v4219 = vadd.f32 %v3866, %v4218
      %v4220 = vpop.f32.mrf.mxu0
      %v4221 = vadd.f32 %v3868, %v4220
      %v4222 = vpop.f32.mrf.mxu0
      %v4223 = vadd.f32 %v3870, %v4222
      %4224 = vmatprep.mubr.bf16.mxu0 %v2244
      %4225 = vmatmul.mubr.bf16.gmra.mxu0 %v2243
      %v4226 = vpop.f32.mrf.mxu0
      %v4227 = vadd.f32 %v3874, %v4226
      %v4228 = vpop.f32.mrf.mxu0
      %v4229 = vadd.f32 %v3876, %v4228
      %v4230 = vpop.f32.mrf.mxu0
      %v4231 = vadd.f32 %v3878, %v4230
      %v4232 = vpop.f32.mrf.mxu0
      %v4233 = vadd.f32 %v3880, %v4232
      %4234 = vdwg.mxu0
      %4235 = vmatprep.subr.bf16.mxu0 %v3167
      %4236 = vmatpush1.bf16.msra.mxu0 %v3166
      %4237 = vmatprep.subr.bf16.mxu0 %v3165
      %4238 = vmatpush1.bf16.msra.mxu0 %v3164
      %4239 = vmatprep.subr.bf16.mxu0 %v3163
      %4240 = vmatpush1.bf16.msra.mxu0 %v3162
      %4241 = vmatprep.subr.bf16.mxu0 %v3161
      %4242 = vmatpush1.bf16.msra.mxu0 %v3160
      %4243 = vmatprep.subr.bf16.mxu0 %v3159
      %4244 = vmatpush1.bf16.msra.mxu0 %v3158
      %4245 = vmatprep.subr.bf16.mxu0 %v3157
      %4246 = vmatpush1.bf16.msra.mxu0 %v3156
      %4247 = vmatprep.subr.bf16.mxu0 %v3155
      %4248 = vmatpush1.bf16.msra.mxu0 %v3154
      %4249 = vmatprep.subr.bf16.mxu0 %v3153
      %4250 = vmatpush1.bf16.msra.mxu0 %v3152
      %4251 = vmatprep.subr.bf16.mxu0 %v3183
      %4252 = vmatpush2.bf16.msra.mxu0 %v3182
      %4253 = vmatprep.subr.bf16.mxu0 %v3181
      %4254 = vmatpush2.bf16.msra.mxu0 %v3180
      %4255 = vmatprep.subr.bf16.mxu0 %v3179
      %4256 = vmatpush2.bf16.msra.mxu0 %v3178
      %4257 = vmatprep.subr.bf16.mxu0 %v3177
      %4258 = vmatpush2.bf16.msra.mxu0 %v3176
      %4259 = vmatprep.subr.bf16.mxu0 %v3175
      %4260 = vmatpush2.bf16.msra.mxu0 %v3174
      %4261 = vmatprep.subr.bf16.mxu0 %v3173
      %4262 = vmatpush2.bf16.msra.mxu0 %v3172
      %4263 = vmatprep.subr.bf16.mxu0 %v3171
      %4264 = vmatpush2.bf16.msra.mxu0 %v3170
      %4265 = vmatprep.subr.bf16.mxu0 %v3169
      %4266 = vmatpush2.bf16.msra.mxu0 %v3168
      %4267 = vmatprep.mubr.bf16.mxu0 %v1905
      %4268 = vmatmul.mubr.bf16.gmra.mxu0 %v1904
      %v4269 = vpop.f32.mrf.mxu0
      %v4270 = vadd.f32 %v3917, %v4269
      %v4271 = vpop.f32.mrf.mxu0
      %v4272 = vadd.f32 %v3919, %v4271
      %v4273 = vpop.f32.mrf.mxu0
      %v4274 = vadd.f32 %v3921, %v4273
      %v4275 = vpop.f32.mrf.mxu0
      %v4276 = vadd.f32 %v3923, %v4275
      %4277 = vmatprep.mubr.bf16.mxu0 %v1916
      %4278 = vmatmul.mubr.bf16.gmra.mxu0 %v1915
      %v4279 = vpop.f32.mrf.mxu0
      %v4280 = vadd.f32 %v3927, %v4279
      %v4281 = vpop.f32.mrf.mxu0
      %v4282 = vadd.f32 %v3929, %v4281
      %v4283 = vpop.f32.mrf.mxu0
      %v4284 = vadd.f32 %v3931, %v4283
      %v4285 = vpop.f32.mrf.mxu0
      %v4286 = vadd.f32 %v3933, %v4285
      %4287 = vmatprep.mubr.bf16.mxu0 %v1927
      %4288 = vmatmul.mubr.bf16.gmra.mxu0 %v1926
      %v4289 = vpop.f32.mrf.mxu0
      %v4290 = vadd.f32 %v3937, %v4289
      %v4291 = vpop.f32.mrf.mxu0
      %v4292 = vadd.f32 %v3939, %v4291
      %v4293 = vpop.f32.mrf.mxu0
      %v4294 = vadd.f32 %v3941, %v4293
      %v4295 = vpop.f32.mrf.mxu0
      %v4296 = vadd.f32 %v3943, %v4295
      %4297 = vmatprep.mubr.bf16.mxu0 %v1938
      %4298 = vmatmul.mubr.bf16.gmra.mxu0 %v1937
      %v4299 = vpop.f32.mrf.mxu0
      %v4300 = vadd.f32 %v3947, %v4299
      %v4301 = vpop.f32.mrf.mxu0
      %v4302 = vadd.f32 %v3949, %v4301
      %v4303 = vpop.f32.mrf.mxu0
      %v4304 = vadd.f32 %v3951, %v4303
      %v4305 = vpop.f32.mrf.mxu0
      %v4306 = vadd.f32 %v3953, %v4305
      %4307 = vmatprep.mubr.bf16.mxu0 %v1949
      %4308 = vmatmul.mubr.bf16.gmra.mxu0 %v1948
      %v4309 = vpop.f32.mrf.mxu0
      %v4310 = vadd.f32 %v3957, %v4309
      %v4311 = vpop.f32.mrf.mxu0
      %v4312 = vadd.f32 %v3959, %v4311
      %v4313 = vpop.f32.mrf.mxu0
      %v4314 = vadd.f32 %v3961, %v4313
      %v4315 = vpop.f32.mrf.mxu0
      %v4316 = vadd.f32 %v3963, %v4315
      %4317 = vmatprep.mubr.bf16.mxu0 %v1960
      %4318 = vmatmul.mubr.bf16.gmra.mxu0 %v1959
      %v4319 = vpop.f32.mrf.mxu0
      %v4320 = vadd.f32 %v3967, %v4319
      %v4321 = vpop.f32.mrf.mxu0
      %v4322 = vadd.f32 %v3969, %v4321
      %v4323 = vpop.f32.mrf.mxu0
      %v4324 = vadd.f32 %v3971, %v4323
      %v4325 = vpop.f32.mrf.mxu0
      %v4326 = vadd.f32 %v3973, %v4325
      %4327 = vmatprep.mubr.bf16.mxu0 %v1971
      %4328 = vmatmul.mubr.bf16.gmra.mxu0 %v1970
      %v4329 = vpop.f32.mrf.mxu0
      %v4330 = vadd.f32 %v3977, %v4329
      %v4331 = vpop.f32.mrf.mxu0
      %v4332 = vadd.f32 %v3979, %v4331
      %v4333 = vpop.f32.mrf.mxu0
      %v4334 = vadd.f32 %v3981, %v4333
      %v4335 = vpop.f32.mrf.mxu0
      %v4336 = vadd.f32 %v3983, %v4335
      %4337 = vmatprep.mubr.bf16.mxu0 %v1982
      %4338 = vmatmul.mubr.bf16.gmra.mxu0 %v1981
      %v4339 = vpop.f32.mrf.mxu0
      %v4340 = vadd.f32 %v3987, %v4339
      %v4341 = vpop.f32.mrf.mxu0
      %v4342 = vadd.f32 %v3989, %v4341
      %v4343 = vpop.f32.mrf.mxu0
      %v4344 = vadd.f32 %v3991, %v4343
      %v4345 = vpop.f32.mrf.mxu0
      %v4346 = vadd.f32 %v3993, %v4345
      %4347 = vmatprep.mubr.bf16.mxu0 %v1993
      %4348 = vmatmul.mubr.bf16.gmra.mxu0 %v1992
      %v4349 = vpop.f32.mrf.mxu0
      %v4350 = vadd.f32 %v3997, %v4349
      %v4351 = vpop.f32.mrf.mxu0
      %v4352 = vadd.f32 %v3999, %v4351
      %v4353 = vpop.f32.mrf.mxu0
      %v4354 = vadd.f32 %v4001, %v4353
      %v4355 = vpop.f32.mrf.mxu0
      %v4356 = vadd.f32 %v4003, %v4355
      %4357 = vmatprep.mubr.bf16.mxu0 %v2004
      %4358 = vmatmul.mubr.bf16.gmra.mxu0 %v2003
      %v4359 = vpop.f32.mrf.mxu0
      %v4360 = vadd.f32 %v4007, %v4359
      %v4361 = vpop.f32.mrf.mxu0
      %v4362 = vadd.f32 %v4009, %v4361
      %v4363 = vpop.f32.mrf.mxu0
      %v4364 = vadd.f32 %v4011, %v4363
      %v4365 = vpop.f32.mrf.mxu0
      %v4366 = vadd.f32 %v4013, %v4365
      %4367 = vmatprep.mubr.bf16.mxu0 %v2015
      %4368 = vmatmul.mubr.bf16.gmra.mxu0 %v2014
      %v4369 = vpop.f32.mrf.mxu0
      %v4370 = vadd.f32 %v4017, %v4369
      %v4371 = vpop.f32.mrf.mxu0
      %v4372 = vadd.f32 %v4019, %v4371
      %v4373 = vpop.f32.mrf.mxu0
      %v4374 = vadd.f32 %v4021, %v4373
      %v4375 = vpop.f32.mrf.mxu0
      %v4376 = vadd.f32 %v4023, %v4375
      %4377 = vmatprep.mubr.bf16.mxu0 %v2026
      %4378 = vmatmul.mubr.bf16.gmra.mxu0 %v2025
      %v4379 = vpop.f32.mrf.mxu0
      %v4380 = vadd.f32 %v4027, %v4379
      %v4381 = vpop.f32.mrf.mxu0
      %v4382 = vadd.f32 %v4029, %v4381
      %v4383 = vpop.f32.mrf.mxu0
      %v4384 = vadd.f32 %v4031, %v4383
      %v4385 = vpop.f32.mrf.mxu0
      %v4386 = vadd.f32 %v4033, %v4385
      %4387 = vmatprep.mubr.bf16.mxu0 %v2037
      %4388 = vmatmul.mubr.bf16.gmra.mxu0 %v2036
      %v4389 = vpop.f32.mrf.mxu0
      %v4390 = vadd.f32 %v4037, %v4389
      %v4391 = vpop.f32.mrf.mxu0
      %v4392 = vadd.f32 %v4039, %v4391
      %v4393 = vpop.f32.mrf.mxu0
      %v4394 = vadd.f32 %v4041, %v4393
      %v4395 = vpop.f32.mrf.mxu0
      %v4396 = vadd.f32 %v4043, %v4395
      %4397 = vmatprep.mubr.bf16.mxu0 %v2048
      %4398 = vmatmul.mubr.bf16.gmra.mxu0 %v2047
      %v4399 = vpop.f32.mrf.mxu0
      %v4400 = vadd.f32 %v4047, %v4399
      %v4401 = vpop.f32.mrf.mxu0
      %v4402 = vadd.f32 %v4049, %v4401
      %v4403 = vpop.f32.mrf.mxu0
      %v4404 = vadd.f32 %v4051, %v4403
      %v4405 = vpop.f32.mrf.mxu0
      %v4406 = vadd.f32 %v4053, %v4405
      %4407 = vmatprep.mubr.bf16.mxu0 %v2059
      %4408 = vmatmul.mubr.bf16.gmra.mxu0 %v2058
      %v4409 = vpop.f32.mrf.mxu0
      %v4410 = vadd.f32 %v4057, %v4409
      %v4411 = vpop.f32.mrf.mxu0
      %v4412 = vadd.f32 %v4059, %v4411
      %v4413 = vpop.f32.mrf.mxu0
      %v4414 = vadd.f32 %v4061, %v4413
      %v4415 = vpop.f32.mrf.mxu0
      %v4416 = vadd.f32 %v4063, %v4415
      %4417 = vmatprep.mubr.bf16.mxu0 %v2070
      %4418 = vmatmul.mubr.bf16.gmra.mxu0 %v2069
      %v4419 = vpop.f32.mrf.mxu0
      %v4420 = vadd.f32 %v4067, %v4419
      %v4421 = vpop.f32.mrf.mxu0
      %v4422 = vadd.f32 %v4069, %v4421
      %v4423 = vpop.f32.mrf.mxu0
      %v4424 = vadd.f32 %v4071, %v4423
      %v4425 = vpop.f32.mrf.mxu0
      %v4426 = vadd.f32 %v4073, %v4425
      %4427 = vmatprep.mubr.bf16.mxu0 %v2081
      %4428 = vmatmul.mubr.bf16.gmra.mxu0 %v2080
      %v4429 = vpop.f32.mrf.mxu0
      %v4430 = vadd.f32 %v4077, %v4429
      %v4431 = vpop.f32.mrf.mxu0
      %v4432 = vadd.f32 %v4079, %v4431
      %v4433 = vpop.f32.mrf.mxu0
      %v4434 = vadd.f32 %v4081, %v4433
      %v4435 = vpop.f32.mrf.mxu0
      %v4436 = vadd.f32 %v4083, %v4435
      %4437 = vmatprep.mubr.bf16.mxu0 %v2092
      %4438 = vmatmul.mubr.bf16.gmra.mxu0 %v2091
      %v4439 = vpop.f32.mrf.mxu0
      %v4440 = vadd.f32 %v4087, %v4439
      %v4441 = vpop.f32.mrf.mxu0
      %v4442 = vadd.f32 %v4089, %v4441
      %v4443 = vpop.f32.mrf.mxu0
      %v4444 = vadd.f32 %v4091, %v4443
      %v4445 = vpop.f32.mrf.mxu0
      %v4446 = vadd.f32 %v4093, %v4445
      %4447 = vmatprep.mubr.bf16.mxu0 %v2103
      %4448 = vmatmul.mubr.bf16.gmra.mxu0 %v2102
      %v4449 = vpop.f32.mrf.mxu0
      %v4450 = vadd.f32 %v4097, %v4449
      %v4451 = vpop.f32.mrf.mxu0
      %v4452 = vadd.f32 %v4099, %v4451
      %v4453 = vpop.f32.mrf.mxu0
      %v4454 = vadd.f32 %v4101, %v4453
      %v4455 = vpop.f32.mrf.mxu0
      %v4456 = vadd.f32 %v4103, %v4455
      %4457 = vmatprep.mubr.bf16.mxu0 %v2114
      %4458 = vmatmul.mubr.bf16.gmra.mxu0 %v2113
      %v4459 = vpop.f32.mrf.mxu0
      %v4460 = vadd.f32 %v4107, %v4459
      %v4461 = vpop.f32.mrf.mxu0
      %v4462 = vadd.f32 %v4109, %v4461
      %v4463 = vpop.f32.mrf.mxu0
      %v4464 = vadd.f32 %v4111, %v4463
      %v4465 = vpop.f32.mrf.mxu0
      %v4466 = vadd.f32 %v4113, %v4465
      %4467 = vmatprep.mubr.bf16.mxu0 %v2125
      %4468 = vmatmul.mubr.bf16.gmra.mxu0 %v2124
      %v4469 = vpop.f32.mrf.mxu0
      %v4470 = vadd.f32 %v4117, %v4469
      %v4471 = vpop.f32.mrf.mxu0
      %v4472 = vadd.f32 %v4119, %v4471
      %v4473 = vpop.f32.mrf.mxu0
      %v4474 = vadd.f32 %v4121, %v4473
      %v4475 = vpop.f32.mrf.mxu0
      %v4476 = vadd.f32 %v4123, %v4475
      %4477 = vmatprep.mubr.bf16.mxu0 %v2136
      %4478 = vmatmul.mubr.bf16.gmra.mxu0 %v2135
      %v4479 = vpop.f32.mrf.mxu0
      %v4480 = vadd.f32 %v4127, %v4479
      %v4481 = vpop.f32.mrf.mxu0
      %v4482 = vadd.f32 %v4129, %v4481
      %v4483 = vpop.f32.mrf.mxu0
      %v4484 = vadd.f32 %v4131, %v4483
      %v4485 = vpop.f32.mrf.mxu0
      %v4486 = vadd.f32 %v4133, %v4485
      %4487 = vmatprep.mubr.bf16.mxu0 %v2147
      %4488 = vmatmul.mubr.bf16.gmra.mxu0 %v2146
      %v4489 = vpop.f32.mrf.mxu0
      %v4490 = vadd.f32 %v4137, %v4489
      %v4491 = vpop.f32.mrf.mxu0
      %v4492 = vadd.f32 %v4139, %v4491
      %v4493 = vpop.f32.mrf.mxu0
      %v4494 = vadd.f32 %v4141, %v4493
      %v4495 = vpop.f32.mrf.mxu0
      %v4496 = vadd.f32 %v4143, %v4495
      %4497 = vmatprep.mubr.bf16.mxu0 %v2158
      %4498 = vmatmul.mubr.bf16.gmra.mxu0 %v2157
      %v4499 = vpop.f32.mrf.mxu0
      %v4500 = vadd.f32 %v4147, %v4499
      %v4501 = vpop.f32.mrf.mxu0
      %v4502 = vadd.f32 %v4149, %v4501
      %v4503 = vpop.f32.mrf.mxu0
      %v4504 = vadd.f32 %v4151, %v4503
      %v4505 = vpop.f32.mrf.mxu0
      %v4506 = vadd.f32 %v4153, %v4505
      %4507 = vmatprep.mubr.bf16.mxu0 %v2169
      %4508 = vmatmul.mubr.bf16.gmra.mxu0 %v2168
      %v4509 = vpop.f32.mrf.mxu0
      %v4510 = vadd.f32 %v4157, %v4509
      %v4511 = vpop.f32.mrf.mxu0
      %v4512 = vadd.f32 %v4159, %v4511
      %v4513 = vpop.f32.mrf.mxu0
      %v4514 = vadd.f32 %v4161, %v4513
      %v4515 = vpop.f32.mrf.mxu0
      %v4516 = vadd.f32 %v4163, %v4515
      %4517 = vmatprep.mubr.bf16.mxu0 %v2180
      %4518 = vmatmul.mubr.bf16.gmra.mxu0 %v2179
      %v4519 = vpop.f32.mrf.mxu0
      %v4520 = vadd.f32 %v4167, %v4519
      %v4521 = vpop.f32.mrf.mxu0
      %v4522 = vadd.f32 %v4169, %v4521
      %v4523 = vpop.f32.mrf.mxu0
      %v4524 = vadd.f32 %v4171, %v4523
      %v4525 = vpop.f32.mrf.mxu0
      %v4526 = vadd.f32 %v4173, %v4525
      %4527 = vmatprep.mubr.bf16.mxu0 %v2191
      %4528 = vmatmul.mubr.bf16.gmra.mxu0 %v2190
      %v4529 = vpop.f32.mrf.mxu0
      %v4530 = vadd.f32 %v4177, %v4529
      %v4531 = vpop.f32.mrf.mxu0
      %v4532 = vadd.f32 %v4179, %v4531
      %v4533 = vpop.f32.mrf.mxu0
      %v4534 = vadd.f32 %v4181, %v4533
      %v4535 = vpop.f32.mrf.mxu0
      %v4536 = vadd.f32 %v4183, %v4535
      %4537 = vmatprep.mubr.bf16.mxu0 %v2202
      %4538 = vmatmul.mubr.bf16.gmra.mxu0 %v2201
      %v4539 = vpop.f32.mrf.mxu0
      %v4540 = vadd.f32 %v4187, %v4539
      %v4541 = vpop.f32.mrf.mxu0
      %v4542 = vadd.f32 %v4189, %v4541
      %v4543 = vpop.f32.mrf.mxu0
      %v4544 = vadd.f32 %v4191, %v4543
      %v4545 = vpop.f32.mrf.mxu0
      %v4546 = vadd.f32 %v4193, %v4545
      %4547 = vmatprep.mubr.bf16.mxu0 %v2213
      %4548 = vmatmul.mubr.bf16.gmra.mxu0 %v2212
      %v4549 = vpop.f32.mrf.mxu0
      %v4550 = vadd.f32 %v4197, %v4549
      %v4551 = vpop.f32.mrf.mxu0
      %v4552 = vadd.f32 %v4199, %v4551
      %v4553 = vpop.f32.mrf.mxu0
      %v4554 = vadd.f32 %v4201, %v4553
      %v4555 = vpop.f32.mrf.mxu0
      %v4556 = vadd.f32 %v4203, %v4555
      %4557 = vmatprep.mubr.bf16.mxu0 %v2224
      %4558 = vmatmul.mubr.bf16.gmra.mxu0 %v2223
      %v4559 = vpop.f32.mrf.mxu0
      %v4560 = vadd.f32 %v4207, %v4559
      %v4561 = vpop.f32.mrf.mxu0
      %v4562 = vadd.f32 %v4209, %v4561
      %v4563 = vpop.f32.mrf.mxu0
      %v4564 = vadd.f32 %v4211, %v4563
      %v4565 = vpop.f32.mrf.mxu0
      %v4566 = vadd.f32 %v4213, %v4565
      %4567 = vmatprep.mubr.bf16.mxu0 %v2235
      %4568 = vmatmul.mubr.bf16.gmra.mxu0 %v2234
      %v4569 = vpop.f32.mrf.mxu0
      %v4570 = vadd.f32 %v4217, %v4569
      %v4571 = vpop.f32.mrf.mxu0
      %v4572 = vadd.f32 %v4219, %v4571
      %v4573 = vpop.f32.mrf.mxu0
      %v4574 = vadd.f32 %v4221, %v4573
      %v4575 = vpop.f32.mrf.mxu0
      %v4576 = vadd.f32 %v4223, %v4575
      %4577 = vmatprep.mubr.bf16.mxu0 %v2246
      %4578 = vmatmul.mubr.bf16.gmra.mxu0 %v2245
      %v4579 = vpop.f32.mrf.mxu0
      %v4580 = vadd.f32 %v4227, %v4579
      %v4581 = vpop.f32.mrf.mxu0
      %v4582 = vadd.f32 %v4229, %v4581
      %v4583 = vpop.f32.mrf.mxu0
      %v4584 = vadd.f32 %v4231, %v4583
      %v4585 = vpop.f32.mrf.mxu0
      %v4586 = vadd.f32 %v4233, %v4585
      %4587 = vdwg.mxu0
      %4588 = vmatprep.subr.bf16.mxu0 %v3199
      %4589 = vmatpush1.bf16.msra.mxu0 %v3198
      %4590 = vmatprep.subr.bf16.mxu0 %v3197
      %4591 = vmatpush1.bf16.msra.mxu0 %v3196
      %4592 = vmatprep.subr.bf16.mxu0 %v3195
      %4593 = vmatpush1.bf16.msra.mxu0 %v3194
      %4594 = vmatprep.subr.bf16.mxu0 %v3193
      %4595 = vmatpush1.bf16.msra.mxu0 %v3192
      %4596 = vmatprep.subr.bf16.mxu0 %v3191
      %4597 = vmatpush1.bf16.msra.mxu0 %v3190
      %4598 = vmatprep.subr.bf16.mxu0 %v3189
      %4599 = vmatpush1.bf16.msra.mxu0 %v3188
      %4600 = vmatprep.subr.bf16.mxu0 %v3187
      %4601 = vmatpush1.bf16.msra.mxu0 %v3186
      %4602 = vmatprep.subr.bf16.mxu0 %v3185
      %4603 = vmatpush1.bf16.msra.mxu0 %v3184
      %4604 = vmatprep.subr.bf16.mxu0 %v3215
      %4605 = vmatpush2.bf16.msra.mxu0 %v3214
      %4606 = vmatprep.subr.bf16.mxu0 %v3213
      %4607 = vmatpush2.bf16.msra.mxu0 %v3212
      %4608 = vmatprep.subr.bf16.mxu0 %v3211
      %4609 = vmatpush2.bf16.msra.mxu0 %v3210
      %4610 = vmatprep.subr.bf16.mxu0 %v3209
      %4611 = vmatpush2.bf16.msra.mxu0 %v3208
      %4612 = vmatprep.subr.bf16.mxu0 %v3207
      %4613 = vmatpush2.bf16.msra.mxu0 %v3206
      %4614 = vmatprep.subr.bf16.mxu0 %v3205
      %4615 = vmatpush2.bf16.msra.mxu0 %v3204
      %4616 = vmatprep.subr.bf16.mxu0 %v3203
      %4617 = vmatpush2.bf16.msra.mxu0 %v3202
      %4618 = vmatprep.subr.bf16.mxu0 %v3201
      %4619 = vmatpush2.bf16.msra.mxu0 %v3200
      %4620 = vmatprep.mubr.bf16.mxu0 %v1907
      %4621 = vmatmul.mubr.bf16.gmra.mxu0 %v1906
      %v4622 = vpop.f32.mrf.mxu0
      %v4623 = vadd.f32 %v4270, %v4622
      %v4624 = vpop.f32.mrf.mxu0
      %v4625 = vadd.f32 %v4272, %v4624
      %v4626 = vpop.f32.mrf.mxu0
      %v4627 = vadd.f32 %v4274, %v4626
      %v4628 = vpop.f32.mrf.mxu0
      %v4629 = vadd.f32 %v4276, %v4628
      %4630 = vmatprep.mubr.bf16.mxu0 %v1918
      %4631 = vmatmul.mubr.bf16.gmra.mxu0 %v1917
      %v4632 = vpop.f32.mrf.mxu0
      %v4633 = vadd.f32 %v4280, %v4632
      %v4634 = vpop.f32.mrf.mxu0
      %v4635 = vadd.f32 %v4282, %v4634
      %v4636 = vpop.f32.mrf.mxu0
      %v4637 = vadd.f32 %v4284, %v4636
      %v4638 = vpop.f32.mrf.mxu0
      %v4639 = vadd.f32 %v4286, %v4638
      %4640 = vmatprep.mubr.bf16.mxu0 %v1929
      %4641 = vmatmul.mubr.bf16.gmra.mxu0 %v1928
      %v4642 = vpop.f32.mrf.mxu0
      %v4643 = vadd.f32 %v4290, %v4642
      %v4644 = vpop.f32.mrf.mxu0
      %v4645 = vadd.f32 %v4292, %v4644
      %v4646 = vpop.f32.mrf.mxu0
      %v4647 = vadd.f32 %v4294, %v4646
      %v4648 = vpop.f32.mrf.mxu0
      %v4649 = vadd.f32 %v4296, %v4648
      %4650 = vmatprep.mubr.bf16.mxu0 %v1940
      %4651 = vmatmul.mubr.bf16.gmra.mxu0 %v1939
      %v4652 = vpop.f32.mrf.mxu0
      %v4653 = vadd.f32 %v4300, %v4652
      %v4654 = vpop.f32.mrf.mxu0
      %v4655 = vadd.f32 %v4302, %v4654
      %v4656 = vpop.f32.mrf.mxu0
      %v4657 = vadd.f32 %v4304, %v4656
      %v4658 = vpop.f32.mrf.mxu0
      %v4659 = vadd.f32 %v4306, %v4658
      %4660 = vmatprep.mubr.bf16.mxu0 %v1951
      %4661 = vmatmul.mubr.bf16.gmra.mxu0 %v1950
      %v4662 = vpop.f32.mrf.mxu0
      %v4663 = vadd.f32 %v4310, %v4662
      %v4664 = vpop.f32.mrf.mxu0
      %v4665 = vadd.f32 %v4312, %v4664
      %v4666 = vpop.f32.mrf.mxu0
      %v4667 = vadd.f32 %v4314, %v4666
      %v4668 = vpop.f32.mrf.mxu0
      %v4669 = vadd.f32 %v4316, %v4668
      %4670 = vmatprep.mubr.bf16.mxu0 %v1962
      %4671 = vmatmul.mubr.bf16.gmra.mxu0 %v1961
      %v4672 = vpop.f32.mrf.mxu0
      %v4673 = vadd.f32 %v4320, %v4672
      %v4674 = vpop.f32.mrf.mxu0
      %v4675 = vadd.f32 %v4322, %v4674
      %v4676 = vpop.f32.mrf.mxu0
      %v4677 = vadd.f32 %v4324, %v4676
      %v4678 = vpop.f32.mrf.mxu0
      %v4679 = vadd.f32 %v4326, %v4678
      %4680 = vmatprep.mubr.bf16.mxu0 %v1973
      %4681 = vmatmul.mubr.bf16.gmra.mxu0 %v1972
      %v4682 = vpop.f32.mrf.mxu0
      %v4683 = vadd.f32 %v4330, %v4682
      %v4684 = vpop.f32.mrf.mxu0
      %v4685 = vadd.f32 %v4332, %v4684
      %v4686 = vpop.f32.mrf.mxu0
      %v4687 = vadd.f32 %v4334, %v4686
      %v4688 = vpop.f32.mrf.mxu0
      %v4689 = vadd.f32 %v4336, %v4688
      %4690 = vmatprep.mubr.bf16.mxu0 %v1984
      %4691 = vmatmul.mubr.bf16.gmra.mxu0 %v1983
      %v4692 = vpop.f32.mrf.mxu0
      %v4693 = vadd.f32 %v4340, %v4692
      %v4694 = vpop.f32.mrf.mxu0
      %v4695 = vadd.f32 %v4342, %v4694
      %v4696 = vpop.f32.mrf.mxu0
      %v4697 = vadd.f32 %v4344, %v4696
      %v4698 = vpop.f32.mrf.mxu0
      %v4699 = vadd.f32 %v4346, %v4698
      %4700 = vmatprep.mubr.bf16.mxu0 %v1995
      %4701 = vmatmul.mubr.bf16.gmra.mxu0 %v1994
      %v4702 = vpop.f32.mrf.mxu0
      %v4703 = vadd.f32 %v4350, %v4702
      %v4704 = vpop.f32.mrf.mxu0
      %v4705 = vadd.f32 %v4352, %v4704
      %v4706 = vpop.f32.mrf.mxu0
      %v4707 = vadd.f32 %v4354, %v4706
      %v4708 = vpop.f32.mrf.mxu0
      %v4709 = vadd.f32 %v4356, %v4708
      %4710 = vmatprep.mubr.bf16.mxu0 %v2006
      %4711 = vmatmul.mubr.bf16.gmra.mxu0 %v2005
      %v4712 = vpop.f32.mrf.mxu0
      %v4713 = vadd.f32 %v4360, %v4712
      %v4714 = vpop.f32.mrf.mxu0
      %v4715 = vadd.f32 %v4362, %v4714
      %v4716 = vpop.f32.mrf.mxu0
      %v4717 = vadd.f32 %v4364, %v4716
      %v4718 = vpop.f32.mrf.mxu0
      %v4719 = vadd.f32 %v4366, %v4718
      %4720 = vmatprep.mubr.bf16.mxu0 %v2017
      %4721 = vmatmul.mubr.bf16.gmra.mxu0 %v2016
      %v4722 = vpop.f32.mrf.mxu0
      %v4723 = vadd.f32 %v4370, %v4722
      %v4724 = vpop.f32.mrf.mxu0
      %v4725 = vadd.f32 %v4372, %v4724
      %v4726 = vpop.f32.mrf.mxu0
      %v4727 = vadd.f32 %v4374, %v4726
      %v4728 = vpop.f32.mrf.mxu0
      %v4729 = vadd.f32 %v4376, %v4728
      %4730 = vmatprep.mubr.bf16.mxu0 %v2028
      %4731 = vmatmul.mubr.bf16.gmra.mxu0 %v2027
      %v4732 = vpop.f32.mrf.mxu0
      %v4733 = vadd.f32 %v4380, %v4732
      %v4734 = vpop.f32.mrf.mxu0
      %v4735 = vadd.f32 %v4382, %v4734
      %v4736 = vpop.f32.mrf.mxu0
      %v4737 = vadd.f32 %v4384, %v4736
      %v4738 = vpop.f32.mrf.mxu0
      %v4739 = vadd.f32 %v4386, %v4738
      %4740 = vmatprep.mubr.bf16.mxu0 %v2039
      %4741 = vmatmul.mubr.bf16.gmra.mxu0 %v2038
      %v4742 = vpop.f32.mrf.mxu0
      %v4743 = vadd.f32 %v4390, %v4742
      %v4744 = vpop.f32.mrf.mxu0
      %v4745 = vadd.f32 %v4392, %v4744
      %v4746 = vpop.f32.mrf.mxu0
      %v4747 = vadd.f32 %v4394, %v4746
      %v4748 = vpop.f32.mrf.mxu0
      %v4749 = vadd.f32 %v4396, %v4748
      %4750 = vmatprep.mubr.bf16.mxu0 %v2050
      %4751 = vmatmul.mubr.bf16.gmra.mxu0 %v2049
      %v4752 = vpop.f32.mrf.mxu0
      %v4753 = vadd.f32 %v4400, %v4752
      %v4754 = vpop.f32.mrf.mxu0
      %v4755 = vadd.f32 %v4402, %v4754
      %v4756 = vpop.f32.mrf.mxu0
      %v4757 = vadd.f32 %v4404, %v4756
      %v4758 = vpop.f32.mrf.mxu0
      %v4759 = vadd.f32 %v4406, %v4758
      %4760 = vmatprep.mubr.bf16.mxu0 %v2061
      %4761 = vmatmul.mubr.bf16.gmra.mxu0 %v2060
      %v4762 = vpop.f32.mrf.mxu0
      %v4763 = vadd.f32 %v4410, %v4762
      %v4764 = vpop.f32.mrf.mxu0
      %v4765 = vadd.f32 %v4412, %v4764
      %v4766 = vpop.f32.mrf.mxu0
      %v4767 = vadd.f32 %v4414, %v4766
      %v4768 = vpop.f32.mrf.mxu0
      %v4769 = vadd.f32 %v4416, %v4768
      %4770 = vmatprep.mubr.bf16.mxu0 %v2072
      %4771 = vmatmul.mubr.bf16.gmra.mxu0 %v2071
      %v4772 = vpop.f32.mrf.mxu0
      %v4773 = vadd.f32 %v4420, %v4772
      %v4774 = vpop.f32.mrf.mxu0
      %v4775 = vadd.f32 %v4422, %v4774
      %v4776 = vpop.f32.mrf.mxu0
      %v4777 = vadd.f32 %v4424, %v4776
      %v4778 = vpop.f32.mrf.mxu0
      %v4779 = vadd.f32 %v4426, %v4778
      %4780 = vmatprep.mubr.bf16.mxu0 %v2083
      %4781 = vmatmul.mubr.bf16.gmra.mxu0 %v2082
      %v4782 = vpop.f32.mrf.mxu0
      %v4783 = vadd.f32 %v4430, %v4782
      %v4784 = vpop.f32.mrf.mxu0
      %v4785 = vadd.f32 %v4432, %v4784
      %v4786 = vpop.f32.mrf.mxu0
      %v4787 = vadd.f32 %v4434, %v4786
      %v4788 = vpop.f32.mrf.mxu0
      %v4789 = vadd.f32 %v4436, %v4788
      %4790 = vmatprep.mubr.bf16.mxu0 %v2094
      %4791 = vmatmul.mubr.bf16.gmra.mxu0 %v2093
      %v4792 = vpop.f32.mrf.mxu0
      %v4793 = vadd.f32 %v4440, %v4792
      %v4794 = vpop.f32.mrf.mxu0
      %v4795 = vadd.f32 %v4442, %v4794
      %v4796 = vpop.f32.mrf.mxu0
      %v4797 = vadd.f32 %v4444, %v4796
      %v4798 = vpop.f32.mrf.mxu0
      %v4799 = vadd.f32 %v4446, %v4798
      %4800 = vmatprep.mubr.bf16.mxu0 %v2105
      %4801 = vmatmul.mubr.bf16.gmra.mxu0 %v2104
      %v4802 = vpop.f32.mrf.mxu0
      %v4803 = vadd.f32 %v4450, %v4802
      %v4804 = vpop.f32.mrf.mxu0
      %v4805 = vadd.f32 %v4452, %v4804
      %v4806 = vpop.f32.mrf.mxu0
      %v4807 = vadd.f32 %v4454, %v4806
      %v4808 = vpop.f32.mrf.mxu0
      %v4809 = vadd.f32 %v4456, %v4808
      %4810 = vmatprep.mubr.bf16.mxu0 %v2116
      %4811 = vmatmul.mubr.bf16.gmra.mxu0 %v2115
      %v4812 = vpop.f32.mrf.mxu0
      %v4813 = vadd.f32 %v4460, %v4812
      %v4814 = vpop.f32.mrf.mxu0
      %v4815 = vadd.f32 %v4462, %v4814
      %v4816 = vpop.f32.mrf.mxu0
      %v4817 = vadd.f32 %v4464, %v4816
      %v4818 = vpop.f32.mrf.mxu0
      %v4819 = vadd.f32 %v4466, %v4818
      %4820 = vmatprep.mubr.bf16.mxu0 %v2127
      %4821 = vmatmul.mubr.bf16.gmra.mxu0 %v2126
      %v4822 = vpop.f32.mrf.mxu0
      %v4823 = vadd.f32 %v4470, %v4822
      %v4824 = vpop.f32.mrf.mxu0
      %v4825 = vadd.f32 %v4472, %v4824
      %v4826 = vpop.f32.mrf.mxu0
      %v4827 = vadd.f32 %v4474, %v4826
      %v4828 = vpop.f32.mrf.mxu0
      %v4829 = vadd.f32 %v4476, %v4828
      %4830 = vmatprep.mubr.bf16.mxu0 %v2138
      %4831 = vmatmul.mubr.bf16.gmra.mxu0 %v2137
      %v4832 = vpop.f32.mrf.mxu0
      %v4833 = vadd.f32 %v4480, %v4832
      %v4834 = vpop.f32.mrf.mxu0
      %v4835 = vadd.f32 %v4482, %v4834
      %v4836 = vpop.f32.mrf.mxu0
      %v4837 = vadd.f32 %v4484, %v4836
      %v4838 = vpop.f32.mrf.mxu0
      %v4839 = vadd.f32 %v4486, %v4838
      %4840 = vmatprep.mubr.bf16.mxu0 %v2149
      %4841 = vmatmul.mubr.bf16.gmra.mxu0 %v2148
      %v4842 = vpop.f32.mrf.mxu0
      %v4843 = vadd.f32 %v4490, %v4842
      %v4844 = vpop.f32.mrf.mxu0
      %v4845 = vadd.f32 %v4492, %v4844
      %v4846 = vpop.f32.mrf.mxu0
      %v4847 = vadd.f32 %v4494, %v4846
      %v4848 = vpop.f32.mrf.mxu0
      %v4849 = vadd.f32 %v4496, %v4848
      %4850 = vmatprep.mubr.bf16.mxu0 %v2160
      %4851 = vmatmul.mubr.bf16.gmra.mxu0 %v2159
      %v4852 = vpop.f32.mrf.mxu0
      %v4853 = vadd.f32 %v4500, %v4852
      %v4854 = vpop.f32.mrf.mxu0
      %v4855 = vadd.f32 %v4502, %v4854
      %v4856 = vpop.f32.mrf.mxu0
      %v4857 = vadd.f32 %v4504, %v4856
      %v4858 = vpop.f32.mrf.mxu0
      %v4859 = vadd.f32 %v4506, %v4858
      %4860 = vmatprep.mubr.bf16.mxu0 %v2171
      %4861 = vmatmul.mubr.bf16.gmra.mxu0 %v2170
      %v4862 = vpop.f32.mrf.mxu0
      %v4863 = vadd.f32 %v4510, %v4862
      %v4864 = vpop.f32.mrf.mxu0
      %v4865 = vadd.f32 %v4512, %v4864
      %v4866 = vpop.f32.mrf.mxu0
      %v4867 = vadd.f32 %v4514, %v4866
      %v4868 = vpop.f32.mrf.mxu0
      %v4869 = vadd.f32 %v4516, %v4868
      %4870 = vmatprep.mubr.bf16.mxu0 %v2182
      %4871 = vmatmul.mubr.bf16.gmra.mxu0 %v2181
      %v4872 = vpop.f32.mrf.mxu0
      %v4873 = vadd.f32 %v4520, %v4872
      %v4874 = vpop.f32.mrf.mxu0
      %v4875 = vadd.f32 %v4522, %v4874
      %v4876 = vpop.f32.mrf.mxu0
      %v4877 = vadd.f32 %v4524, %v4876
      %v4878 = vpop.f32.mrf.mxu0
      %v4879 = vadd.f32 %v4526, %v4878
      %4880 = vmatprep.mubr.bf16.mxu0 %v2193
      %4881 = vmatmul.mubr.bf16.gmra.mxu0 %v2192
      %v4882 = vpop.f32.mrf.mxu0
      %v4883 = vadd.f32 %v4530, %v4882
      %v4884 = vpop.f32.mrf.mxu0
      %v4885 = vadd.f32 %v4532, %v4884
      %v4886 = vpop.f32.mrf.mxu0
      %v4887 = vadd.f32 %v4534, %v4886
      %v4888 = vpop.f32.mrf.mxu0
      %v4889 = vadd.f32 %v4536, %v4888
      %4890 = vmatprep.mubr.bf16.mxu0 %v2204
      %4891 = vmatmul.mubr.bf16.gmra.mxu0 %v2203
      %v4892 = vpop.f32.mrf.mxu0
      %v4893 = vadd.f32 %v4540, %v4892
      %v4894 = vpop.f32.mrf.mxu0
      %v4895 = vadd.f32 %v4542, %v4894
      %v4896 = vpop.f32.mrf.mxu0
      %v4897 = vadd.f32 %v4544, %v4896
      %v4898 = vpop.f32.mrf.mxu0
      %v4899 = vadd.f32 %v4546, %v4898
      %4900 = vmatprep.mubr.bf16.mxu0 %v2215
      %4901 = vmatmul.mubr.bf16.gmra.mxu0 %v2214
      %v4902 = vpop.f32.mrf.mxu0
      %v4903 = vadd.f32 %v4550, %v4902
      %v4904 = vpop.f32.mrf.mxu0
      %v4905 = vadd.f32 %v4552, %v4904
      %v4906 = vpop.f32.mrf.mxu0
      %v4907 = vadd.f32 %v4554, %v4906
      %v4908 = vpop.f32.mrf.mxu0
      %v4909 = vadd.f32 %v4556, %v4908
      %4910 = vmatprep.mubr.bf16.mxu0 %v2226
      %4911 = vmatmul.mubr.bf16.gmra.mxu0 %v2225
      %v4912 = vpop.f32.mrf.mxu0
      %v4913 = vadd.f32 %v4560, %v4912
      %v4914 = vpop.f32.mrf.mxu0
      %v4915 = vadd.f32 %v4562, %v4914
      %v4916 = vpop.f32.mrf.mxu0
      %v4917 = vadd.f32 %v4564, %v4916
      %v4918 = vpop.f32.mrf.mxu0
      %v4919 = vadd.f32 %v4566, %v4918
      %4920 = vmatprep.mubr.bf16.mxu0 %v2237
      %4921 = vmatmul.mubr.bf16.gmra.mxu0 %v2236
      %v4922 = vpop.f32.mrf.mxu0
      %v4923 = vadd.f32 %v4570, %v4922
      %v4924 = vpop.f32.mrf.mxu0
      %v4925 = vadd.f32 %v4572, %v4924
      %v4926 = vpop.f32.mrf.mxu0
      %v4927 = vadd.f32 %v4574, %v4926
      %v4928 = vpop.f32.mrf.mxu0
      %v4929 = vadd.f32 %v4576, %v4928
      %4930 = vmatprep.mubr.bf16.mxu0 %v2248
      %4931 = vmatmul.mubr.bf16.gmra.mxu0 %v2247
      %v4932 = vpop.f32.mrf.mxu0
      %v4933 = vadd.f32 %v4580, %v4932
      %v4934 = vpop.f32.mrf.mxu0
      %v4935 = vadd.f32 %v4582, %v4934
      %v4936 = vpop.f32.mrf.mxu0
      %v4937 = vadd.f32 %v4584, %v4936
      %v4938 = vpop.f32.mrf.mxu0
      %v4939 = vadd.f32 %v4586, %v4938
      %4940 = vdwg.mxu0
      %4941 = vmatprep.subr.bf16.mxu0 %v3231
      %4942 = vmatpush1.bf16.msra.mxu0 %v3230
      %4943 = vmatprep.subr.bf16.mxu0 %v3229
      %4944 = vmatpush1.bf16.msra.mxu0 %v3228
      %4945 = vmatprep.subr.bf16.mxu0 %v3227
      %4946 = vmatpush1.bf16.msra.mxu0 %v3226
      %4947 = vmatprep.subr.bf16.mxu0 %v3225
      %4948 = vmatpush1.bf16.msra.mxu0 %v3224
      %4949 = vmatprep.subr.bf16.mxu0 %v3223
      %4950 = vmatpush1.bf16.msra.mxu0 %v3222
      %4951 = vmatprep.subr.bf16.mxu0 %v3221
      %4952 = vmatpush1.bf16.msra.mxu0 %v3220
      %4953 = vmatprep.subr.bf16.mxu0 %v3219
      %4954 = vmatpush1.bf16.msra.mxu0 %v3218
      %4955 = vmatprep.subr.bf16.mxu0 %v3217
      %4956 = vmatpush1.bf16.msra.mxu0 %v3216
      %4957 = vmatprep.subr.bf16.mxu0 %v3247
      %4958 = vmatpush2.bf16.msra.mxu0 %v3246
      %4959 = vmatprep.subr.bf16.mxu0 %v3245
      %4960 = vmatpush2.bf16.msra.mxu0 %v3244
      %4961 = vmatprep.subr.bf16.mxu0 %v3243
      %4962 = vmatpush2.bf16.msra.mxu0 %v3242
      %4963 = vmatprep.subr.bf16.mxu0 %v3241
      %4964 = vmatpush2.bf16.msra.mxu0 %v3240
      %4965 = vmatprep.subr.bf16.mxu0 %v3239
      %4966 = vmatpush2.bf16.msra.mxu0 %v3238
      %4967 = vmatprep.subr.bf16.mxu0 %v3237
      %4968 = vmatpush2.bf16.msra.mxu0 %v3236
      %4969 = vmatprep.subr.bf16.mxu0 %v3235
      %4970 = vmatpush2.bf16.msra.mxu0 %v3234
      %4971 = vmatprep.subr.bf16.mxu0 %v3233
      %4972 = vmatpush2.bf16.msra.mxu0 %v3232
      %4973 = vmatprep.mubr.bf16.mxu0 %v1909
      %4974 = vmatmul.mubr.bf16.gmra.mxu0 %v1908
      %v4975 = vpop.f32.mrf.mxu0
      %v4976 = vadd.f32 %v4623, %v4975
      %v4977 = vpop.f32.mrf.mxu0
      %v4978 = vadd.f32 %v4625, %v4977
      %v4979 = vpop.f32.mrf.mxu0
      %v4980 = vadd.f32 %v4627, %v4979
      %v4981 = vpop.f32.mrf.mxu0
      %v4982 = vadd.f32 %v4629, %v4981
      %4983 = vmatprep.mubr.bf16.mxu0 %v1920
      %4984 = vmatmul.mubr.bf16.gmra.mxu0 %v1919
      %v4985 = vpop.f32.mrf.mxu0
      %v4986 = vadd.f32 %v4633, %v4985
      %v4987 = vpop.f32.mrf.mxu0
      %v4988 = vadd.f32 %v4635, %v4987
      %v4989 = vpop.f32.mrf.mxu0
      %v4990 = vadd.f32 %v4637, %v4989
      %v4991 = vpop.f32.mrf.mxu0
      %v4992 = vadd.f32 %v4639, %v4991
      %4993 = vmatprep.mubr.bf16.mxu0 %v1931
      %4994 = vmatmul.mubr.bf16.gmra.mxu0 %v1930
      %v4995 = vpop.f32.mrf.mxu0
      %v4996 = vadd.f32 %v4643, %v4995
      %v4997 = vpop.f32.mrf.mxu0
      %v4998 = vadd.f32 %v4645, %v4997
      %v4999 = vpop.f32.mrf.mxu0
      %v5000 = vadd.f32 %v4647, %v4999
      %v5001 = vpop.f32.mrf.mxu0
      %v5002 = vadd.f32 %v4649, %v5001
      %5003 = vmatprep.mubr.bf16.mxu0 %v1942
      %5004 = vmatmul.mubr.bf16.gmra.mxu0 %v1941
      %v5005 = vpop.f32.mrf.mxu0
      %v5006 = vadd.f32 %v4653, %v5005
      %v5007 = vpop.f32.mrf.mxu0
      %v5008 = vadd.f32 %v4655, %v5007
      %v5009 = vpop.f32.mrf.mxu0
      %v5010 = vadd.f32 %v4657, %v5009
      %v5011 = vpop.f32.mrf.mxu0
      %v5012 = vadd.f32 %v4659, %v5011
      %5013 = vmatprep.mubr.bf16.mxu0 %v1953
      %5014 = vmatmul.mubr.bf16.gmra.mxu0 %v1952
      %v5015 = vpop.f32.mrf.mxu0
      %v5016 = vadd.f32 %v4663, %v5015
      %v5017 = vpop.f32.mrf.mxu0
      %v5018 = vadd.f32 %v4665, %v5017
      %v5019 = vpop.f32.mrf.mxu0
      %v5020 = vadd.f32 %v4667, %v5019
      %v5021 = vpop.f32.mrf.mxu0
      %v5022 = vadd.f32 %v4669, %v5021
      %5023 = vmatprep.mubr.bf16.mxu0 %v1964
      %5024 = vmatmul.mubr.bf16.gmra.mxu0 %v1963
      %v5025 = vpop.f32.mrf.mxu0
      %v5026 = vadd.f32 %v4673, %v5025
      %v5027 = vpop.f32.mrf.mxu0
      %v5028 = vadd.f32 %v4675, %v5027
      %v5029 = vpop.f32.mrf.mxu0
      %v5030 = vadd.f32 %v4677, %v5029
      %v5031 = vpop.f32.mrf.mxu0
      %v5032 = vadd.f32 %v4679, %v5031
      %5033 = vmatprep.mubr.bf16.mxu0 %v1975
      %5034 = vmatmul.mubr.bf16.gmra.mxu0 %v1974
      %v5035 = vpop.f32.mrf.mxu0
      %v5036 = vadd.f32 %v4683, %v5035
      %v5037 = vpop.f32.mrf.mxu0
      %v5038 = vadd.f32 %v4685, %v5037
      %v5039 = vpop.f32.mrf.mxu0
      %v5040 = vadd.f32 %v4687, %v5039
      %v5041 = vpop.f32.mrf.mxu0
      %v5042 = vadd.f32 %v4689, %v5041
      %5043 = vmatprep.mubr.bf16.mxu0 %v1986
      %5044 = vmatmul.mubr.bf16.gmra.mxu0 %v1985
      %v5045 = vpop.f32.mrf.mxu0
      %v5046 = vadd.f32 %v4693, %v5045
      %v5047 = vpop.f32.mrf.mxu0
      %v5048 = vadd.f32 %v4695, %v5047
      %v5049 = vpop.f32.mrf.mxu0
      %v5050 = vadd.f32 %v4697, %v5049
      %v5051 = vpop.f32.mrf.mxu0
      %v5052 = vadd.f32 %v4699, %v5051
      %5053 = vmatprep.mubr.bf16.mxu0 %v1997
      %5054 = vmatmul.mubr.bf16.gmra.mxu0 %v1996
      %v5055 = vpop.f32.mrf.mxu0
      %v5056 = vadd.f32 %v4703, %v5055
      %v5057 = vpop.f32.mrf.mxu0
      %v5058 = vadd.f32 %v4705, %v5057
      %v5059 = vpop.f32.mrf.mxu0
      %v5060 = vadd.f32 %v4707, %v5059
      %v5061 = vpop.f32.mrf.mxu0
      %v5062 = vadd.f32 %v4709, %v5061
      %5063 = vmatprep.mubr.bf16.mxu0 %v2008
      %5064 = vmatmul.mubr.bf16.gmra.mxu0 %v2007
      %v5065 = vpop.f32.mrf.mxu0
      %v5066 = vadd.f32 %v4713, %v5065
      %v5067 = vpop.f32.mrf.mxu0
      %v5068 = vadd.f32 %v4715, %v5067
      %v5069 = vpop.f32.mrf.mxu0
      %v5070 = vadd.f32 %v4717, %v5069
      %v5071 = vpop.f32.mrf.mxu0
      %v5072 = vadd.f32 %v4719, %v5071
      %5073 = vmatprep.mubr.bf16.mxu0 %v2019
      %5074 = vmatmul.mubr.bf16.gmra.mxu0 %v2018
      %v5075 = vpop.f32.mrf.mxu0
      %v5076 = vadd.f32 %v4723, %v5075
      %v5077 = vpop.f32.mrf.mxu0
      %v5078 = vadd.f32 %v4725, %v5077
      %v5079 = vpop.f32.mrf.mxu0
      %v5080 = vadd.f32 %v4727, %v5079
      %v5081 = vpop.f32.mrf.mxu0
      %v5082 = vadd.f32 %v4729, %v5081
      %5083 = vmatprep.mubr.bf16.mxu0 %v2030
      %5084 = vmatmul.mubr.bf16.gmra.mxu0 %v2029
      %v5085 = vpop.f32.mrf.mxu0
      %v5086 = vadd.f32 %v4733, %v5085
      %v5087 = vpop.f32.mrf.mxu0
      %v5088 = vadd.f32 %v4735, %v5087
      %v5089 = vpop.f32.mrf.mxu0
      %v5090 = vadd.f32 %v4737, %v5089
      %v5091 = vpop.f32.mrf.mxu0
      %v5092 = vadd.f32 %v4739, %v5091
      %5093 = vmatprep.mubr.bf16.mxu0 %v2041
      %5094 = vmatmul.mubr.bf16.gmra.mxu0 %v2040
      %v5095 = vpop.f32.mrf.mxu0
      %v5096 = vadd.f32 %v4743, %v5095
      %v5097 = vpop.f32.mrf.mxu0
      %v5098 = vadd.f32 %v4745, %v5097
      %v5099 = vpop.f32.mrf.mxu0
      %v5100 = vadd.f32 %v4747, %v5099
      %v5101 = vpop.f32.mrf.mxu0
      %v5102 = vadd.f32 %v4749, %v5101
      %5103 = vmatprep.mubr.bf16.mxu0 %v2052
      %5104 = vmatmul.mubr.bf16.gmra.mxu0 %v2051
      %v5105 = vpop.f32.mrf.mxu0
      %v5106 = vadd.f32 %v4753, %v5105
      %v5107 = vpop.f32.mrf.mxu0
      %v5108 = vadd.f32 %v4755, %v5107
      %v5109 = vpop.f32.mrf.mxu0
      %v5110 = vadd.f32 %v4757, %v5109
      %v5111 = vpop.f32.mrf.mxu0
      %v5112 = vadd.f32 %v4759, %v5111
      %5113 = vmatprep.mubr.bf16.mxu0 %v2063
      %5114 = vmatmul.mubr.bf16.gmra.mxu0 %v2062
      %v5115 = vpop.f32.mrf.mxu0
      %v5116 = vadd.f32 %v4763, %v5115
      %v5117 = vpop.f32.mrf.mxu0
      %v5118 = vadd.f32 %v4765, %v5117
      %v5119 = vpop.f32.mrf.mxu0
      %v5120 = vadd.f32 %v4767, %v5119
      %v5121 = vpop.f32.mrf.mxu0
      %v5122 = vadd.f32 %v4769, %v5121
      %5123 = vmatprep.mubr.bf16.mxu0 %v2074
      %5124 = vmatmul.mubr.bf16.gmra.mxu0 %v2073
      %v5125 = vpop.f32.mrf.mxu0
      %v5126 = vadd.f32 %v4773, %v5125
      %v5127 = vpop.f32.mrf.mxu0
      %v5128 = vadd.f32 %v4775, %v5127
      %v5129 = vpop.f32.mrf.mxu0
      %v5130 = vadd.f32 %v4777, %v5129
      %v5131 = vpop.f32.mrf.mxu0
      %v5132 = vadd.f32 %v4779, %v5131
      %5133 = vmatprep.mubr.bf16.mxu0 %v2085
      %5134 = vmatmul.mubr.bf16.gmra.mxu0 %v2084
      %v5135 = vpop.f32.mrf.mxu0
      %v5136 = vadd.f32 %v4783, %v5135
      %v5137 = vpop.f32.mrf.mxu0
      %v5138 = vadd.f32 %v4785, %v5137
      %v5139 = vpop.f32.mrf.mxu0
      %v5140 = vadd.f32 %v4787, %v5139
      %v5141 = vpop.f32.mrf.mxu0
      %v5142 = vadd.f32 %v4789, %v5141
      %5143 = vmatprep.mubr.bf16.mxu0 %v2096
      %5144 = vmatmul.mubr.bf16.gmra.mxu0 %v2095
      %v5145 = vpop.f32.mrf.mxu0
      %v5146 = vadd.f32 %v4793, %v5145
      %v5147 = vpop.f32.mrf.mxu0
      %v5148 = vadd.f32 %v4795, %v5147
      %v5149 = vpop.f32.mrf.mxu0
      %v5150 = vadd.f32 %v4797, %v5149
      %v5151 = vpop.f32.mrf.mxu0
      %v5152 = vadd.f32 %v4799, %v5151
      %5153 = vmatprep.mubr.bf16.mxu0 %v2107
      %5154 = vmatmul.mubr.bf16.gmra.mxu0 %v2106
      %v5155 = vpop.f32.mrf.mxu0
      %v5156 = vadd.f32 %v4803, %v5155
      %v5157 = vpop.f32.mrf.mxu0
      %v5158 = vadd.f32 %v4805, %v5157
      %v5159 = vpop.f32.mrf.mxu0
      %v5160 = vadd.f32 %v4807, %v5159
      %v5161 = vpop.f32.mrf.mxu0
      %v5162 = vadd.f32 %v4809, %v5161
      %5163 = vmatprep.mubr.bf16.mxu0 %v2118
      %5164 = vmatmul.mubr.bf16.gmra.mxu0 %v2117
      %v5165 = vpop.f32.mrf.mxu0
      %v5166 = vadd.f32 %v4813, %v5165
      %v5167 = vpop.f32.mrf.mxu0
      %v5168 = vadd.f32 %v4815, %v5167
      %v5169 = vpop.f32.mrf.mxu0
      %v5170 = vadd.f32 %v4817, %v5169
      %v5171 = vpop.f32.mrf.mxu0
      %v5172 = vadd.f32 %v4819, %v5171
      %5173 = vmatprep.mubr.bf16.mxu0 %v2129
      %5174 = vmatmul.mubr.bf16.gmra.mxu0 %v2128
      %v5175 = vpop.f32.mrf.mxu0
      %v5176 = vadd.f32 %v4823, %v5175
      %v5177 = vpop.f32.mrf.mxu0
      %v5178 = vadd.f32 %v4825, %v5177
      %v5179 = vpop.f32.mrf.mxu0
      %v5180 = vadd.f32 %v4827, %v5179
      %v5181 = vpop.f32.mrf.mxu0
      %v5182 = vadd.f32 %v4829, %v5181
      %5183 = vmatprep.mubr.bf16.mxu0 %v2140
      %5184 = vmatmul.mubr.bf16.gmra.mxu0 %v2139
      %v5185 = vpop.f32.mrf.mxu0
      %v5186 = vadd.f32 %v4833, %v5185
      %v5187 = vpop.f32.mrf.mxu0
      %v5188 = vadd.f32 %v4835, %v5187
      %v5189 = vpop.f32.mrf.mxu0
      %v5190 = vadd.f32 %v4837, %v5189
      %v5191 = vpop.f32.mrf.mxu0
      %v5192 = vadd.f32 %v4839, %v5191
      %5193 = vmatprep.mubr.bf16.mxu0 %v2151
      %5194 = vmatmul.mubr.bf16.gmra.mxu0 %v2150
      %v5195 = vpop.f32.mrf.mxu0
      %v5196 = vadd.f32 %v4843, %v5195
      %v5197 = vpop.f32.mrf.mxu0
      %v5198 = vadd.f32 %v4845, %v5197
      %v5199 = vpop.f32.mrf.mxu0
      %v5200 = vadd.f32 %v4847, %v5199
      %v5201 = vpop.f32.mrf.mxu0
      %v5202 = vadd.f32 %v4849, %v5201
      %5203 = vmatprep.mubr.bf16.mxu0 %v2162
      %5204 = vmatmul.mubr.bf16.gmra.mxu0 %v2161
      %v5205 = vpop.f32.mrf.mxu0
      %v5206 = vadd.f32 %v4853, %v5205
      %v5207 = vpop.f32.mrf.mxu0
      %v5208 = vadd.f32 %v4855, %v5207
      %v5209 = vpop.f32.mrf.mxu0
      %v5210 = vadd.f32 %v4857, %v5209
      %v5211 = vpop.f32.mrf.mxu0
      %v5212 = vadd.f32 %v4859, %v5211
      %5213 = vmatprep.mubr.bf16.mxu0 %v2173
      %5214 = vmatmul.mubr.bf16.gmra.mxu0 %v2172
      %v5215 = vpop.f32.mrf.mxu0
      %v5216 = vadd.f32 %v4863, %v5215
      %v5217 = vpop.f32.mrf.mxu0
      %v5218 = vadd.f32 %v4865, %v5217
      %v5219 = vpop.f32.mrf.mxu0
      %v5220 = vadd.f32 %v4867, %v5219
      %v5221 = vpop.f32.mrf.mxu0
      %v5222 = vadd.f32 %v4869, %v5221
      %5223 = vmatprep.mubr.bf16.mxu0 %v2184
      %5224 = vmatmul.mubr.bf16.gmra.mxu0 %v2183
      %v5225 = vpop.f32.mrf.mxu0
      %v5226 = vadd.f32 %v4873, %v5225
      %v5227 = vpop.f32.mrf.mxu0
      %v5228 = vadd.f32 %v4875, %v5227
      %v5229 = vpop.f32.mrf.mxu0
      %v5230 = vadd.f32 %v4877, %v5229
      %v5231 = vpop.f32.mrf.mxu0
      %v5232 = vadd.f32 %v4879, %v5231
      %5233 = vmatprep.mubr.bf16.mxu0 %v2195
      %5234 = vmatmul.mubr.bf16.gmra.mxu0 %v2194
      %v5235 = vpop.f32.mrf.mxu0
      %v5236 = vadd.f32 %v4883, %v5235
      %v5237 = vpop.f32.mrf.mxu0
      %v5238 = vadd.f32 %v4885, %v5237
      %v5239 = vpop.f32.mrf.mxu0
      %v5240 = vadd.f32 %v4887, %v5239
      %v5241 = vpop.f32.mrf.mxu0
      %v5242 = vadd.f32 %v4889, %v5241
      %5243 = vmatprep.mubr.bf16.mxu0 %v2206
      %5244 = vmatmul.mubr.bf16.gmra.mxu0 %v2205
      %v5245 = vpop.f32.mrf.mxu0
      %v5246 = vadd.f32 %v4893, %v5245
      %v5247 = vpop.f32.mrf.mxu0
      %v5248 = vadd.f32 %v4895, %v5247
      %v5249 = vpop.f32.mrf.mxu0
      %v5250 = vadd.f32 %v4897, %v5249
      %v5251 = vpop.f32.mrf.mxu0
      %v5252 = vadd.f32 %v4899, %v5251
      %5253 = vmatprep.mubr.bf16.mxu0 %v2217
      %5254 = vmatmul.mubr.bf16.gmra.mxu0 %v2216
      %v5255 = vpop.f32.mrf.mxu0
      %v5256 = vadd.f32 %v4903, %v5255
      %v5257 = vpop.f32.mrf.mxu0
      %v5258 = vadd.f32 %v4905, %v5257
      %v5259 = vpop.f32.mrf.mxu0
      %v5260 = vadd.f32 %v4907, %v5259
      %v5261 = vpop.f32.mrf.mxu0
      %v5262 = vadd.f32 %v4909, %v5261
      %5263 = vmatprep.mubr.bf16.mxu0 %v2228
      %5264 = vmatmul.mubr.bf16.gmra.mxu0 %v2227
      %v5265 = vpop.f32.mrf.mxu0
      %v5266 = vadd.f32 %v4913, %v5265
      %v5267 = vpop.f32.mrf.mxu0
      %v5268 = vadd.f32 %v4915, %v5267
      %v5269 = vpop.f32.mrf.mxu0
      %v5270 = vadd.f32 %v4917, %v5269
      %v5271 = vpop.f32.mrf.mxu0
      %v5272 = vadd.f32 %v4919, %v5271
      %5273 = vmatprep.mubr.bf16.mxu0 %v2239
      %5274 = vmatmul.mubr.bf16.gmra.mxu0 %v2238
      %v5275 = vpop.f32.mrf.mxu0
      %v5276 = vadd.f32 %v4923, %v5275
      %v5277 = vpop.f32.mrf.mxu0
      %v5278 = vadd.f32 %v4925, %v5277
      %v5279 = vpop.f32.mrf.mxu0
      %v5280 = vadd.f32 %v4927, %v5279
      %v5281 = vpop.f32.mrf.mxu0
      %v5282 = vadd.f32 %v4929, %v5281
      %5283 = vmatprep.mubr.bf16.mxu0 %v2250
      %5284 = vmatmul.mubr.bf16.gmra.mxu0 %v2249
      %v5285 = vpop.f32.mrf.mxu0
      %v5286 = vadd.f32 %v4933, %v5285
      %v5287 = vpop.f32.mrf.mxu0
      %v5288 = vadd.f32 %v4935, %v5287
      %v5289 = vpop.f32.mrf.mxu0
      %v5290 = vadd.f32 %v4937, %v5289
      %v5291 = vpop.f32.mrf.mxu0
      %v5292 = vadd.f32 %v4939, %v5291
      %5293 = vdwg.mxu0
      %5294 = vmatprep.subr.bf16.mxu0 0
      %5295 = vmatpush1.bf16.msra.mxu0 0
      %5296 = vmatprep.subr.bf16.mxu0 0
      %5297 = vmatpush1.bf16.msra.mxu0 0
      %5298 = vmatprep.subr.bf16.mxu0 %v3259
      %5299 = vmatpush1.bf16.msra.mxu0 %v3258
      %5300 = vmatprep.subr.bf16.mxu0 %v3257
      %5301 = vmatpush1.bf16.msra.mxu0 %v3256
      %5302 = vmatprep.subr.bf16.mxu0 %v3255
      %5303 = vmatpush1.bf16.msra.mxu0 %v3254
      %5304 = vmatprep.subr.bf16.mxu0 %v3253
      %5305 = vmatpush1.bf16.msra.mxu0 %v3252
      %5306 = vmatprep.subr.bf16.mxu0 %v3251
      %5307 = vmatpush1.bf16.msra.mxu0 %v3250
      %5308 = vmatprep.subr.bf16.mxu0 %v3249
      %5309 = vmatpush1.bf16.msra.mxu0 %v3248
      %5310 = vmatprep.subr.bf16.mxu0 0
      %5311 = vmatpush2.bf16.msra.mxu0 0
      %5312 = vmatprep.subr.bf16.mxu0 0
      %5313 = vmatpush2.bf16.msra.mxu0 0
      %5314 = vmatprep.subr.bf16.mxu0 0
      %5315 = vmatpush2.bf16.msra.mxu0 0
      %5316 = vmatprep.subr.bf16.mxu0 0
      %5317 = vmatpush2.bf16.msra.mxu0 0
      %5318 = vmatprep.subr.bf16.mxu0 0
      %5319 = vmatpush2.bf16.msra.mxu0 0
      %5320 = vmatprep.subr.bf16.mxu0 0
      %5321 = vmatpush2.bf16.msra.mxu0 0
      %5322 = vmatprep.subr.bf16.mxu0 0
      %5323 = vmatpush2.bf16.msra.mxu0 0
      %5324 = vmatprep.subr.bf16.mxu0 0
      %5325 = vmatpush2.bf16.msra.mxu0 0
      %5326 = vmatprep.mubr.bf16.mxu0 0
      %5327 = vmatmul.mubr.bf16.gmra.mxu0 %v3434
      %v5328 = vpop.f32.mrf.mxu0
      %v5329 = vadd.f32 %v4976, %v5328
      %v5330 = vpop.f32.mrf.mxu0
      %v5331 = vadd.f32 %v4978, %v5330
      %v5332 = vpop.f32.mrf.mxu0
      %v5333 = vadd.f32 %v4980, %v5332
      %v5334 = vpop.f32.mrf.mxu0
      %v5335 = vadd.f32 %v4982, %v5334
      %5336 = vmatprep.mubr.bf16.mxu0 0
      %5337 = vmatmul.mubr.bf16.gmra.mxu0 %v3437
      %v5338 = vpop.f32.mrf.mxu0
      %v5339 = vadd.f32 %v4986, %v5338
      %v5340 = vpop.f32.mrf.mxu0
      %v5341 = vadd.f32 %v4988, %v5340
      %v5342 = vpop.f32.mrf.mxu0
      %v5343 = vadd.f32 %v4990, %v5342
      %v5344 = vpop.f32.mrf.mxu0
      %v5345 = vadd.f32 %v4992, %v5344
      %5346 = vmatprep.mubr.bf16.mxu0 0
      %5347 = vmatmul.mubr.bf16.gmra.mxu0 %v3440
      %v5348 = vpop.f32.mrf.mxu0
      %v5349 = vadd.f32 %v4996, %v5348
      %v5350 = vpop.f32.mrf.mxu0
      %v5351 = vadd.f32 %v4998, %v5350
      %v5352 = vpop.f32.mrf.mxu0
      %v5353 = vadd.f32 %v5000, %v5352
      %v5354 = vpop.f32.mrf.mxu0
      %v5355 = vadd.f32 %v5002, %v5354
      %5356 = vmatprep.mubr.bf16.mxu0 0
      %5357 = vmatmul.mubr.bf16.gmra.mxu0 %v3443
      %v5358 = vpop.f32.mrf.mxu0
      %v5359 = vadd.f32 %v5006, %v5358
      %v5360 = vpop.f32.mrf.mxu0
      %v5361 = vadd.f32 %v5008, %v5360
      %v5362 = vpop.f32.mrf.mxu0
      %v5363 = vadd.f32 %v5010, %v5362
      %v5364 = vpop.f32.mrf.mxu0
      %v5365 = vadd.f32 %v5012, %v5364
      %5366 = vmatprep.mubr.bf16.mxu0 0
      %5367 = vmatmul.mubr.bf16.gmra.mxu0 %v3446
      %v5368 = vpop.f32.mrf.mxu0
      %v5369 = vadd.f32 %v5016, %v5368
      %v5370 = vpop.f32.mrf.mxu0
      %v5371 = vadd.f32 %v5018, %v5370
      %v5372 = vpop.f32.mrf.mxu0
      %v5373 = vadd.f32 %v5020, %v5372
      %v5374 = vpop.f32.mrf.mxu0
      %v5375 = vadd.f32 %v5022, %v5374
      %5376 = vmatprep.mubr.bf16.mxu0 0
      %5377 = vmatmul.mubr.bf16.gmra.mxu0 %v3449
      %v5378 = vpop.f32.mrf.mxu0
      %v5379 = vadd.f32 %v5026, %v5378
      %v5380 = vpop.f32.mrf.mxu0
      %v5381 = vadd.f32 %v5028, %v5380
      %v5382 = vpop.f32.mrf.mxu0
      %v5383 = vadd.f32 %v5030, %v5382
      %v5384 = vpop.f32.mrf.mxu0
      %v5385 = vadd.f32 %v5032, %v5384
      %5386 = vmatprep.mubr.bf16.mxu0 0
      %5387 = vmatmul.mubr.bf16.gmra.mxu0 %v3452
      %v5388 = vpop.f32.mrf.mxu0
      %v5389 = vadd.f32 %v5036, %v5388
      %v5390 = vpop.f32.mrf.mxu0
      %v5391 = vadd.f32 %v5038, %v5390
      %v5392 = vpop.f32.mrf.mxu0
      %v5393 = vadd.f32 %v5040, %v5392
      %v5394 = vpop.f32.mrf.mxu0
      %v5395 = vadd.f32 %v5042, %v5394
      %5396 = vmatprep.mubr.bf16.mxu0 0
      %5397 = vmatmul.mubr.bf16.gmra.mxu0 %v3455
      %v5398 = vpop.f32.mrf.mxu0
      %v5399 = vadd.f32 %v5046, %v5398
      %v5400 = vpop.f32.mrf.mxu0
      %v5401 = vadd.f32 %v5048, %v5400
      %v5402 = vpop.f32.mrf.mxu0
      %v5403 = vadd.f32 %v5050, %v5402
      %v5404 = vpop.f32.mrf.mxu0
      %v5405 = vadd.f32 %v5052, %v5404
      %5406 = vmatprep.mubr.bf16.mxu0 0
      %5407 = vmatmul.mubr.bf16.gmra.mxu0 %v3458
      %v5408 = vpop.f32.mrf.mxu0
      %v5409 = vadd.f32 %v5056, %v5408
      %v5410 = vpop.f32.mrf.mxu0
      %v5411 = vadd.f32 %v5058, %v5410
      %v5412 = vpop.f32.mrf.mxu0
      %v5413 = vadd.f32 %v5060, %v5412
      %v5414 = vpop.f32.mrf.mxu0
      %v5415 = vadd.f32 %v5062, %v5414
      %5416 = vmatprep.mubr.bf16.mxu0 0
      %5417 = vmatmul.mubr.bf16.gmra.mxu0 %v3461
      %v5418 = vpop.f32.mrf.mxu0
      %v5419 = vadd.f32 %v5066, %v5418
      %v5420 = vpop.f32.mrf.mxu0
      %v5421 = vadd.f32 %v5068, %v5420
      %v5422 = vpop.f32.mrf.mxu0
      %v5423 = vadd.f32 %v5070, %v5422
      %v5424 = vpop.f32.mrf.mxu0
      %v5425 = vadd.f32 %v5072, %v5424
      %5426 = vmatprep.mubr.bf16.mxu0 0
      %5427 = vmatmul.mubr.bf16.gmra.mxu0 %v3464
      %v5428 = vpop.f32.mrf.mxu0
      %v5429 = vadd.f32 %v5076, %v5428
      %v5430 = vpop.f32.mrf.mxu0
      %v5431 = vadd.f32 %v5078, %v5430
      %v5432 = vpop.f32.mrf.mxu0
      %v5433 = vadd.f32 %v5080, %v5432
      %v5434 = vpop.f32.mrf.mxu0
      %v5435 = vadd.f32 %v5082, %v5434
      %5436 = vmatprep.mubr.bf16.mxu0 0
      %5437 = vmatmul.mubr.bf16.gmra.mxu0 %v3467
      %v5438 = vpop.f32.mrf.mxu0
      %v5439 = vadd.f32 %v5086, %v5438
      %v5440 = vpop.f32.mrf.mxu0
      %v5441 = vadd.f32 %v5088, %v5440
      %v5442 = vpop.f32.mrf.mxu0
      %v5443 = vadd.f32 %v5090, %v5442
      %v5444 = vpop.f32.mrf.mxu0
      %v5445 = vadd.f32 %v5092, %v5444
      %5446 = vmatprep.mubr.bf16.mxu0 0
      %5447 = vmatmul.mubr.bf16.gmra.mxu0 %v3470
      %v5448 = vpop.f32.mrf.mxu0
      %v5449 = vadd.f32 %v5096, %v5448
      %v5450 = vpop.f32.mrf.mxu0
      %v5451 = vadd.f32 %v5098, %v5450
      %v5452 = vpop.f32.mrf.mxu0
      %v5453 = vadd.f32 %v5100, %v5452
      %v5454 = vpop.f32.mrf.mxu0
      %v5455 = vadd.f32 %v5102, %v5454
      %5456 = vmatprep.mubr.bf16.mxu0 0
      %5457 = vmatmul.mubr.bf16.gmra.mxu0 %v3473
      %v5458 = vpop.f32.mrf.mxu0
      %v5459 = vadd.f32 %v5106, %v5458
      %v5460 = vpop.f32.mrf.mxu0
      %v5461 = vadd.f32 %v5108, %v5460
      %v5462 = vpop.f32.mrf.mxu0
      %v5463 = vadd.f32 %v5110, %v5462
      %v5464 = vpop.f32.mrf.mxu0
      %v5465 = vadd.f32 %v5112, %v5464
      %5466 = vmatprep.mubr.bf16.mxu0 0
      %5467 = vmatmul.mubr.bf16.gmra.mxu0 %v3476
      %v5468 = vpop.f32.mrf.mxu0
      %v5469 = vadd.f32 %v5116, %v5468
      %v5470 = vpop.f32.mrf.mxu0
      %v5471 = vadd.f32 %v5118, %v5470
      %v5472 = vpop.f32.mrf.mxu0
      %v5473 = vadd.f32 %v5120, %v5472
      %v5474 = vpop.f32.mrf.mxu0
      %v5475 = vadd.f32 %v5122, %v5474
      %5476 = vmatprep.mubr.bf16.mxu0 0
      %5477 = vmatmul.mubr.bf16.gmra.mxu0 %v3479
      %v5478 = vpop.f32.mrf.mxu0
      %v5479 = vadd.f32 %v5126, %v5478
      %v5480 = vpop.f32.mrf.mxu0
      %v5481 = vadd.f32 %v5128, %v5480
      %v5482 = vpop.f32.mrf.mxu0
      %v5483 = vadd.f32 %v5130, %v5482
      %v5484 = vpop.f32.mrf.mxu0
      %v5485 = vadd.f32 %v5132, %v5484
      %5486 = vmatprep.mubr.bf16.mxu0 0
      %5487 = vmatmul.mubr.bf16.gmra.mxu0 %v3482
      %v5488 = vpop.f32.mrf.mxu0
      %v5489 = vadd.f32 %v5136, %v5488
      %v5490 = vpop.f32.mrf.mxu0
      %v5491 = vadd.f32 %v5138, %v5490
      %v5492 = vpop.f32.mrf.mxu0
      %v5493 = vadd.f32 %v5140, %v5492
      %v5494 = vpop.f32.mrf.mxu0
      %v5495 = vadd.f32 %v5142, %v5494
      %5496 = vmatprep.mubr.bf16.mxu0 0
      %5497 = vmatmul.mubr.bf16.gmra.mxu0 %v3485
      %v5498 = vpop.f32.mrf.mxu0
      %v5499 = vadd.f32 %v5146, %v5498
      %v5500 = vpop.f32.mrf.mxu0
      %v5501 = vadd.f32 %v5148, %v5500
      %v5502 = vpop.f32.mrf.mxu0
      %v5503 = vadd.f32 %v5150, %v5502
      %v5504 = vpop.f32.mrf.mxu0
      %v5505 = vadd.f32 %v5152, %v5504
      %5506 = vmatprep.mubr.bf16.mxu0 0
      %5507 = vmatmul.mubr.bf16.gmra.mxu0 %v3488
      %v5508 = vpop.f32.mrf.mxu0
      %v5509 = vadd.f32 %v5156, %v5508
      %v5510 = vpop.f32.mrf.mxu0
      %v5511 = vadd.f32 %v5158, %v5510
      %v5512 = vpop.f32.mrf.mxu0
      %v5513 = vadd.f32 %v5160, %v5512
      %v5514 = vpop.f32.mrf.mxu0
      %v5515 = vadd.f32 %v5162, %v5514
      %5516 = vmatprep.mubr.bf16.mxu0 0
      %5517 = vmatmul.mubr.bf16.gmra.mxu0 %v3491
      %v5518 = vpop.f32.mrf.mxu0
      %v5519 = vadd.f32 %v5166, %v5518
      %v5520 = vpop.f32.mrf.mxu0
      %v5521 = vadd.f32 %v5168, %v5520
      %v5522 = vpop.f32.mrf.mxu0
      %v5523 = vadd.f32 %v5170, %v5522
      %v5524 = vpop.f32.mrf.mxu0
      %v5525 = vadd.f32 %v5172, %v5524
      %5526 = vmatprep.mubr.bf16.mxu0 0
      %5527 = vmatmul.mubr.bf16.gmra.mxu0 %v3494
      %v5528 = vpop.f32.mrf.mxu0
      %v5529 = vadd.f32 %v5176, %v5528
      %v5530 = vpop.f32.mrf.mxu0
      %v5531 = vadd.f32 %v5178, %v5530
      %v5532 = vpop.f32.mrf.mxu0
      %v5533 = vadd.f32 %v5180, %v5532
      %v5534 = vpop.f32.mrf.mxu0
      %v5535 = vadd.f32 %v5182, %v5534
      %5536 = vmatprep.mubr.bf16.mxu0 0
      %5537 = vmatmul.mubr.bf16.gmra.mxu0 %v3497
      %v5538 = vpop.f32.mrf.mxu0
      %v5539 = vadd.f32 %v5186, %v5538
      %v5540 = vpop.f32.mrf.mxu0
      %v5541 = vadd.f32 %v5188, %v5540
      %v5542 = vpop.f32.mrf.mxu0
      %v5543 = vadd.f32 %v5190, %v5542
      %v5544 = vpop.f32.mrf.mxu0
      %v5545 = vadd.f32 %v5192, %v5544
      %5546 = vmatprep.mubr.bf16.mxu0 0
      %5547 = vmatmul.mubr.bf16.gmra.mxu0 %v3500
      %v5548 = vpop.f32.mrf.mxu0
      %v5549 = vadd.f32 %v5196, %v5548
      %v5550 = vpop.f32.mrf.mxu0
      %v5551 = vadd.f32 %v5198, %v5550
      %v5552 = vpop.f32.mrf.mxu0
      %v5553 = vadd.f32 %v5200, %v5552
      %v5554 = vpop.f32.mrf.mxu0
      %v5555 = vadd.f32 %v5202, %v5554
      %5556 = vmatprep.mubr.bf16.mxu0 0
      %5557 = vmatmul.mubr.bf16.gmra.mxu0 %v3503
      %v5558 = vpop.f32.mrf.mxu0
      %v5559 = vadd.f32 %v5206, %v5558
      %v5560 = vpop.f32.mrf.mxu0
      %v5561 = vadd.f32 %v5208, %v5560
      %v5562 = vpop.f32.mrf.mxu0
      %v5563 = vadd.f32 %v5210, %v5562
      %v5564 = vpop.f32.mrf.mxu0
      %v5565 = vadd.f32 %v5212, %v5564
      %5566 = vmatprep.mubr.bf16.mxu0 0
      %5567 = vmatmul.mubr.bf16.gmra.mxu0 %v3506
      %v5568 = vpop.f32.mrf.mxu0
      %v5569 = vadd.f32 %v5216, %v5568
      %v5570 = vpop.f32.mrf.mxu0
      %v5571 = vadd.f32 %v5218, %v5570
      %v5572 = vpop.f32.mrf.mxu0
      %v5573 = vadd.f32 %v5220, %v5572
      %v5574 = vpop.f32.mrf.mxu0
      %v5575 = vadd.f32 %v5222, %v5574
      %5576 = vmatprep.mubr.bf16.mxu0 0
      %5577 = vmatmul.mubr.bf16.gmra.mxu0 %v3509
      %v5578 = vpop.f32.mrf.mxu0
      %v5579 = vadd.f32 %v5226, %v5578
      %v5580 = vpop.f32.mrf.mxu0
      %v5581 = vadd.f32 %v5228, %v5580
      %v5582 = vpop.f32.mrf.mxu0
      %v5583 = vadd.f32 %v5230, %v5582
      %v5584 = vpop.f32.mrf.mxu0
      %v5585 = vadd.f32 %v5232, %v5584
      %5586 = vmatprep.mubr.bf16.mxu0 0
      %5587 = vmatmul.mubr.bf16.gmra.mxu0 %v3512
      %v5588 = vpop.f32.mrf.mxu0
      %v5589 = vadd.f32 %v5236, %v5588
      %v5590 = vpop.f32.mrf.mxu0
      %v5591 = vadd.f32 %v5238, %v5590
      %v5592 = vpop.f32.mrf.mxu0
      %v5593 = vadd.f32 %v5240, %v5592
      %v5594 = vpop.f32.mrf.mxu0
      %v5595 = vadd.f32 %v5242, %v5594
      %5596 = vmatprep.mubr.bf16.mxu0 0
      %5597 = vmatmul.mubr.bf16.gmra.mxu0 %v3515
      %v5598 = vpop.f32.mrf.mxu0
      %v5599 = vadd.f32 %v5246, %v5598
      %v5600 = vpop.f32.mrf.mxu0
      %v5601 = vadd.f32 %v5248, %v5600
      %v5602 = vpop.f32.mrf.mxu0
      %v5603 = vadd.f32 %v5250, %v5602
      %v5604 = vpop.f32.mrf.mxu0
      %v5605 = vadd.f32 %v5252, %v5604
      %5606 = vmatprep.mubr.bf16.mxu0 0
      %5607 = vmatmul.mubr.bf16.gmra.mxu0 %v3518
      %v5608 = vpop.f32.mrf.mxu0
      %v5609 = vadd.f32 %v5256, %v5608
      %v5610 = vpop.f32.mrf.mxu0
      %v5611 = vadd.f32 %v5258, %v5610
      %v5612 = vpop.f32.mrf.mxu0
      %v5613 = vadd.f32 %v5260, %v5612
      %v5614 = vpop.f32.mrf.mxu0
      %v5615 = vadd.f32 %v5262, %v5614
      %5616 = vmatprep.mubr.bf16.mxu0 0
      %5617 = vmatmul.mubr.bf16.gmra.mxu0 %v3521
      %v5618 = vpop.f32.mrf.mxu0
      %v5619 = vadd.f32 %v5266, %v5618
      %v5620 = vpop.f32.mrf.mxu0
      %v5621 = vadd.f32 %v5268, %v5620
      %v5622 = vpop.f32.mrf.mxu0
      %v5623 = vadd.f32 %v5270, %v5622
      %v5624 = vpop.f32.mrf.mxu0
      %v5625 = vadd.f32 %v5272, %v5624
      %5626 = vmatprep.mubr.bf16.mxu0 0
      %5627 = vmatmul.mubr.bf16.gmra.mxu0 %v3524
      %v5628 = vpop.f32.mrf.mxu0
      %v5629 = vadd.f32 %v5276, %v5628
      %v5630 = vpop.f32.mrf.mxu0
      %v5631 = vadd.f32 %v5278, %v5630
      %v5632 = vpop.f32.mrf.mxu0
      %v5633 = vadd.f32 %v5280, %v5632
      %v5634 = vpop.f32.mrf.mxu0
      %v5635 = vadd.f32 %v5282, %v5634
      %5636 = vmatprep.mubr.bf16.mxu0 0
      %5637 = vmatmul.mubr.bf16.gmra.mxu0 %v3527
      %v5638 = vpop.f32.mrf.mxu0
      %v5639 = vadd.f32 %v5286, %v5638
      %v5640 = vpop.f32.mrf.mxu0
      %v5641 = vadd.f32 %v5288, %v5640
      %v5642 = vpop.f32.mrf.mxu0
      %v5643 = vadd.f32 %v5290, %v5642
      %v5644 = vpop.f32.mrf.mxu0
      %v5645 = vadd.f32 %v5292, %v5644
      %5646 = vdwg.mxu0
      %v5647 = vmax.f32 %v5329, 0.0
      %v5648 = vmax.f32 %v5331, 0.0
      %v5649 = vmax.f32 %v5333, 0.0
      %v5650 = vmax.f32 %v5335, 0.0
      %v5651 = vmax.f32 %v5339, 0.0
      %v5652 = vmax.f32 %v5341, 0.0
      %v5653 = vmax.f32 %v5343, 0.0
      %v5654 = vmax.f32 %v5345, 0.0
      %v5655 = vmax.f32 %v5349, 0.0
      %v5656 = vmax.f32 %v5351, 0.0
      %v5657 = vmax.f32 %v5353, 0.0
      %v5658 = vmax.f32 %v5355, 0.0
      %v5659 = vmax.f32 %v5359, 0.0
      %v5660 = vmax.f32 %v5361, 0.0
      %v5661 = vmax.f32 %v5363, 0.0
      %v5662 = vmax.f32 %v5365, 0.0
      %v5663 = vmax.f32 %v5369, 0.0
      %v5664 = vmax.f32 %v5371, 0.0
      %v5665 = vmax.f32 %v5373, 0.0
      %v5666 = vmax.f32 %v5375, 0.0
      %v5667 = vmax.f32 %v5379, 0.0
      %v5668 = vmax.f32 %v5381, 0.0
      %v5669 = vmax.f32 %v5383, 0.0
      %v5670 = vmax.f32 %v5385, 0.0
      %v5671 = vmax.f32 %v5389, 0.0
      %v5672 = vmax.f32 %v5391, 0.0
      %v5673 = vmax.f32 %v5393, 0.0
      %v5674 = vmax.f32 %v5395, 0.0
      %v5675 = vmax.f32 %v5399, 0.0
      %v5676 = vmax.f32 %v5401, 0.0
      %v5677 = vmax.f32 %v5403, 0.0
      %v5678 = vmax.f32 %v5405, 0.0
      %v5679 = vmax.f32 %v5409, 0.0
      %v5680 = vmax.f32 %v5411, 0.0
      %v5681 = vmax.f32 %v5413, 0.0
      %v5682 = vmax.f32 %v5415, 0.0
      %v5683 = vmax.f32 %v5419, 0.0
      %v5684 = vmax.f32 %v5421, 0.0
      %v5685 = vmax.f32 %v5423, 0.0
      %v5686 = vmax.f32 %v5425, 0.0
      %v5687 = vmax.f32 %v5429, 0.0
      %v5688 = vmax.f32 %v5431, 0.0
      %v5689 = vmax.f32 %v5433, 0.0
      %v5690 = vmax.f32 %v5435, 0.0
      %v5691 = vmax.f32 %v5439, 0.0
      %v5692 = vmax.f32 %v5441, 0.0
      %v5693 = vmax.f32 %v5443, 0.0
      %v5694 = vmax.f32 %v5445, 0.0
      %v5695 = vmax.f32 %v5449, 0.0
      %v5696 = vmax.f32 %v5451, 0.0
      %v5697 = vmax.f32 %v5453, 0.0
      %v5698 = vmax.f32 %v5455, 0.0
      %v5699 = vmax.f32 %v5459, 0.0
      %v5700 = vmax.f32 %v5461, 0.0
      %v5701 = vmax.f32 %v5463, 0.0
      %v5702 = vmax.f32 %v5465, 0.0
      %v5703 = vmax.f32 %v5469, 0.0
      %v5704 = vmax.f32 %v5471, 0.0
      %v5705 = vmax.f32 %v5473, 0.0
      %v5706 = vmax.f32 %v5475, 0.0
      %v5707 = vmax.f32 %v5479, 0.0
      %v5708 = vmax.f32 %v5481, 0.0
      %v5709 = vmax.f32 %v5483, 0.0
      %v5710 = vmax.f32 %v5485, 0.0
      %v5711 = vmax.f32 %v5489, 0.0
      %v5712 = vmax.f32 %v5491, 0.0
      %v5713 = vmax.f32 %v5493, 0.0
      %v5714 = vmax.f32 %v5495, 0.0
      %v5715 = vmax.f32 %v5499, 0.0
      %v5716 = vmax.f32 %v5501, 0.0
      %v5717 = vmax.f32 %v5503, 0.0
      %v5718 = vmax.f32 %v5505, 0.0
      %v5719 = vmax.f32 %v5509, 0.0
      %v5720 = vmax.f32 %v5511, 0.0
      %v5721 = vmax.f32 %v5513, 0.0
      %v5722 = vmax.f32 %v5515, 0.0
      %v5723 = vmax.f32 %v5519, 0.0
      %v5724 = vmax.f32 %v5521, 0.0
      %v5725 = vmax.f32 %v5523, 0.0
      %v5726 = vmax.f32 %v5525, 0.0
      %v5727 = vmax.f32 %v5529, 0.0
      %v5728 = vmax.f32 %v5531, 0.0
      %v5729 = vmax.f32 %v5533, 0.0
      %v5730 = vmax.f32 %v5535, 0.0
      %v5731 = vmax.f32 %v5539, 0.0
      %v5732 = vmax.f32 %v5541, 0.0
      %v5733 = vmax.f32 %v5543, 0.0
      %v5734 = vmax.f32 %v5545, 0.0
      %v5735 = vmax.f32 %v5549, 0.0
      %v5736 = vmax.f32 %v5551, 0.0
      %v5737 = vmax.f32 %v5553, 0.0
      %v5738 = vmax.f32 %v5555, 0.0
      %v5739 = vmax.f32 %v5559, 0.0
      %v5740 = vmax.f32 %v5561, 0.0
      %v5741 = vmax.f32 %v5563, 0.0
      %v5742 = vmax.f32 %v5565, 0.0
      %v5743 = vmax.f32 %v5569, 0.0
      %v5744 = vmax.f32 %v5571, 0.0
      %v5745 = vmax.f32 %v5573, 0.0
      %v5746 = vmax.f32 %v5575, 0.0
      %v5747 = vmax.f32 %v5579, 0.0
      %v5748 = vmax.f32 %v5581, 0.0
      %v5749 = vmax.f32 %v5583, 0.0
      %v5750 = vmax.f32 %v5585, 0.0
      %v5751 = vmax.f32 %v5589, 0.0
      %v5752 = vmax.f32 %v5591, 0.0
      %v5753 = vmax.f32 %v5593, 0.0
      %v5754 = vmax.f32 %v5595, 0.0
      %v5755 = vmax.f32 %v5599, 0.0
      %v5756 = vmax.f32 %v5601, 0.0
      %v5757 = vmax.f32 %v5603, 0.0
      %v5758 = vmax.f32 %v5605, 0.0
      %v5759 = vmax.f32 %v5609, 0.0
      %v5760 = vmax.f32 %v5611, 0.0
      %v5761 = vmax.f32 %v5613, 0.0
      %v5762 = vmax.f32 %v5615, 0.0
      %v5763 = vmax.f32 %v5619, 0.0
      %v5764 = vmax.f32 %v5621, 0.0
      %v5765 = vmax.f32 %v5623, 0.0
      %v5766 = vmax.f32 %v5625, 0.0
      %v5767 = vmax.f32 %v5629, 0.0
      %v5768 = vmax.f32 %v5631, 0.0
      %v5769 = vmax.f32 %v5633, 0.0
      %v5770 = vmax.f32 %v5635, 0.0
      %v5771 = vmax.f32 %v5639, 0.0
      %v5772 = vmax.f32 %v5641, 0.0
      %v5773 = vmax.f32 %v5643, 0.0
      %v5774 = vmax.f32 %v5645, 0.0
      %v5775 = vpack.c.bf16 %v5649, %v5647
      %v5776 = vpack.c.bf16 %v5650, %v5648
      %v5777 = vpack.c.bf16 %v5653, %v5651
      %v5778 = vpack.c.bf16 %v5654, %v5652
      %v5779 = vpack.c.bf16 %v5657, %v5655
      %v5780 = vpack.c.bf16 %v5658, %v5656
      %v5781 = vpack.c.bf16 %v5661, %v5659
      %v5782 = vpack.c.bf16 %v5662, %v5660
      %v5783 = vpack.c.bf16 %v5665, %v5663
      %v5784 = vpack.c.bf16 %v5666, %v5664
      %v5785 = vpack.c.bf16 %v5669, %v5667
      %v5786 = vpack.c.bf16 %v5670, %v5668
      %v5787 = vpack.c.bf16 %v5673, %v5671
      %v5788 = vpack.c.bf16 %v5674, %v5672
      %v5789 = vpack.c.bf16 %v5677, %v5675
      %v5790 = vpack.c.bf16 %v5678, %v5676
      %v5791 = vpack.c.bf16 %v5681, %v5679
      %v5792 = vpack.c.bf16 %v5682, %v5680
      %v5793 = vpack.c.bf16 %v5685, %v5683
      %v5794 = vpack.c.bf16 %v5686, %v5684
      %v5795 = vpack.c.bf16 %v5689, %v5687
      %v5796 = vpack.c.bf16 %v5690, %v5688
      %v5797 = vpack.c.bf16 %v5693, %v5691
      %v5798 = vpack.c.bf16 %v5694, %v5692
      %v5799 = vpack.c.bf16 %v5697, %v5695
      %v5800 = vpack.c.bf16 %v5698, %v5696
      %v5801 = vpack.c.bf16 %v5701, %v5699
      %v5802 = vpack.c.bf16 %v5702, %v5700
      %v5803 = vpack.c.bf16 %v5705, %v5703
      %v5804 = vpack.c.bf16 %v5706, %v5704
      %v5805 = vpack.c.bf16 %v5709, %v5707
      %v5806 = vpack.c.bf16 %v5710, %v5708
      %v5807 = vpack.c.bf16 %v5713, %v5711
      %v5808 = vpack.c.bf16 %v5714, %v5712
      %v5809 = vpack.c.bf16 %v5717, %v5715
      %v5810 = vpack.c.bf16 %v5718, %v5716
      %v5811 = vpack.c.bf16 %v5721, %v5719
      %v5812 = vpack.c.bf16 %v5722, %v5720
      %v5813 = vpack.c.bf16 %v5725, %v5723
      %v5814 = vpack.c.bf16 %v5726, %v5724
      %v5815 = vpack.c.bf16 %v5729, %v5727
      %v5816 = vpack.c.bf16 %v5730, %v5728
      %v5817 = vpack.c.bf16 %v5733, %v5731
      %v5818 = vpack.c.bf16 %v5734, %v5732
      %v5819 = vpack.c.bf16 %v5737, %v5735
      %v5820 = vpack.c.bf16 %v5738, %v5736
      %v5821 = vpack.c.bf16 %v5741, %v5739
      %v5822 = vpack.c.bf16 %v5742, %v5740
      %v5823 = vpack.c.bf16 %v5745, %v5743
      %v5824 = vpack.c.bf16 %v5746, %v5744
      %v5825 = vpack.c.bf16 %v5749, %v5747
      %v5826 = vpack.c.bf16 %v5750, %v5748
      %v5827 = vpack.c.bf16 %v5753, %v5751
      %v5828 = vpack.c.bf16 %v5754, %v5752
      %v5829 = vpack.c.bf16 %v5757, %v5755
      %v5830 = vpack.c.bf16 %v5758, %v5756
      %v5831 = vpack.c.bf16 %v5761, %v5759
      %v5832 = vpack.c.bf16 %v5762, %v5760
      %v5833 = vpack.c.bf16 %v5765, %v5763
      %v5834 = vpack.c.bf16 %v5766, %v5764
      %v5835 = vpack.c.bf16 %v5769, %v5767
      %v5836 = vpack.c.bf16 %v5770, %v5768
      %v5837 = vpack.c.bf16 %v5773, %v5771
      %v5838 = vpack.c.bf16 %v5774, %v5772
      %v5903 = vunpack.c.l.b16 %v5775
      %v5904 = vunpack.c.l.b16 %v5776
      %v5905 = vunpack.c.h.b16 %v5775
      %v5906 = vunpack.c.h.b16 %v5776
      %v5907 = vunpack.c.l.b16 %v5777
      %v5908 = vunpack.c.l.b16 %v5778
      %v5909 = vunpack.c.h.b16 %v5777
      %v5910 = vunpack.c.h.b16 %v5778
      %v5911 = vunpack.c.l.b16 %v5779
      %v5912 = vunpack.c.l.b16 %v5780
      %v5913 = vunpack.c.h.b16 %v5779
      %v5914 = vunpack.c.h.b16 %v5780
      %v5915 = vunpack.c.l.b16 %v5781
      %v5916 = vunpack.c.l.b16 %v5782
      %v5917 = vunpack.c.h.b16 %v5781
      %v5918 = vunpack.c.h.b16 %v5782
      %v5919 = vunpack.c.l.b16 %v5783
      %v5920 = vunpack.c.l.b16 %v5784
      %v5921 = vunpack.c.h.b16 %v5783
      %v5922 = vunpack.c.h.b16 %v5784
      %v5923 = vunpack.c.l.b16 %v5785
      %v5924 = vunpack.c.l.b16 %v5786
      %v5925 = vunpack.c.h.b16 %v5785
      %v5926 = vunpack.c.h.b16 %v5786
      %v5927 = vunpack.c.l.b16 %v5787
      %v5928 = vunpack.c.l.b16 %v5788
      %v5929 = vunpack.c.h.b16 %v5787
      %v5930 = vunpack.c.h.b16 %v5788
      %v5931 = vunpack.c.l.b16 %v5789
      %v5932 = vunpack.c.l.b16 %v5790
      %v5933 = vunpack.c.h.b16 %v5789
      %v5934 = vunpack.c.h.b16 %v5790
      %v5935 = vunpack.c.l.b16 %v5791
      %v5936 = vunpack.c.l.b16 %v5792
      %v5937 = vunpack.c.h.b16 %v5791
      %v5938 = vunpack.c.h.b16 %v5792
      %v5939 = vunpack.c.l.b16 %v5793
      %v5940 = vunpack.c.l.b16 %v5794
      %v5941 = vunpack.c.h.b16 %v5793
      %v5942 = vunpack.c.h.b16 %v5794
      %v5943 = vunpack.c.l.b16 %v5795
      %v5944 = vunpack.c.l.b16 %v5796
      %v5945 = vunpack.c.h.b16 %v5795
      %v5946 = vunpack.c.h.b16 %v5796
      %v5947 = vunpack.c.l.b16 %v5797
      %v5948 = vunpack.c.l.b16 %v5798
      %v5949 = vunpack.c.h.b16 %v5797
      %v5950 = vunpack.c.h.b16 %v5798
      %v5951 = vunpack.c.l.b16 %v5799
      %v5952 = vunpack.c.l.b16 %v5800
      %v5953 = vunpack.c.h.b16 %v5799
      %v5954 = vunpack.c.h.b16 %v5800
      %v5955 = vunpack.c.l.b16 %v5801
      %v5956 = vunpack.c.l.b16 %v5802
      %v5957 = vunpack.c.h.b16 %v5801
      %v5958 = vunpack.c.h.b16 %v5802
      %v5959 = vunpack.c.l.b16 %v5803
      %v5960 = vunpack.c.l.b16 %v5804
      %v5961 = vunpack.c.h.b16 %v5803
      %v5962 = vunpack.c.h.b16 %v5804
      %v5963 = vunpack.c.l.b16 %v5805
      %v5964 = vunpack.c.l.b16 %v5806
      %v5965 = vunpack.c.h.b16 %v5805
      %v5966 = vunpack.c.h.b16 %v5806
      %v5967 = vunpack.c.l.b16 %v5807
      %v5968 = vunpack.c.l.b16 %v5808
      %v5969 = vunpack.c.h.b16 %v5807
      %v5970 = vunpack.c.h.b16 %v5808
      %v5971 = vunpack.c.l.b16 %v5809
      %v5972 = vunpack.c.l.b16 %v5810
      %v5973 = vunpack.c.h.b16 %v5809
      %v5974 = vunpack.c.h.b16 %v5810
      %v5975 = vunpack.c.l.b16 %v5811
      %v5976 = vunpack.c.l.b16 %v5812
      %v5977 = vunpack.c.h.b16 %v5811
      %v5978 = vunpack.c.h.b16 %v5812
      %v5979 = vunpack.c.l.b16 %v5813
      %v5980 = vunpack.c.l.b16 %v5814
      %v5981 = vunpack.c.h.b16 %v5813
      %v5982 = vunpack.c.h.b16 %v5814
      %v5983 = vunpack.c.l.b16 %v5815
      %v5984 = vunpack.c.l.b16 %v5816
      %v5985 = vunpack.c.h.b16 %v5815
      %v5986 = vunpack.c.h.b16 %v5816
      %v5987 = vunpack.c.l.b16 %v5817
      %v5988 = vunpack.c.l.b16 %v5818
      %v5989 = vunpack.c.h.b16 %v5817
      %v5990 = vunpack.c.h.b16 %v5818
      %v5991 = vunpack.c.l.b16 %v5819
      %v5992 = vunpack.c.l.b16 %v5820
      %v5993 = vunpack.c.h.b16 %v5819
      %v5994 = vunpack.c.h.b16 %v5820
      %v5995 = vunpack.c.l.b16 %v5821
      %v5996 = vunpack.c.l.b16 %v5822
      %v5997 = vunpack.c.h.b16 %v5821
      %v5998 = vunpack.c.h.b16 %v5822
      %v5999 = vunpack.c.l.b16 %v5823
      %v6000 = vunpack.c.l.b16 %v5824
      %v6001 = vunpack.c.h.b16 %v5823
      %v6002 = vunpack.c.h.b16 %v5824
      %v6003 = vunpack.c.l.b16 %v5825
      %v6004 = vunpack.c.l.b16 %v5826
      %v6005 = vunpack.c.h.b16 %v5825
      %v6006 = vunpack.c.h.b16 %v5826
      %v6007 = vunpack.c.l.b16 %v5827
      %v6008 = vunpack.c.l.b16 %v5828
      %v6009 = vunpack.c.h.b16 %v5827
      %v6010 = vunpack.c.h.b16 %v5828
      %v6011 = vunpack.c.l.b16 %v5829
      %v6012 = vunpack.c.l.b16 %v5830
      %v6013 = vunpack.c.h.b16 %v5829
      %v6014 = vunpack.c.h.b16 %v5830
      %v6015 = vunpack.c.l.b16 %v5831
      %v6016 = vunpack.c.l.b16 %v5832
      %v6017 = vunpack.c.h.b16 %v5831
      %v6018 = vunpack.c.h.b16 %v5832
      %v6019 = vunpack.c.l.b16 %v5833
      %v6020 = vunpack.c.l.b16 %v5834
      %v6021 = vunpack.c.h.b16 %v5833
      %v6022 = vunpack.c.h.b16 %v5834
      %v6023 = vunpack.c.l.b16 %v5835
      %v6024 = vunpack.c.l.b16 %v5836
      %v6025 = vunpack.c.h.b16 %v5835
      %v6026 = vunpack.c.h.b16 %v5836
      %v6027 = vunpack.c.l.b16 %v5837
      %v6028 = vunpack.c.l.b16 %v5838
      %v6029 = vunpack.c.h.b16 %v5837
      %v6030 = vunpack.c.h.b16 %v5838
      %v6031 = vpack.c.b16 %v5904, %v5903
      %v6032 = vpack.c.b16 %v5906, %v5905
      %v6033 = vpack.c.b16 %v5908, %v5907
      %v6034 = vpack.c.b16 %v5910, %v5909
      %v6035 = vpack.c.b16 %v5912, %v5911
      %v6036 = vpack.c.b16 %v5914, %v5913
      %v6037 = vpack.c.b16 %v5916, %v5915
      %v6038 = vpack.c.b16 %v5918, %v5917
      %v6039 = vpack.c.b16 %v5920, %v5919
      %v6040 = vpack.c.b16 %v5922, %v5921
      %v6041 = vpack.c.b16 %v5924, %v5923
      %v6042 = vpack.c.b16 %v5926, %v5925
      %v6043 = vpack.c.b16 %v5928, %v5927
      %v6044 = vpack.c.b16 %v5930, %v5929
      %v6045 = vpack.c.b16 %v5932, %v5931
      %v6046 = vpack.c.b16 %v5934, %v5933
      %v6047 = vpack.c.b16 %v5936, %v5935
      %v6048 = vpack.c.b16 %v5938, %v5937
      %v6049 = vpack.c.b16 %v5940, %v5939
      %v6050 = vpack.c.b16 %v5942, %v5941
      %v6051 = vpack.c.b16 %v5944, %v5943
      %v6052 = vpack.c.b16 %v5946, %v5945
      %v6053 = vpack.c.b16 %v5948, %v5947
      %v6054 = vpack.c.b16 %v5950, %v5949
      %v6055 = vpack.c.b16 %v5952, %v5951
      %v6056 = vpack.c.b16 %v5954, %v5953
      %v6057 = vpack.c.b16 %v5956, %v5955
      %v6058 = vpack.c.b16 %v5958, %v5957
      %v6059 = vpack.c.b16 %v5960, %v5959
      %v6060 = vpack.c.b16 %v5962, %v5961
      %v6061 = vpack.c.b16 %v5964, %v5963
      %v6062 = vpack.c.b16 %v5966, %v5965
      %v6063 = vpack.c.b16 %v5968, %v5967
      %v6064 = vpack.c.b16 %v5970, %v5969
      %v6065 = vpack.c.b16 %v5972, %v5971
      %v6066 = vpack.c.b16 %v5974, %v5973
      %v6067 = vpack.c.b16 %v5976, %v5975
      %v6068 = vpack.c.b16 %v5978, %v5977
      %v6069 = vpack.c.b16 %v5980, %v5979
      %v6070 = vpack.c.b16 %v5982, %v5981
      %v6071 = vpack.c.b16 %v5984, %v5983
      %v6072 = vpack.c.b16 %v5986, %v5985
      %v6073 = vpack.c.b16 %v5988, %v5987
      %v6074 = vpack.c.b16 %v5990, %v5989
      %v6075 = vpack.c.b16 %v5992, %v5991
      %v6076 = vpack.c.b16 %v5994, %v5993
      %v6077 = vpack.c.b16 %v5996, %v5995
      %v6078 = vpack.c.b16 %v5998, %v5997
      %v6079 = vpack.c.b16 %v6000, %v5999
      %v6080 = vpack.c.b16 %v6002, %v6001
      %v6081 = vpack.c.b16 %v6004, %v6003
      %v6082 = vpack.c.b16 %v6006, %v6005
      %v6083 = vpack.c.b16 %v6008, %v6007
      %v6084 = vpack.c.b16 %v6010, %v6009
      %v6085 = vpack.c.b16 %v6012, %v6011
      %v6086 = vpack.c.b16 %v6014, %v6013
      %v6087 = vpack.c.b16 %v6016, %v6015
      %v6088 = vpack.c.b16 %v6018, %v6017
      %v6089 = vpack.c.b16 %v6020, %v6019
      %v6090 = vpack.c.b16 %v6022, %v6021
      %v6091 = vpack.c.b16 %v6024, %v6023
      %v6092 = vpack.c.b16 %v6026, %v6025
      %v6093 = vpack.c.b16 %v6028, %v6027
      %v6094 = vpack.c.b16 %v6030, %v6029
      %6159 = vst [vmem:[%s240] sm:$0xff] %v6031
      %6160 = vst [vmem:[%s240 + $0x8] sm:$0xff] %v6032
      %6161 = vst [vmem:[%s240 + $0x10] sm:$0xff] %v6033
      %6162 = vst [vmem:[%s240 + $0x18] sm:$0xff] %v6034
      %6163 = vst [vmem:[%s240 + $0x20] sm:$0xff] %v6035
      %6164 = vst [vmem:[%s240 + $0x28] sm:$0xff] %v6036
      %6165 = vst [vmem:[%s240 + $0x30] sm:$0xff] %v6037
      %6166 = vst [vmem:[%s240 + $0x38] sm:$0xff] %v6038
      %6167 = vst [vmem:[%s240 + $0x40] sm:$0xff] %v6039
      %6168 = vst [vmem:[%s240 + $0x48] sm:$0xff] %v6040
      %6169 = vst [vmem:[%s240 + $0x50] sm:$0xff] %v6041
      %6170 = vst [vmem:[%s240 + $0x58] sm:$0xff] %v6042
      %6171 = vst [vmem:[%s240 + $0x60] sm:$0xff] %v6043
      %6172 = vst [vmem:[%s240 + $0x68] sm:$0xff] %v6044
      %6173 = vst [vmem:[%s240 + $0x70] sm:$0xff] %v6045
      %6174 = vst [vmem:[%s240 + $0x78] sm:$0xff] %v6046
      %6175 = vst [vmem:[%s240 + $0x80] sm:$0xff] %v6047
      %6176 = vst [vmem:[%s240 + $0x88] sm:$0xff] %v6048
      %6177 = vst [vmem:[%s240 + $0x90] sm:$0xff] %v6049
      %6178 = vst [vmem:[%s240 + $0x98] sm:$0xff] %v6050
      %6179 = vst [vmem:[%s240 + $0xa0] sm:$0xff] %v6051
      %6180 = vst [vmem:[%s240 + $0xa8] sm:$0xff] %v6052
      %6181 = vst [vmem:[%s240 + $0xb0] sm:$0xff] %v6053
      %6182 = vst [vmem:[%s240 + $0xb8] sm:$0xff] %v6054
      %6183 = vst [vmem:[%s240 + $0xc0] sm:$0xff] %v6055
      %6184 = vst [vmem:[%s240 + $0xc8] sm:$0xff] %v6056
      %6185 = vst [vmem:[%s240 + $0xd0] sm:$0xff] %v6057
      %6186 = vst [vmem:[%s240 + $0xd8] sm:$0xff] %v6058
      %6187 = vst [vmem:[%s240 + $0xe0] sm:$0xff] %v6059
      %6188 = vst [vmem:[%s240 + $0xe8] sm:$0xff] %v6060
      %6189 = vst [vmem:[%s240 + $0xf0] sm:$0xff] %v6061
      %6190 = vst [vmem:[%s240 + $0xf8] sm:$0xff] %v6062
      %6191 = vst [vmem:[%s240 + $0x100] sm:$0xff] %v6063
      %6192 = vst [vmem:[%s240 + $0x108] sm:$0xff] %v6064
      %6193 = vst [vmem:[%s240 + $0x110] sm:$0xff] %v6065
      %6194 = vst [vmem:[%s240 + $0x118] sm:$0xff] %v6066
      %6195 = vst [vmem:[%s240 + $0x120] sm:$0xff] %v6067
      %6196 = vst [vmem:[%s240 + $0x128] sm:$0xff] %v6068
      %6197 = vst [vmem:[%s240 + $0x130] sm:$0xff] %v6069
      %6198 = vst [vmem:[%s240 + $0x138] sm:$0xff] %v6070
      %6199 = vst [vmem:[%s240 + $0x140] sm:$0xff] %v6071
      %6200 = vst [vmem:[%s240 + $0x148] sm:$0xff] %v6072
      %6201 = vst [vmem:[%s240 + $0x150] sm:$0xff] %v6073
      %6202 = vst [vmem:[%s240 + $0x158] sm:$0xff] %v6074
      %6203 = vst [vmem:[%s240 + $0x160] sm:$0xff] %v6075
      %6204 = vst [vmem:[%s240 + $0x168] sm:$0xff] %v6076
      %6205 = vst [vmem:[%s240 + $0x170] sm:$0xff] %v6077
      %6206 = vst [vmem:[%s240 + $0x178] sm:$0xff] %v6078
      %6207 = vst [vmem:[%s240 + $0x180] sm:$0xff] %v6079
      %6208 = vst [vmem:[%s240 + $0x188] sm:$0xff] %v6080
      %6209 = vst [vmem:[%s240 + $0x190] sm:$0xff] %v6081
      %6210 = vst [vmem:[%s240 + $0x198] sm:$0xff] %v6082
      %6211 = vst [vmem:[%s240 + $0x1a0] sm:$0xff] %v6083
      %6212 = vst [vmem:[%s240 + $0x1a8] sm:$0xff] %v6084
      %6213 = vst [vmem:[%s240 + $0x1b0] sm:$0xff] %v6085
      %6214 = vst [vmem:[%s240 + $0x1b8] sm:$0xff] %v6086
      %6215 = vst [vmem:[%s240 + $0x1c0] sm:$0xff] %v6087
      %6216 = vst [vmem:[%s240 + $0x1c8] sm:$0xff] %v6088
      %6217 = vst [vmem:[%s240 + $0x1d0] sm:$0xff] %v6089
      %6218 = vst [vmem:[%s240 + $0x1d8] sm:$0xff] %v6090
      %6219 = vst [vmem:[%s240 + $0x1e0] sm:$0xff] %v6091
      %6220 = vst [vmem:[%s240 + $0x1e8] sm:$0xff] %v6092
      %6221 = vst [vmem:[%s240 + $0x1f0] sm:$0xff] %v6093
      %6222 = vst [vmem:[%s240 + $0x1f8] sm:$0xff] %v6094
      %s6223 = smul.u32 64, %s18
      %s6224 = smul.u32 2, %s19
      %p6225 = scmp.lt.s32.totalorder %s6223, 127
      %s6226 = scalar_select %p6225, %s6223, 127
      %p6227 = scmp.lt.s32.totalorder %s6224, 1
      %s6228 = scalar_select %p6227, %s6224, 1
      %s6229 = smul.addr %s6226, 2
      %s6230 = sadd.s32 %s6228, %s6229
      %s6231 = smul.addr %s6230, 4
      %s6232 = scalar_lea.vmem %s3, %s6231
      // Predicated region
      $region33: #{pallas_gemm_bias.1} parent=31 // pred_check
        %p6233 = pneg %p124
      $region34: #{pallas_gemm_bias.1} parent=31 // pred_check_branch
        %6235 = sbr.rel (%p6233) target = $region36
      $region35: #{pallas_gemm_bias.1} parent=31 // pred_region
        %s6236 = smul.u32 64, %s18
        %s6237 = smul.u32 2, %s19
      $region36: #{pallas_gemm_bias.1} parent=31 // pred_fallthru
        _
    $region32: #{pallas_gemm_bias.1} parent=5 // pred_fallthru
      _
    %p6238 = scmp.le.s32.totalorder 2, %s9
    // Predicated region
    $region37: #{pallas_gemm_bias.1} parent=5 // pred_check
      %p6239 = pneg %p6238
    $region38: #{pallas_gemm_bias.1} parent=5 // pred_check_branch
      %6241 = sbr.rel (%p6239) target = $region40
    $region39: #{pallas_gemm_bias.1} parent=5 // pred_region
      %s6242 = ssub.s32 %s9, 2
      // Predicated region
      $region41: #{pallas_gemm_bias.1} parent=39 // pred_check
        %p6243 = pneg %p130
      $region42: #{pallas_gemm_bias.1} parent=39 // pred_check_branch
        %6245 = sbr.rel (%p6243) target = $region44
      $region43: #{pallas_gemm_bias.1} parent=39 // pred_region
        %s6246 = smul.u32 64, %s20
        %s6247 = smul.u32 2, %s21
        %p6248 = scmp.lt.s32.totalorder %s6246, 127
        %s6249 = scalar_select %p6248, %s6246, 127
        %p6250 = scmp.lt.s32.totalorder %s6247, 1
        %s6251 = scalar_select %p6250, %s6247, 1
        %s6252 = smul.addr %s6249, 2
        %s6253 = sadd.s32 %s6251, %s6252
        %s6254 = smul.addr %s6253, 4
        %s6255 = scalar_lea.vmem %s3, %s6254
      $region44: #{pallas_gemm_bias.1} parent=39 // pred_fallthru
        _
    $region40: #{pallas_gemm_bias.1} parent=5 // pred_fallthru
      _
  $region6: #{pallas_gemm_bias.1} parent=0 // loop_footer
    %s13 = sadd.s32 1, %s9
  $region7: #{pallas_gemm_bias.1} parent=0 // loop_footer_branch
    %8 = sbr.rel target = $region3
  $region8: #{pallas_gemm_bias.1} parent=0 // loop_exit
    _

</llo_original>
